<compile_context>
chip_gen: v7x
topology: tpu7x:2x2x1
jax: 0.10.0
libtpu: 0.0.40
codegen_flags: <defaults>
</compile_context>

<pallas_src>
import functools

import jax
import jax.numpy as jnp
import numpy as np
from jax.experimental import pallas as pl
from jax.experimental.pallas import tpu as pltpu

_BN_EPS = 1e-5
_XOFF = 8   # interior column offset in the halo scratch (sublane-aligned for f32)


# ----------------------------------------------------------------------------
# Fused bottleneck Pallas kernel
# ----------------------------------------------------------------------------

def _bottleneck_kernel(H, W, has_down, x_ref,
                       s1_ref, t1_ref, w1_ref, b1_ref,
                       s2_ref, t2_ref, w2_ref, b2_ref,
                       s3_ref, t3_ref, w3_ref, b3_ref,
                       *rest):
    if has_down:
        wd_ref, bd_ref, o_ref, pad_ref = rest
    else:
        o_ref, pad_ref = rest

    cin = x_ref.shape[-1]
    planes = w1_ref.shape[-1]
    cout = w3_ref.shape[-1]
    hw = H * W

    # One batch sample per grid step, flattened to (H*W, C) rows.
    x = x_ref[0].reshape(hw, cin)                                   # f32

    # --- bn1 + relu (VPU prologue) + conv1 1x1 (MXU, bf16 operands) ---
    h = jnp.maximum(x * s1_ref[...] + t1_ref[...], 0.0)
    h = jnp.dot(h.astype(jnp.bfloat16), w1_ref[...],
                preferred_element_type=jnp.float32) + b1_ref[...]

    # --- bn2 + relu ---
    h = jnp.maximum(h * s2_ref[...] + t2_ref[...], 0.0)

    # --- conv2 3x3, pad=1, stride=1: zero halo in VMEM, 9 shifted tap
    #     matmuls accumulated in f32.  Interior stored at column _XOFF so
    #     the store is sublane-aligned; per-kx column loads share one
    #     sublane shift across the three ky taps. ---
    pad_ref[...] = jnp.zeros(pad_ref.shape, pad_ref.dtype)
    pad_ref[1:H + 1, _XOFF:_XOFF + W, :] = h.reshape(H, W, planes)
    acc = jnp.zeros((hw, planes), jnp.float32)
    for kx in range(3):
        c0 = _XOFF - 1 + kx
        col = pad_ref[:, c0:c0 + W, :].astype(jnp.bfloat16)          # (H+2, W, P)
        for ky in range(3):
            patch = col[ky:ky + H].reshape(hw, planes)
            acc = acc + jnp.dot(patch, w2_ref[ky * 3 + kx],
                                preferred_element_type=jnp.float32)
    h = acc + b2_ref[...]

    # --- bn3 + relu + conv3 1x1 ---
    h = jnp.maximum(h * s3_ref[...] + t3_ref[...], 0.0)
    out = jnp.dot(h.astype(jnp.bfloat16), w3_ref[...],
                  preferred_element_type=jnp.float32) + b3_ref[...]

    # --- residual, fused into the same kernel ---
    if has_down:
        res = jnp.dot(x.astype(jnp.bfloat16), wd_ref[...],
                      preferred_element_type=jnp.float32) + bd_ref[...]
    else:
        res = x                                                     # identity (f32)

    o_ref[0] = (out + res).reshape(H, W, cout)


def _full_spec(shape):
    return pl.BlockSpec(shape, lambda b: (0,) * len(shape))


@functools.lru_cache(maxsize=None)
def _bottleneck_call(B, H, W, cin, planes, has_down):
    cout = 2 * planes
    kernel = functools.partial(_bottleneck_kernel, H, W, has_down)

    in_specs = [
        pl.BlockSpec((1, H, W, cin), lambda b: (b, 0, 0, 0)),        # x
        _full_spec((1, cin)), _full_spec((1, cin)),                  # s1, t1
        _full_spec((cin, planes)), _full_spec((1, planes)),          # w1, b1
        _full_spec((1, planes)), _full_spec((1, planes)),            # s2, t2
        _full_spec((9, planes, planes)), _full_spec((1, planes)),    # w2, b2
        _full_spec((1, planes)), _full_spec((1, planes)),            # s3, t3
        _full_spec((planes, cout)), _full_spec((1, cout)),           # w3, b3
    ]
    if has_down:
        in_specs += [_full_spec((cin, cout)), _full_spec((1, cout))]  # wd, bd

    return pl.pallas_call(
        kernel,
        grid=(B,),
        in_specs=in_specs,
        out_specs=pl.BlockSpec((1, H, W, cout), lambda b: (b, 0, 0, 0)),
        out_shape=jax.ShapeDtypeStruct((B, H, W, cout), jnp.float32),
        scratch_shapes=[pltpu.VMEM((H + 2, W + 2 * _XOFF, planes), jnp.float32)],
        compiler_params=pltpu.CompilerParams(
            dimension_semantics=("parallel",)),
    )


# ----------------------------------------------------------------------------
# Parameters & host-side wrapper
# ----------------------------------------------------------------------------

def init_bottleneck_params(key, inplanes, planes, downsample):
    cout = 2 * planes
    ks = jax.random.split(key, 4)

    def bn(c):
        gamma = jnp.ones((c,), jnp.float32)
        beta = jnp.zeros((c,), jnp.float32)
        mean = jnp.zeros((c,), jnp.float32)
        var = jnp.ones((c,), jnp.float32)
        scale = gamma / jnp.sqrt(var + _BN_EPS)
        shift = beta - mean * scale
        return scale.reshape(1, c), shift.reshape(1, c)

    def conv(k, fan_in, shape):
        kw_, kb_ = jax.random.split(k)
        std = 1.0 / np.sqrt(fan_in)
        w = (std * jax.random.normal(kw_, shape, jnp.float32)).astype(jnp.bfloat16)
        b = (std * jax.random.normal(kb_, (shape[-1],), jnp.float32)).reshape(1, -1)
        return w, b

    p = {}
    p['s1'], p['t1'] = bn(inplanes)
    p['w1'], p['b1'] = conv(ks[0], inplanes, (inplanes, planes))
    p['s2'], p['t2'] = bn(planes)
    w2, p['b2'] = conv(ks[1], 9 * planes, (3, 3, planes, planes))
    p['w2'] = w2.reshape(9, planes, planes)                 # tap-major (ky*3+kx)
    p['s3'], p['t3'] = bn(planes)
    p['w3'], p['b3'] = conv(ks[2], planes, (planes, cout))
    if downsample:
        p['wd'], p['bd'] = conv(ks[3], inplanes, (inplanes, cout))
    return p


def bottleneck_forward(params, x_nchw):
    x = jnp.transpose(x_nchw, (0, 2, 3, 1)).astype(jnp.float32)   # NCHW -> NHWC
    B, H, W, cin = x.shape
    planes = params['w1'].shape[-1]
    has_down = 'wd' in params
    if not has_down:
        assert cin == 2 * planes, "identity residual needs inplanes == planes*2"
    args = [x,
            params['s1'], params['t1'], params['w1'], params['b1'],
            params['s2'], params['t2'], params['w2'], params['b2'],
            params['s3'], params['t3'], params['w3'], params['b3']]
    if has_down:
        args += [params['wd'], params['bd']]
    y = _bottleneck_call(B, H, W, cin, planes, has_down)(*args)
    return jnp.transpose(y, (0, 3, 1, 2))                         # NHWC -> NCHW


bottleneck_forward_jit = jax.jit(bottleneck_forward)


# ----------------------------------------------------------------------------
# Pure-JAX reference (same bf16 operand rounding, f32 math)
# ----------------------------------------------------------------------------

def _bf16(v):
    return v.astype(jnp.bfloat16).astype(jnp.float32)


def bottleneck_reference(params, x_nchw):
    x = jnp.transpose(x_nchw, (0, 2, 3, 1)).astype(jnp.float32)
    planes = params['w1'].shape[-1]
    hp = jax.lax.Precision.HIGHEST

    def mm(v, w, b):
        return jnp.einsum('nhwc,cd->nhwd', _bf16(v), w.astype(jnp.float32),
                          precision=hp) + b[0]

    h = jnp.maximum(x * params['s1'][0] + params['t1'][0], 0.0)
    h = mm(h, params['w1'], params['b1'])
    h = jnp.maximum(h * params['s2'][0] + params['t2'][0], 0.0)
    w2 = params['w2'].astype(jnp.float32).reshape(3, 3, planes, planes)
    h = jax.lax.conv_general_dilated(
        _bf16(h), w2, window_strides=(1, 1), padding='SAME',
        dimension_numbers=('NHWC', 'HWIO', 'NHWC'),
        precision=hp) + params['b2'][0]
    h = jnp.maximum(h * params['s3'][0] + params['t3'][0], 0.0)
    out = mm(h, params['w3'], params['b3'])
    if 'wd' in params:
        res = mm(x, params['wd'], params['bd'])
    else:
        res = x
    return jnp.transpose(out + res, (0, 3, 1, 2))


# ----------------------------------------------------------------------------
# Main
# ----------------------------------------------------------------------------

if __name__ == "__main__":
    B, H, W = 2, 16, 16
    INPLANES1, PLANES1 = 64, 64       # block 1: downsample 1x1 conv, 64 -> 128
    INPLANES2, PLANES2 = 128, 64      # block 2: identity residual,  128 -> 128

    root = jax.random.PRNGKey(0)
    k_x, k_p1, k_p2 = jax.random.split(root, 3)

    x = jax.random.normal(k_x, (B, INPLANES1, H, W), jnp.float32)

    p1 = init_bottleneck_params(k_p1, INPLANES1, PLANES1, downsample=True)
    p2 = init_bottleneck_params(k_p2, INPLANES2, PLANES2, downsample=False)

    # Fused Pallas bottlenecks (downsample path, then identity path).
    y1 = bottleneck_forward_jit(p1, x)
    y2 = bottleneck_forward_jit(p2, y1)
    y2 = jax.block_until_ready(y2)

    assert y1.shape == (B, 2 * PLANES1, H, W), y1.shape
    assert y2.shape == (B, 2 * PLANES2, H, W), y2.shape
    assert y1.dtype == jnp.float32 and y2.dtype == jnp.float32

    # Correctness vs pure-JAX reference.
    r1 = bottleneck_reference(p1, x)
    r2 = bottleneck_reference(p2, r1)
    np.testing.assert_allclose(np.asarray(y1), np.asarray(r1), rtol=2e-2, atol=1e-2)
    np.testing.assert_allclose(np.asarray(y2), np.asarray(r2), rtol=2e-2, atol=1e-2)

    print("KERNEL_OK")
</pallas_src>

<mosaic_0001>
module attributes {stable_mosaic.version = 11 : i64} {
  func.func @_bottleneck_kernel(%arg0: i32, %arg1: memref<1x16x16x64xf32, #tpu.memory_space<vmem>>, %arg2: memref<1x64xf32, #tpu.memory_space<vmem>>, %arg3: memref<1x64xf32, #tpu.memory_space<vmem>>, %arg4: memref<64x64xbf16, #tpu.memory_space<vmem>>, %arg5: memref<1x64xf32, #tpu.memory_space<vmem>>, %arg6: memref<1x64xf32, #tpu.memory_space<vmem>>, %arg7: memref<1x64xf32, #tpu.memory_space<vmem>>, %arg8: memref<9x64x64xbf16, #tpu.memory_space<vmem>>, %arg9: memref<1x64xf32, #tpu.memory_space<vmem>>, %arg10: memref<1x64xf32, #tpu.memory_space<vmem>>, %arg11: memref<1x64xf32, #tpu.memory_space<vmem>>, %arg12: memref<64x128xbf16, #tpu.memory_space<vmem>>, %arg13: memref<1x128xf32, #tpu.memory_space<vmem>>, %arg14: memref<64x128xbf16, #tpu.memory_space<vmem>>, %arg15: memref<1x128xf32, #tpu.memory_space<vmem>>, %arg16: memref<1x16x16x128xf32, #tpu.memory_space<vmem>>, %arg17: memref<18x32x64xf32, #tpu.memory_space<vmem>>) attributes {dimension_semantics = [#tpu.dimension_semantics<parallel>], iteration_bounds = array<i64: 2>, scalar_prefetch = 0 : i64, scratch_operands = 1 : i64, tpu.core_type = #tpu.core_type<tc>, window_params = [{transform_indices = @transform_0, window_bounds = array<i64: 1, 16, 16, 64>}, {pipeline_mode = #tpu.pipeline_mode<synchronous>, transform_indices = @transform_1, window_bounds = array<i64: 1, 64>}, {pipeline_mode = #tpu.pipeline_mode<synchronous>, transform_indices = @transform_2, window_bounds = array<i64: 1, 64>}, {pipeline_mode = #tpu.pipeline_mode<synchronous>, transform_indices = @transform_3, window_bounds = array<i64: 64, 64>}, {pipeline_mode = #tpu.pipeline_mode<synchronous>, transform_indices = @transform_4, window_bounds = array<i64: 1, 64>}, {pipeline_mode = #tpu.pipeline_mode<synchronous>, transform_indices = @transform_5, window_bounds = array<i64: 1, 64>}, {pipeline_mode = #tpu.pipeline_mode<synchronous>, transform_indices = @transform_6, window_bounds = array<i64: 1, 64>}, {pipeline_mode = #tpu.pipeline_mode<synchronous>, transform_indices = @transform_7, window_bounds = array<i64: 9, 64, 64>}, {pipeline_mode = #tpu.pipeline_mode<synchronous>, transform_indices = @transform_8, window_bounds = array<i64: 1, 64>}, {pipeline_mode = #tpu.pipeline_mode<synchronous>, transform_indices = @transform_9, window_bounds = array<i64: 1, 64>}, {pipeline_mode = #tpu.pipeline_mode<synchronous>, transform_indices = @transform_10, window_bounds = array<i64: 1, 64>}, {pipeline_mode = #tpu.pipeline_mode<synchronous>, transform_indices = @transform_11, window_bounds = array<i64: 64, 128>}, {pipeline_mode = #tpu.pipeline_mode<synchronous>, transform_indices = @transform_12, window_bounds = array<i64: 1, 128>}, {pipeline_mode = #tpu.pipeline_mode<synchronous>, transform_indices = @transform_13, window_bounds = array<i64: 64, 128>}, {pipeline_mode = #tpu.pipeline_mode<synchronous>, transform_indices = @transform_14, window_bounds = array<i64: 1, 128>}, {transform_indices = @transform_15, window_bounds = array<i64: 1, 16, 16, 128>}]} {
    %c0 = arith.constant 0 : index
    %c0_0 = arith.constant 0 : index
    %c0_1 = arith.constant 0 : index
    %c0_2 = arith.constant 0 : index
    %0 = vector.load %arg1[%c0, %c0_0, %c0_1, %c0_2] : memref<1x16x16x64xf32, #tpu.memory_space<vmem>>, vector<1x16x16x64xf32>
    %1 = vector.shape_cast %0 : vector<1x16x16x64xf32> to vector<16x16x64xf32>
    %2 = vector.shape_cast %1 : vector<16x16x64xf32> to vector<256x64xf32>
    %c0_3 = arith.constant 0 : index
    %c0_4 = arith.constant 0 : index
    %3 = vector.load %arg2[%c0_3, %c0_4] : memref<1x64xf32, #tpu.memory_space<vmem>>, vector<1x64xf32>
    %4 = vector.broadcast %3 : vector<1x64xf32> to vector<256x64xf32>
    %5 = arith.mulf %2, %4 : vector<256x64xf32>
    %c0_5 = arith.constant 0 : index
    %c0_6 = arith.constant 0 : index
    %6 = vector.load %arg3[%c0_5, %c0_6] : memref<1x64xf32, #tpu.memory_space<vmem>>, vector<1x64xf32>
    %7 = vector.broadcast %6 : vector<1x64xf32> to vector<256x64xf32>
    %8 = arith.addf %5, %7 : vector<256x64xf32>
    %cst = arith.constant 0.000000e+00 : f32
    %9 = vector.broadcast %cst : f32 to vector<256x64xf32>
    %10 = arith.maximumf %8, %9 : vector<256x64xf32>
    %11 = arith.truncf %10 : vector<256x64xf32> to vector<256x64xbf16>
    %c0_7 = arith.constant 0 : index
    %c0_8 = arith.constant 0 : index
    %12 = vector.load %arg4[%c0_7, %c0_8] : memref<64x64xbf16, #tpu.memory_space<vmem>>, vector<64x64xbf16>
    %cst_9 = arith.constant dense<0.000000e+00> : vector<256x64xf32>
    %13 = tpu.matmul %11, %12, %cst_9 {dimension_numbers = #tpu.dot_dimension_numbers<[1], [0], [0], [1], [0, 0, 1, 1], [], []>} : vector<256x64xbf16>, vector<64x64xbf16>, vector<256x64xf32> -> vector<256x64xf32>
    %c0_10 = arith.constant 0 : index
    %c0_11 = arith.constant 0 : index
    %14 = vector.load %arg5[%c0_10, %c0_11] : memref<1x64xf32, #tpu.memory_space<vmem>>, vector<1x64xf32>
    %15 = vector.broadcast %14 : vector<1x64xf32> to vector<256x64xf32>
    %16 = arith.addf %13, %15 : vector<256x64xf32>
    %c0_12 = arith.constant 0 : index
    %c0_13 = arith.constant 0 : index
    %17 = vector.load %arg6[%c0_12, %c0_13] : memref<1x64xf32, #tpu.memory_space<vmem>>, vector<1x64xf32>
    %18 = vector.broadcast %17 : vector<1x64xf32> to vector<256x64xf32>
    %19 = arith.mulf %16, %18 : vector<256x64xf32>
    %c0_14 = arith.constant 0 : index
    %c0_15 = arith.constant 0 : index
    %20 = vector.load %arg7[%c0_14, %c0_15] : memref<1x64xf32, #tpu.memory_space<vmem>>, vector<1x64xf32>
    %21 = vector.broadcast %20 : vector<1x64xf32> to vector<256x64xf32>
    %22 = arith.addf %19, %21 : vector<256x64xf32>
    %cst_16 = arith.constant 0.000000e+00 : f32
    %23 = vector.broadcast %cst_16 : f32 to vector<256x64xf32>
    %24 = arith.maximumf %22, %23 : vector<256x64xf32>
    %cst_17 = arith.constant 0.000000e+00 : f32
    %25 = vector.broadcast %cst_17 : f32 to vector<18x32x64xf32>
    %c0_18 = arith.constant 0 : index
    %c0_19 = arith.constant 0 : index
    %c0_20 = arith.constant 0 : index
    %26 = vector.load %arg17[%c0_18, %c0_19, %c0_20] : memref<18x32x64xf32, #tpu.memory_space<vmem>>, vector<18x32x64xf32>
    tpu.vector_store %arg17[%c0_18, %c0_19, %c0_20], %25 {strides = array<i32>} : memref<18x32x64xf32, #tpu.memory_space<vmem>>, vector<18x32x64xf32>,
    %27 = vector.shape_cast %24 : vector<256x64xf32> to vector<16x16x64xf32>
    %c1 = arith.constant 1 : index
    %c8 = arith.constant 8 : index
    %c0_21 = arith.constant 0 : index
    %28 = vector.load %arg17[%c1, %c8, %c0_21] : memref<18x32x64xf32, #tpu.memory_space<vmem>>, vector<16x16x64xf32>
    tpu.vector_store %arg17[%c1, %c8, %c0_21], %27 {strides = array<i32>} : memref<18x32x64xf32, #tpu.memory_space<vmem>>, vector<16x16x64xf32>,
    %cst_22 = arith.constant 0.000000e+00 : f32
    %29 = vector.broadcast %cst_22 : f32 to vector<256x64xf32>
    %c0_23 = arith.constant 0 : index
    %c7 = arith.constant 7 : index
    %c0_24 = arith.constant 0 : index
    %30 = vector.load %arg17[%c0_23, %c7, %c0_24] : memref<18x32x64xf32, #tpu.memory_space<vmem>>, vector<18x16x64xf32>
    %31 = arith.truncf %30 : vector<18x16x64xf32> to vector<18x16x64xbf16>
    %32 = vector.extract_strided_slice %31 {offsets = [0, 0, 0], sizes = [16, 16, 64], strides = [1, 1, 1]} : vector<18x16x64xbf16> to vector<16x16x64xbf16>
    %33 = vector.shape_cast %32 : vector<16x16x64xbf16> to vector<256x64xbf16>
    %c0_25 = arith.constant 0 : index
    %c0_26 = arith.constant 0 : index
    %c0_27 = arith.constant 0 : index
    %34 = vector.load %arg8[%c0_25, %c0_26, %c0_27] : memref<9x64x64xbf16, #tpu.memory_space<vmem>>, vector<1x64x64xbf16>
    %35 = vector.shape_cast %34 : vector<1x64x64xbf16> to vector<64x64xbf16>
    %cst_28 = arith.constant dense<0.000000e+00> : vector<256x64xf32>
    %36 = tpu.matmul %33, %35, %cst_28 {dimension_numbers = #tpu.dot_dimension_numbers<[1], [0], [0], [1], [0, 0, 1, 1], [], []>} : vector<256x64xbf16>, vector<64x64xbf16>, vector<256x64xf32> -> vector<256x64xf32>
    %37 = arith.addf %29, %36 : vector<256x64xf32>
    %38 = vector.extract_strided_slice %31 {offsets = [1, 0, 0], sizes = [16, 16, 64], strides = [1, 1, 1]} : vector<18x16x64xbf16> to vector<16x16x64xbf16>
    %39 = vector.shape_cast %38 : vector<16x16x64xbf16> to vector<256x64xbf16>
    %c3 = arith.constant 3 : index
    %c0_29 = arith.constant 0 : index
    %c0_30 = arith.constant 0 : index
    %40 = vector.load %arg8[%c3, %c0_29, %c0_30] : memref<9x64x64xbf16, #tpu.memory_space<vmem>>, vector<1x64x64xbf16>
    %41 = vector.shape_cast %40 : vector<1x64x64xbf16> to vector<64x64xbf16>
    %cst_31 = arith.constant dense<0.000000e+00> : vector<256x64xf32>
    %42 = tpu.matmul %39, %41, %cst_31 {dimension_numbers = #tpu.dot_dimension_numbers<[1], [0], [0], [1], [0, 0, 1, 1], [], []>} : vector<256x64xbf16>, vector<64x64xbf16>, vector<256x64xf32> -> vector<256x64xf32>
    %43 = arith.addf %37, %42 : vector<256x64xf32>
    %44 = vector.extract_strided_slice %31 {offsets = [2, 0, 0], sizes = [16, 16, 64], strides = [1, 1, 1]} : vector<18x16x64xbf16> to vector<16x16x64xbf16>
    %45 = vector.shape_cast %44 : vector<16x16x64xbf16> to vector<256x64xbf16>
    %c6 = arith.constant 6 : index
    %c0_32 = arith.constant 0 : index
    %c0_33 = arith.constant 0 : index
    %46 = vector.load %arg8[%c6, %c0_32, %c0_33] : memref<9x64x64xbf16, #tpu.memory_space<vmem>>, vector<1x64x64xbf16>
    %47 = vector.shape_cast %46 : vector<1x64x64xbf16> to vector<64x64xbf16>
    %cst_34 = arith.constant dense<0.000000e+00> : vector<256x64xf32>
    %48 = tpu.matmul %45, %47, %cst_34 {dimension_numbers = #tpu.dot_dimension_numbers<[1], [0], [0], [1], [0, 0, 1, 1], [], []>} : vector<256x64xbf16>, vector<64x64xbf16>, vector<256x64xf32> -> vector<256x64xf32>
    %49 = arith.addf %43, %48 : vector<256x64xf32>
    %c0_35 = arith.constant 0 : index
    %c8_36 = arith.constant 8 : index
    %c0_37 = arith.constant 0 : index
    %50 = vector.load %arg17[%c0_35, %c8_36, %c0_37] : memref<18x32x64xf32, #tpu.memory_space<vmem>>, vector<18x16x64xf32>
    %51 = arith.truncf %50 : vector<18x16x64xf32> to vector<18x16x64xbf16>
    %52 = vector.extract_strided_slice %51 {offsets = [0, 0, 0], sizes = [16, 16, 64], strides = [1, 1, 1]} : vector<18x16x64xbf16> to vector<16x16x64xbf16>
    %53 = vector.shape_cast %52 : vector<16x16x64xbf16> to vector<256x64xbf16>
    %c1_38 = arith.constant 1 : index
    %c0_39 = arith.constant 0 : index
    %c0_40 = arith.constant 0 : index
    %54 = vector.load %arg8[%c1_38, %c0_39, %c0_40] : memref<9x64x64xbf16, #tpu.memory_space<vmem>>, vector<1x64x64xbf16>
    %55 = vector.shape_cast %54 : vector<1x64x64xbf16> to vector<64x64xbf16>
    %cst_41 = arith.constant dense<0.000000e+00> : vector<256x64xf32>
    %56 = tpu.matmul %53, %55, %cst_41 {dimension_numbers = #tpu.dot_dimension_numbers<[1], [0], [0], [1], [0, 0, 1, 1], [], []>} : vector<256x64xbf16>, vector<64x64xbf16>, vector<256x64xf32> -> vector<256x64xf32>
    %57 = arith.addf %49, %56 : vector<256x64xf32>
    %58 = vector.extract_strided_slice %51 {offsets = [1, 0, 0], sizes = [16, 16, 64], strides = [1, 1, 1]} : vector<18x16x64xbf16> to vector<16x16x64xbf16>
    %59 = vector.shape_cast %58 : vector<16x16x64xbf16> to vector<256x64xbf16>
    %c4 = arith.constant 4 : index
    %c0_42 = arith.constant 0 : index
    %c0_43 = arith.constant 0 : index
    %60 = vector.load %arg8[%c4, %c0_42, %c0_43] : memref<9x64x64xbf16, #tpu.memory_space<vmem>>, vector<1x64x64xbf16>
    %61 = vector.shape_cast %60 : vector<1x64x64xbf16> to vector<64x64xbf16>
    %cst_44 = arith.constant dense<0.000000e+00> : vector<256x64xf32>
    %62 = tpu.matmul %59, %61, %cst_44 {dimension_numbers = #tpu.dot_dimension_numbers<[1], [0], [0], [1], [0, 0, 1, 1], [], []>} : vector<256x64xbf16>, vector<64x64xbf16>, vector<256x64xf32> -> vector<256x64xf32>
    %63 = arith.addf %57, %62 : vector<256x64xf32>
    %64 = vector.extract_strided_slice %51 {offsets = [2, 0, 0], sizes = [16, 16, 64], strides = [1, 1, 1]} : vector<18x16x64xbf16> to vector<16x16x64xbf16>
    %65 = vector.shape_cast %64 : vector<16x16x64xbf16> to vector<256x64xbf16>
    %c7_45 = arith.constant 7 : index
    %c0_46 = arith.constant 0 : index
    %c0_47 = arith.constant 0 : index
    %66 = vector.load %arg8[%c7_45, %c0_46, %c0_47] : memref<9x64x64xbf16, #tpu.memory_space<vmem>>, vector<1x64x64xbf16>
    %67 = vector.shape_cast %66 : vector<1x64x64xbf16> to vector<64x64xbf16>
    %cst_48 = arith.constant dense<0.000000e+00> : vector<256x64xf32>
    %68 = tpu.matmul %65, %67, %cst_48 {dimension_numbers = #tpu.dot_dimension_numbers<[1], [0], [0], [1], [0, 0, 1, 1], [], []>} : vector<256x64xbf16>, vector<64x64xbf16>, vector<256x64xf32> -> vector<256x64xf32>
    %69 = arith.addf %63, %68 : vector<256x64xf32>
    %c0_49 = arith.constant 0 : index
    %c9 = arith.constant 9 : index
    %c0_50 = arith.constant 0 : index
    %70 = vector.load %arg17[%c0_49, %c9, %c0_50] : memref<18x32x64xf32, #tpu.memory_space<vmem>>, vector<18x16x64xf32>
    %71 = arith.truncf %70 : vector<18x16x64xf32> to vector<18x16x64xbf16>
    %72 = vector.extract_strided_slice %71 {offsets = [0, 0, 0], sizes = [16, 16, 64], strides = [1, 1, 1]} : vector<18x16x64xbf16> to vector<16x16x64xbf16>
    %73 = vector.shape_cast %72 : vector<16x16x64xbf16> to vector<256x64xbf16>
    %c2 = arith.constant 2 : index
    %c0_51 = arith.constant 0 : index
    %c0_52 = arith.constant 0 : index
    %74 = vector.load %arg8[%c2, %c0_51, %c0_52] : memref<9x64x64xbf16, #tpu.memory_space<vmem>>, vector<1x64x64xbf16>
    %75 = vector.shape_cast %74 : vector<1x64x64xbf16> to vector<64x64xbf16>
    %cst_53 = arith.constant dense<0.000000e+00> : vector<256x64xf32>
    %76 = tpu.matmul %73, %75, %cst_53 {dimension_numbers = #tpu.dot_dimension_numbers<[1], [0], [0], [1], [0, 0, 1, 1], [], []>} : vector<256x64xbf16>, vector<64x64xbf16>, vector<256x64xf32> -> vector<256x64xf32>
    %77 = arith.addf %69, %76 : vector<256x64xf32>
    %78 = vector.extract_strided_slice %71 {offsets = [1, 0, 0], sizes = [16, 16, 64], strides = [1, 1, 1]} : vector<18x16x64xbf16> to vector<16x16x64xbf16>
    %79 = vector.shape_cast %78 : vector<16x16x64xbf16> to vector<256x64xbf16>
    %c5 = arith.constant 5 : index
    %c0_54 = arith.constant 0 : index
    %c0_55 = arith.constant 0 : index
    %80 = vector.load %arg8[%c5, %c0_54, %c0_55] : memref<9x64x64xbf16, #tpu.memory_space<vmem>>, vector<1x64x64xbf16>
    %81 = vector.shape_cast %80 : vector<1x64x64xbf16> to vector<64x64xbf16>
    %cst_56 = arith.constant dense<0.000000e+00> : vector<256x64xf32>
    %82 = tpu.matmul %79, %81, %cst_56 {dimension_numbers = #tpu.dot_dimension_numbers<[1], [0], [0], [1], [0, 0, 1, 1], [], []>} : vector<256x64xbf16>, vector<64x64xbf16>, vector<256x64xf32> -> vector<256x64xf32>
    %83 = arith.addf %77, %82 : vector<256x64xf32>
    %84 = vector.extract_strided_slice %71 {offsets = [2, 0, 0], sizes = [16, 16, 64], strides = [1, 1, 1]} : vector<18x16x64xbf16> to vector<16x16x64xbf16>
    %85 = vector.shape_cast %84 : vector<16x16x64xbf16> to vector<256x64xbf16>
    %c8_57 = arith.constant 8 : index
    %c0_58 = arith.constant 0 : index
    %c0_59 = arith.constant 0 : index
    %86 = vector.load %arg8[%c8_57, %c0_58, %c0_59] : memref<9x64x64xbf16, #tpu.memory_space<vmem>>, vector<1x64x64xbf16>
    %87 = vector.shape_cast %86 : vector<1x64x64xbf16> to vector<64x64xbf16>
    %cst_60 = arith.constant dense<0.000000e+00> : vector<256x64xf32>
    %88 = tpu.matmul %85, %87, %cst_60 {dimension_numbers = #tpu.dot_dimension_numbers<[1], [0], [0], [1], [0, 0, 1, 1], [], []>} : vector<256x64xbf16>, vector<64x64xbf16>, vector<256x64xf32> -> vector<256x64xf32>
    %89 = arith.addf %83, %88 : vector<256x64xf32>
    %c0_61 = arith.constant 0 : index
    %c0_62 = arith.constant 0 : index
    %90 = vector.load %arg9[%c0_61, %c0_62] : memref<1x64xf32, #tpu.memory_space<vmem>>, vector<1x64xf32>
    %91 = vector.broadcast %90 : vector<1x64xf32> to vector<256x64xf32>
    %92 = arith.addf %89, %91 : vector<256x64xf32>
    %c0_63 = arith.constant 0 : index
    %c0_64 = arith.constant 0 : index
    %93 = vector.load %arg10[%c0_63, %c0_64] : memref<1x64xf32, #tpu.memory_space<vmem>>, vector<1x64xf32>
    %94 = vector.broadcast %93 : vector<1x64xf32> to vector<256x64xf32>
    %95 = arith.mulf %92, %94 : vector<256x64xf32>
    %c0_65 = arith.constant 0 : index
    %c0_66 = arith.constant 0 : index
    %96 = vector.load %arg11[%c0_65, %c0_66] : memref<1x64xf32, #tpu.memory_space<vmem>>, vector<1x64xf32>
    %97 = vector.broadcast %96 : vector<1x64xf32> to vector<256x64xf32>
    %98 = arith.addf %95, %97 : vector<256x64xf32>
    %cst_67 = arith.constant 0.000000e+00 : f32
    %99 = vector.broadcast %cst_67 : f32 to vector<256x64xf32>
    %100 = arith.maximumf %98, %99 : vector<256x64xf32>
    %101 = arith.truncf %100 : vector<256x64xf32> to vector<256x64xbf16>
    %c0_68 = arith.constant 0 : index
    %c0_69 = arith.constant 0 : index
    %102 = vector.load %arg12[%c0_68, %c0_69] : memref<64x128xbf16, #tpu.memory_space<vmem>>, vector<64x128xbf16>
    %cst_70 = arith.constant dense<0.000000e+00> : vector<256x128xf32>
    %103 = tpu.matmul %101, %102, %cst_70 {dimension_numbers = #tpu.dot_dimension_numbers<[1], [0], [0], [1], [0, 0, 1, 1], [], []>} : vector<256x64xbf16>, vector<64x128xbf16>, vector<256x128xf32> -> vector<256x128xf32>
    %c0_71 = arith.constant 0 : index
    %c0_72 = arith.constant 0 : index
    %104 = vector.load %arg13[%c0_71, %c0_72] : memref<1x128xf32, #tpu.memory_space<vmem>>, vector<1x128xf32>
    %105 = vector.broadcast %104 : vector<1x128xf32> to vector<256x128xf32>
    %106 = arith.addf %103, %105 : vector<256x128xf32>
    %107 = arith.truncf %2 : vector<256x64xf32> to vector<256x64xbf16>
    %c0_73 = arith.constant 0 : index
    %c0_74 = arith.constant 0 : index
    %108 = vector.load %arg14[%c0_73, %c0_74] : memref<64x128xbf16, #tpu.memory_space<vmem>>, vector<64x128xbf16>
    %cst_75 = arith.constant dense<0.000000e+00> : vector<256x128xf32>
    %109 = tpu.matmul %107, %108, %cst_75 {dimension_numbers = #tpu.dot_dimension_numbers<[1], [0], [0], [1], [0, 0, 1, 1], [], []>} : vector<256x64xbf16>, vector<64x128xbf16>, vector<256x128xf32> -> vector<256x128xf32>
    %c0_76 = arith.constant 0 : index
    %c0_77 = arith.constant 0 : index
    %110 = vector.load %arg15[%c0_76, %c0_77] : memref<1x128xf32, #tpu.memory_space<vmem>>, vector<1x128xf32>
    %111 = vector.broadcast %110 : vector<1x128xf32> to vector<256x128xf32>
    %112 = arith.addf %109, %111 : vector<256x128xf32>
    %113 = arith.addf %106, %112 : vector<256x128xf32>
    %114 = vector.shape_cast %113 : vector<256x128xf32> to vector<16x16x128xf32>
    %c0_78 = arith.constant 0 : index
    %c0_79 = arith.constant 0 : index
    %c0_80 = arith.constant 0 : index
    %c0_81 = arith.constant 0 : index
    %115 = vector.load %arg16[%c0_78, %c0_79, %c0_80, %c0_81] : memref<1x16x16x128xf32, #tpu.memory_space<vmem>>, vector<1x16x16x128xf32>
    %116 = vector.shape_cast %115 : vector<1x16x16x128xf32> to vector<16x16x128xf32>
    %117 = vector.shape_cast %114 : vector<16x16x128xf32> to vector<1x16x16x128xf32>
    tpu.vector_store %arg16[%c0_78, %c0_79, %c0_80, %c0_81], %117 {strides = array<i32>} : memref<1x16x16x128xf32, #tpu.memory_space<vmem>>, vector<1x16x16x128xf32>,
    return
  }
  func.func @transform_0(%arg0: i32) -> (i32, i32, i32, i32) {
    %c0_i32 = arith.constant 0 : i32
    %c0_i32_0 = arith.constant 0 : i32
    %c0_i32_1 = arith.constant 0 : i32
    %c0_i32_2 = arith.constant 0 : i32
    return %arg0, %c0_i32, %c0_i32_0, %c0_i32_1 : i32, i32, i32, i32
  }
  func.func @transform_1(%arg0: i32) -> (i32, i32) {
    %c0_i32 = arith.constant 0 : i32
    %c0_i32_0 = arith.constant 0 : i32
    %c0_i32_1 = arith.constant 0 : i32
    return %c0_i32, %c0_i32_0 : i32, i32
  }
  func.func @transform_2(%arg0: i32) -> (i32, i32) {
    %c0_i32 = arith.constant 0 : i32
    %c0_i32_0 = arith.constant 0 : i32
    %c0_i32_1 = arith.constant 0 : i32
    return %c0_i32, %c0_i32_0 : i32, i32
  }
  func.func @transform_3(%arg0: i32) -> (i32, i32) {
    %c0_i32 = arith.constant 0 : i32
    %c0_i32_0 = arith.constant 0 : i32
    %c0_i32_1 = arith.constant 0 : i32
    return %c0_i32, %c0_i32_0 : i32, i32
  }
  func.func @transform_4(%arg0: i32) -> (i32, i32) {
    %c0_i32 = arith.constant 0 : i32
    %c0_i32_0 = arith.constant 0 : i32
    %c0_i32_1 = arith.constant 0 : i32
    return %c0_i32, %c0_i32_0 : i32, i32
  }
  func.func @transform_5(%arg0: i32) -> (i32, i32) {
    %c0_i32 = arith.constant 0 : i32
    %c0_i32_0 = arith.constant 0 : i32
    %c0_i32_1 = arith.constant 0 : i32
    return %c0_i32, %c0_i32_0 : i32, i32
  }
  func.func @transform_6(%arg0: i32) -> (i32, i32) {
    %c0_i32 = arith.constant 0 : i32
    %c0_i32_0 = arith.constant 0 : i32
    %c0_i32_1 = arith.constant 0 : i32
    return %c0_i32, %c0_i32_0 : i32, i32
  }
  func.func @transform_7(%arg0: i32) -> (i32, i32, i32) {
    %c0_i32 = arith.constant 0 : i32
    %c0_i32_0 = arith.constant 0 : i32
    %c0_i32_1 = arith.constant 0 : i32
    %c0_i32_2 = arith.constant 0 : i32
    return %c0_i32, %c0_i32_0, %c0_i32_1 : i32, i32, i32
  }
  func.func @transform_8(%arg0: i32) -> (i32, i32) {
    %c0_i32 = arith.constant 0 : i32
    %c0_i32_0 = arith.constant 0 : i32
    %c0_i32_1 = arith.constant 0 : i32
    return %c0_i32, %c0_i32_0 : i32, i32
  }
  func.func @transform_9(%arg0: i32) -> (i32, i32) {
    %c0_i32 = arith.constant 0 : i32
    %c0_i32_0 = arith.constant 0 : i32
    %c0_i32_1 = arith.constant 0 : i32
    return %c0_i32, %c0_i32_0 : i32, i32
  }
  func.func @transform_10(%arg0: i32) -> (i32, i32) {
    %c0_i32 = arith.constant 0 : i32
    %c0_i32_0 = arith.constant 0 : i32
    %c0_i32_1 = arith.constant 0 : i32
    return %c0_i32, %c0_i32_0 : i32, i32
  }
  func.func @transform_11(%arg0: i32) -> (i32, i32) {
    %c0_i32 = arith.constant 0 : i32
    %c0_i32_0 = arith.constant 0 : i32
    %c0_i32_1 = arith.constant 0 : i32
    return %c0_i32, %c0_i32_0 : i32, i32
  }
  func.func @transform_12(%arg0: i32) -> (i32, i32) {
    %c0_i32 = arith.constant 0 : i32
    %c0_i32_0 = arith.constant 0 : i32
    %c0_i32_1 = arith.constant 0 : i32
    return %c0_i32, %c0_i32_0 : i32, i32
  }
  func.func @transform_13(%arg0: i32) -> (i32, i32) {
    %c0_i32 = arith.constant 0 : i32
    %c0_i32_0 = arith.constant 0 : i32
    %c0_i32_1 = arith.constant 0 : i32
    return %c0_i32, %c0_i32_0 : i32, i32
  }
  func.func @transform_14(%arg0: i32) -> (i32, i32) {
    %c0_i32 = arith.constant 0 : i32
    %c0_i32_0 = arith.constant 0 : i32
    %c0_i32_1 = arith.constant 0 : i32
    return %c0_i32, %c0_i32_0 : i32, i32
  }
  func.func @transform_15(%arg0: i32) -> (i32, i32, i32, i32) {
    %c0_i32 = arith.constant 0 : i32
    %c0_i32_0 = arith.constant 0 : i32
    %c0_i32_1 = arith.constant 0 : i32
    %c0_i32_2 = arith.constant 0 : i32
    return %arg0, %c0_i32, %c0_i32_0, %c0_i32_1 : i32, i32, i32, i32
  }
}

</mosaic_0001>

<llo_original>
// kernel: bottleneck_forward.1
$region0: #{bottleneck_forward.1}
  #allocation0 [shape = 'u32[]', space=smem, size = 0x4, offset = 0x4, fixed_abs, tag = 'smem constant byte address 0x4 - core index']
  #allocation1 [shape = 'u32[144,128]{1,0:T(1,128)}', space=vmem, size = 0x12000, scoped, tag = 'internal scratch']
  #allocation2 [shape = 'f32[18,32,64]{2,1,0:T(8,128)}', space=vmem, size = 0x48000, scoped, tag = 'scratch operand']
  %s0 = inlined_call_operand.hbm [shape: f32[2,16,16,64], index: 0, kind: input, shape index: {}]
  %s1 = inlined_call_operand.vmem [shape: f32[1,64], index: 1, kind: input, shape index: {}]
  %s2 = inlined_call_operand.vmem [shape: f32[1,64], index: 2, kind: input, shape index: {}]
  %s3 = inlined_call_operand.vmem [shape: bf16[64,64], index: 3, kind: input, shape index: {}]
  %s4 = inlined_call_operand.vmem [shape: f32[1,64], index: 4, kind: input, shape index: {}]
  %s5 = inlined_call_operand.vmem [shape: f32[1,64], index: 5, kind: input, shape index: {}]
  %s6 = inlined_call_operand.vmem [shape: f32[1,64], index: 6, kind: input, shape index: {}]
  %s7 = inlined_call_operand.hbm [shape: bf16[9,64,64], index: 7, kind: input, shape index: {}]
  %s8 = inlined_call_operand.vmem [shape: f32[1,64], index: 8, kind: input, shape index: {}]
  %s9 = inlined_call_operand.vmem [shape: f32[1,64], index: 9, kind: input, shape index: {}]
  %s10 = inlined_call_operand.vmem [shape: f32[1,64], index: 10, kind: input, shape index: {}]
  %s11 = inlined_call_operand.hbm [shape: bf16[64,128], index: 11, kind: input, shape index: {}]
  %s12 = inlined_call_operand.vmem [shape: f32[1,128], index: 12, kind: input, shape index: {}]
  %s13 = inlined_call_operand.hbm [shape: bf16[64,128], index: 13, kind: input, shape index: {}]
  %s14 = inlined_call_operand.hbm [shape: f32[1,128], index: 14, kind: input, shape index: {}]
  %s15 = inlined_call_operand.hbm [shape: f32[2,16,16,128], index: 15, kind: output, shape index: {}]
  %s16 = sld [smem:[#allocation0]]
  $region113: #{bottleneck_forward.1} parent=0
    _
  %s18 = ssub.s32 1, %s16
  %s19 = scalar_select 0, %s18, %s16
  $region1: #{bottleneck_forward.1} parent=0
    #allocation3 [shape = 'u8[262144]{0}', space=vmem, size = 0x40000, scoped, tag = 'input window, operand 0']
    #allocation4 [shape = 's32[2]{0}', space=sflag, size = 0x8, scoped, tag = 'scoped memory for bottleneck_forward.1']
    #allocation5 [shape = 's32[2]{0}', space=sflag, size = 0x8, scoped, tag = 'scoped memory for bottleneck_forward.1']
    #allocation6 [shape = 'u8[147456]{0}', space=vmem, size = 0x24000, scoped, tag = 'input window, operand 7, single buffered']
    #allocation7 [shape = 's32[1]{0}', space=sflag, size = 0x4, scoped, tag = 'scoped memory for bottleneck_forward.1']
    #allocation8 [shape = 'u8[16384]{0}', space=vmem, size = 0x4000, scoped, tag = 'input window, operand 11, single buffered']
    #allocation9 [shape = 'u8[16384]{0}', space=vmem, size = 0x4000, scoped, tag = 'input window, operand 13, single buffered']
    #allocation10 [shape = 's32[1]{0}', space=sflag, size = 0x4, scoped, tag = 'scoped memory for bottleneck_forward.1']
    #allocation11 [shape = 'u8[512]{0}', space=vmem, size = 0x400, scoped, tag = 'input window, operand 14, single buffered']
    #allocation12 [shape = 'u8[262144]{0}', space=vmem, size = 0x40000, scoped, tag = 'output window, operand 0']
    %20 = vsyncpa [#allocation4], 0
    %s21 = scalar_lea.sflag [#allocation4], 1
    %22 = vsyncpa %s21, 0
    %23 = vsyncpa [#allocation7], 0
    %24 = vsyncpa [#allocation10], 0
    %25 = vsyncpa [#allocation5], 0
    %s26 = scalar_lea.sflag [#allocation5], 1
    %27 = vsyncpa %s26, 0
    loop: start=0, step=1, limit=4
    $region2: #{bottleneck_forward.1} parent=1 // loop_pre_header
      _
    $region3: #{bottleneck_forward.1} parent=1 // loop_header
      %s29 = sphi 0, %s33
      %p30 = scmp.ge.s32.totalorder %s29, 4
      %s39 = sphi 0, %s41
      %s42 = sphi 0, %s39
      %s43 = sphi 0, %s42
      %s59 = sphi 0, %s43
      %s63 = sphi 0, %s63
      %s65 = sphi 0, %s63
      %s66 = sphi 0, %s65
      %s80 = sphi 0, %s66
      %s84 = sphi 0, %s84
      %s86 = sphi 0, %s84
      %s87 = sphi 0, %s86
      %s101 = sphi 0, %s87
      %s105 = sphi 0, %s105
      %s107 = sphi 0, %s105
      %s108 = sphi 0, %s107
      %s122 = sphi 0, %s108
      %s126 = sphi 0, %s126
      %s128 = sphi 0, %s126
      %s129 = sphi 0, %s128
      %s143 = sphi 0, %s129
      %s147 = sphi 0, %s147
      %s149 = sphi 0, %s147
      %s150 = sphi 0, %s149
      %s164 = sphi 0, %s150
      %s168 = sphi 0, %s168
      %s170 = sphi 0, %s168
      %s171 = sphi 0, %s170
      %s185 = sphi 0, %s171
      %s189 = sphi 0, %s189
      %s191 = sphi 0, %s189
      %s192 = sphi 0, %s191
      %s206 = sphi 0, %s192
      %s210 = sphi 0, %s210
      %s212 = sphi 0, %s210
      %s213 = sphi 0, %s212
      %s227 = sphi 0, %s213
      %s231 = sphi 0, %s231
      %s233 = sphi 0, %s231
      %s234 = sphi 0, %s233
      %s248 = sphi 0, %s234
      %s252 = sphi 0, %s252
      %s254 = sphi 0, %s252
      %s255 = sphi 0, %s254
      %s269 = sphi 0, %s255
      %s273 = sphi 0, %s273
      %s275 = sphi 0, %s273
      %s276 = sphi 0, %s275
      %s290 = sphi 0, %s276
      %s294 = sphi 0, %s294
      %s296 = sphi 0, %s294
      %s297 = sphi 0, %s296
      %s311 = sphi 0, %s297
      %s315 = sphi 0, %s315
      %s317 = sphi 0, %s315
      %s318 = sphi 0, %s317
      %s332 = sphi 0, %s318
      %s336 = sphi 0, %s336
      %s338 = sphi 0, %s336
      %s339 = sphi 0, %s338
      %s353 = sphi 0, %s339
      %s359 = sphi 0, %s361
      %s362 = sphi 0, %s359
      %s363 = sphi 0, %s362
      %s379 = sphi 0, %s363
    $region4: #{bottleneck_forward.1} parent=1 // loop_header_branch
      %32 = sbr.rel (%p30) target = $region8
    $region5: #{bottleneck_forward.1} parent=1 // loop_body
      %s34 = ssub.s32 %s29, 1
      %s35 = ssub.s32 %s29, 2
      %s36 = sadd.s32 %s29, 1
      %s37 = ssub.s32 %s29, %s36
      %p38 = scmp.eq.s32.totalorder %s37, 0
      %s40 = sadd.s32 %s39, 1
      %s41 = scalar_select %p38, %s39, %s40
      %p44 = pneg %p38
      %p45 = scmp.eq.s32.totalorder %s29, 1
      %p46 = por %p44, %p45
      %p47 = scmp.ne.s32.totalorder %s39, %s42
      %p48 = scmp.eq.s32.totalorder %s29, 0
      %p49 = por %p47, %p48
      %p50 = scmp.ne.s32.totalorder %s39, %s42
      %p51 = scmp.eq.s32.totalorder %s34, 1
      %p52 = por %p50, %p51
      %p53 = scmp.ne.s32.totalorder %s42, %s43
      %p54 = scmp.eq.s32.totalorder %s34, 0
      %p55 = por %p53, %p54
      %p56 = scmp.ne.s32.totalorder %s42, %s43
      %p57 = scmp.eq.s32.totalorder %s35, 1
      %p58 = por %p56, %p57
      %p60 = scmp.ne.s32.totalorder %s43, %s59
      %p61 = scmp.eq.s32.totalorder %s35, 0
      %p62 = por %p60, %p61
      %s64 = sadd.s32 %s63, 1
      %p67 = scmp.eq.s32.totalorder %s29, 1
      %p68 = scmp.ne.s32.totalorder %s63, %s65
      %p69 = scmp.eq.s32.totalorder %s29, 0
      %p70 = por %p68, %p69
      %p71 = scmp.ne.s32.totalorder %s63, %s65
      %p72 = scmp.eq.s32.totalorder %s34, 1
      %p73 = por %p71, %p72
      %p74 = scmp.ne.s32.totalorder %s65, %s66
      %p75 = scmp.eq.s32.totalorder %s34, 0
      %p76 = por %p74, %p75
      %p77 = scmp.ne.s32.totalorder %s65, %s66
      %p78 = scmp.eq.s32.totalorder %s35, 1
      %p79 = por %p77, %p78
      %p81 = scmp.ne.s32.totalorder %s66, %s80
      %p82 = scmp.eq.s32.totalorder %s35, 0
      %p83 = por %p81, %p82
      %s85 = sadd.s32 %s84, 1
      %p88 = scmp.eq.s32.totalorder %s29, 1
      %p89 = scmp.ne.s32.totalorder %s84, %s86
      %p90 = scmp.eq.s32.totalorder %s29, 0
      %p91 = por %p89, %p90
      %p92 = scmp.ne.s32.totalorder %s84, %s86
      %p93 = scmp.eq.s32.totalorder %s34, 1
      %p94 = por %p92, %p93
      %p95 = scmp.ne.s32.totalorder %s86, %s87
      %p96 = scmp.eq.s32.totalorder %s34, 0
      %p97 = por %p95, %p96
      %p98 = scmp.ne.s32.totalorder %s86, %s87
      %p99 = scmp.eq.s32.totalorder %s35, 1
      %p100 = por %p98, %p99
      %p102 = scmp.ne.s32.totalorder %s87, %s101
      %p103 = scmp.eq.s32.totalorder %s35, 0
      %p104 = por %p102, %p103
      %s106 = sadd.s32 %s105, 1
      %p109 = scmp.eq.s32.totalorder %s29, 1
      %p110 = scmp.ne.s32.totalorder %s105, %s107
      %p111 = scmp.eq.s32.totalorder %s29, 0
      %p112 = por %p110, %p111
      %p113 = scmp.ne.s32.totalorder %s105, %s107
      %p114 = scmp.eq.s32.totalorder %s34, 1
      %p115 = por %p113, %p114
      %p116 = scmp.ne.s32.totalorder %s107, %s108
      %p117 = scmp.eq.s32.totalorder %s34, 0
      %p118 = por %p116, %p117
      %p119 = scmp.ne.s32.totalorder %s107, %s108
      %p120 = scmp.eq.s32.totalorder %s35, 1
      %p121 = por %p119, %p120
      %p123 = scmp.ne.s32.totalorder %s108, %s122
      %p124 = scmp.eq.s32.totalorder %s35, 0
      %p125 = por %p123, %p124
      %s127 = sadd.s32 %s126, 1
      %p130 = scmp.eq.s32.totalorder %s29, 1
      %p131 = scmp.ne.s32.totalorder %s126, %s128
      %p132 = scmp.eq.s32.totalorder %s29, 0
      %p133 = por %p131, %p132
      %p134 = scmp.ne.s32.totalorder %s126, %s128
      %p135 = scmp.eq.s32.totalorder %s34, 1
      %p136 = por %p134, %p135
      %p137 = scmp.ne.s32.totalorder %s128, %s129
      %p138 = scmp.eq.s32.totalorder %s34, 0
      %p139 = por %p137, %p138
      %p140 = scmp.ne.s32.totalorder %s128, %s129
      %p141 = scmp.eq.s32.totalorder %s35, 1
      %p142 = por %p140, %p141
      %p144 = scmp.ne.s32.totalorder %s129, %s143
      %p145 = scmp.eq.s32.totalorder %s35, 0
      %p146 = por %p144, %p145
      %s148 = sadd.s32 %s147, 1
      %p151 = scmp.eq.s32.totalorder %s29, 1
      %p152 = scmp.ne.s32.totalorder %s147, %s149
      %p153 = scmp.eq.s32.totalorder %s29, 0
      %p154 = por %p152, %p153
      %p155 = scmp.ne.s32.totalorder %s147, %s149
      %p156 = scmp.eq.s32.totalorder %s34, 1
      %p157 = por %p155, %p156
      %p158 = scmp.ne.s32.totalorder %s149, %s150
      %p159 = scmp.eq.s32.totalorder %s34, 0
      %p160 = por %p158, %p159
      %p161 = scmp.ne.s32.totalorder %s149, %s150
      %p162 = scmp.eq.s32.totalorder %s35, 1
      %p163 = por %p161, %p162
      %p165 = scmp.ne.s32.totalorder %s150, %s164
      %p166 = scmp.eq.s32.totalorder %s35, 0
      %p167 = por %p165, %p166
      %s169 = sadd.s32 %s168, 1
      %p172 = scmp.eq.s32.totalorder %s29, 1
      %p173 = scmp.ne.s32.totalorder %s168, %s170
      %p174 = scmp.eq.s32.totalorder %s29, 0
      %p175 = por %p173, %p174
      %p176 = scmp.ne.s32.totalorder %s168, %s170
      %p177 = scmp.eq.s32.totalorder %s34, 1
      %p178 = por %p176, %p177
      %p179 = scmp.ne.s32.totalorder %s170, %s171
      %p180 = scmp.eq.s32.totalorder %s34, 0
      %p181 = por %p179, %p180
      %p182 = scmp.ne.s32.totalorder %s170, %s171
      %p183 = scmp.eq.s32.totalorder %s35, 1
      %p184 = por %p182, %p183
      %p186 = scmp.ne.s32.totalorder %s171, %s185
      %p187 = scmp.eq.s32.totalorder %s35, 0
      %p188 = por %p186, %p187
      %s190 = sadd.s32 %s189, 1
      %p193 = scmp.eq.s32.totalorder %s29, 1
      %p194 = scmp.ne.s32.totalorder %s189, %s191
      %p195 = scmp.eq.s32.totalorder %s29, 0
      %p196 = por %p194, %p195
      %p197 = scmp.ne.s32.totalorder %s189, %s191
      %p198 = scmp.eq.s32.totalorder %s34, 1
      %p199 = por %p197, %p198
      %p200 = scmp.ne.s32.totalorder %s191, %s192
      %p201 = scmp.eq.s32.totalorder %s34, 0
      %p202 = por %p200, %p201
      %p203 = scmp.ne.s32.totalorder %s191, %s192
      %p204 = scmp.eq.s32.totalorder %s35, 1
      %p205 = por %p203, %p204
      %p207 = scmp.ne.s32.totalorder %s192, %s206
      %p208 = scmp.eq.s32.totalorder %s35, 0
      %p209 = por %p207, %p208
      %s211 = sadd.s32 %s210, 1
      %p214 = scmp.eq.s32.totalorder %s29, 1
      %p215 = scmp.ne.s32.totalorder %s210, %s212
      %p216 = scmp.eq.s32.totalorder %s29, 0
      %p217 = por %p215, %p216
      %p218 = scmp.ne.s32.totalorder %s210, %s212
      %p219 = scmp.eq.s32.totalorder %s34, 1
      %p220 = por %p218, %p219
      %p221 = scmp.ne.s32.totalorder %s212, %s213
      %p222 = scmp.eq.s32.totalorder %s34, 0
      %p223 = por %p221, %p222
      %p224 = scmp.ne.s32.totalorder %s212, %s213
      %p225 = scmp.eq.s32.totalorder %s35, 1
      %p226 = por %p224, %p225
      %p228 = scmp.ne.s32.totalorder %s213, %s227
      %p229 = scmp.eq.s32.totalorder %s35, 0
      %p230 = por %p228, %p229
      %s232 = sadd.s32 %s231, 1
      %p235 = scmp.eq.s32.totalorder %s29, 1
      %p236 = scmp.ne.s32.totalorder %s231, %s233
      %p237 = scmp.eq.s32.totalorder %s29, 0
      %p238 = por %p236, %p237
      %p239 = scmp.ne.s32.totalorder %s231, %s233
      %p240 = scmp.eq.s32.totalorder %s34, 1
      %p241 = por %p239, %p240
      %p242 = scmp.ne.s32.totalorder %s233, %s234
      %p243 = scmp.eq.s32.totalorder %s34, 0
      %p244 = por %p242, %p243
      %p245 = scmp.ne.s32.totalorder %s233, %s234
      %p246 = scmp.eq.s32.totalorder %s35, 1
      %p247 = por %p245, %p246
      %p249 = scmp.ne.s32.totalorder %s234, %s248
      %p250 = scmp.eq.s32.totalorder %s35, 0
      %p251 = por %p249, %p250
      %s253 = sadd.s32 %s252, 1
      %p256 = scmp.eq.s32.totalorder %s29, 1
      %p257 = scmp.ne.s32.totalorder %s252, %s254
      %p258 = scmp.eq.s32.totalorder %s29, 0
      %p259 = por %p257, %p258
      %p260 = scmp.ne.s32.totalorder %s252, %s254
      %p261 = scmp.eq.s32.totalorder %s34, 1
      %p262 = por %p260, %p261
      %p263 = scmp.ne.s32.totalorder %s254, %s255
      %p264 = scmp.eq.s32.totalorder %s34, 0
      %p265 = por %p263, %p264
      %p266 = scmp.ne.s32.totalorder %s254, %s255
      %p267 = scmp.eq.s32.totalorder %s35, 1
      %p268 = por %p266, %p267
      %p270 = scmp.ne.s32.totalorder %s255, %s269
      %p271 = scmp.eq.s32.totalorder %s35, 0
      %p272 = por %p270, %p271
      %s274 = sadd.s32 %s273, 1
      %p277 = scmp.eq.s32.totalorder %s29, 1
      %p278 = scmp.ne.s32.totalorder %s273, %s275
      %p279 = scmp.eq.s32.totalorder %s29, 0
      %p280 = por %p278, %p279
      %p281 = scmp.ne.s32.totalorder %s273, %s275
      %p282 = scmp.eq.s32.totalorder %s34, 1
      %p283 = por %p281, %p282
      %p284 = scmp.ne.s32.totalorder %s275, %s276
      %p285 = scmp.eq.s32.totalorder %s34, 0
      %p286 = por %p284, %p285
      %p287 = scmp.ne.s32.totalorder %s275, %s276
      %p288 = scmp.eq.s32.totalorder %s35, 1
      %p289 = por %p287, %p288
      %p291 = scmp.ne.s32.totalorder %s276, %s290
      %p292 = scmp.eq.s32.totalorder %s35, 0
      %p293 = por %p291, %p292
      %s295 = sadd.s32 %s294, 1
      %p298 = scmp.eq.s32.totalorder %s29, 1
      %p299 = scmp.ne.s32.totalorder %s294, %s296
      %p300 = scmp.eq.s32.totalorder %s29, 0
      %p301 = por %p299, %p300
      %p302 = scmp.ne.s32.totalorder %s294, %s296
      %p303 = scmp.eq.s32.totalorder %s34, 1
      %p304 = por %p302, %p303
      %p305 = scmp.ne.s32.totalorder %s296, %s297
      %p306 = scmp.eq.s32.totalorder %s34, 0
      %p307 = por %p305, %p306
      %p308 = scmp.ne.s32.totalorder %s296, %s297
      %p309 = scmp.eq.s32.totalorder %s35, 1
      %p310 = por %p308, %p309
      %p312 = scmp.ne.s32.totalorder %s297, %s311
      %p313 = scmp.eq.s32.totalorder %s35, 0
      %p314 = por %p312, %p313
      %s316 = sadd.s32 %s315, 1
      %p319 = scmp.eq.s32.totalorder %s29, 1
      %p320 = scmp.ne.s32.totalorder %s315, %s317
      %p321 = scmp.eq.s32.totalorder %s29, 0
      %p322 = por %p320, %p321
      %p323 = scmp.ne.s32.totalorder %s315, %s317
      %p324 = scmp.eq.s32.totalorder %s34, 1
      %p325 = por %p323, %p324
      %p326 = scmp.ne.s32.totalorder %s317, %s318
      %p327 = scmp.eq.s32.totalorder %s34, 0
      %p328 = por %p326, %p327
      %p329 = scmp.ne.s32.totalorder %s317, %s318
      %p330 = scmp.eq.s32.totalorder %s35, 1
      %p331 = por %p329, %p330
      %p333 = scmp.ne.s32.totalorder %s318, %s332
      %p334 = scmp.eq.s32.totalorder %s35, 0
      %p335 = por %p333, %p334
      %s337 = sadd.s32 %s336, 1
      %p340 = scmp.eq.s32.totalorder %s29, 1
      %p341 = scmp.ne.s32.totalorder %s336, %s338
      %p342 = scmp.eq.s32.totalorder %s29, 0
      %p343 = por %p341, %p342
      %p344 = scmp.ne.s32.totalorder %s336, %s338
      %p345 = scmp.eq.s32.totalorder %s34, 1
      %p346 = por %p344, %p345
      %p347 = scmp.ne.s32.totalorder %s338, %s339
      %p348 = scmp.eq.s32.totalorder %s34, 0
      %p349 = por %p347, %p348
      %p350 = scmp.ne.s32.totalorder %s338, %s339
      %p351 = scmp.eq.s32.totalorder %s35, 1
      %p352 = por %p350, %p351
      %p354 = scmp.ne.s32.totalorder %s339, %s353
      %p355 = scmp.eq.s32.totalorder %s35, 0
      %p356 = por %p354, %p355
      %s357 = ssub.s32 %s29, %s36
      %p358 = scmp.eq.s32.totalorder %s357, 0
      %s360 = sadd.s32 %s359, 1
      %s361 = scalar_select %p358, %s359, %s360
      %p364 = pneg %p358
      %p365 = scmp.eq.s32.totalorder %s29, 1
      %p366 = por %p364, %p365
      %p367 = scmp.ne.s32.totalorder %s359, %s362
      %p368 = scmp.eq.s32.totalorder %s29, 0
      %p369 = por %p367, %p368
      %p370 = scmp.ne.s32.totalorder %s359, %s362
      %p371 = scmp.eq.s32.totalorder %s34, 1
      %p372 = por %p370, %p371
      %p373 = scmp.ne.s32.totalorder %s362, %s363
      %p374 = scmp.eq.s32.totalorder %s34, 0
      %p375 = por %p373, %p374
      %p376 = scmp.ne.s32.totalorder %s362, %s363
      %p377 = scmp.eq.s32.totalorder %s35, 1
      %p378 = por %p376, %p377
      %p380 = scmp.ne.s32.totalorder %s363, %s379
      %p381 = scmp.eq.s32.totalorder %s35, 0
      %p382 = por %p380, %p381
      %p383 = scmp.le.s32.totalorder 1, %s29
      %p384 = scmp.lt.s32.totalorder %s29, 3
      %p385 = pnand %p383, %p384
      %p386 = pneg %p385
      // Predicated region
      $region9: #{bottleneck_forward.1} parent=5 // pred_check
        _
      $region10: #{bottleneck_forward.1} parent=5 // pred_check_branch
        %388 = sbr.rel (%p385) target = $region12
      $region11: #{bottleneck_forward.1} parent=5 // pred_region
        %s389 = ssub.s32 %s29, 1
        // Predicated region
        $region13: #{bottleneck_forward.1} parent=11 // pred_check
          %p390 = pneg %p76
        $region14: #{bottleneck_forward.1} parent=11 // pred_check_branch
          %392 = sbr.rel (%p390) target = $region16
        $region15: #{bottleneck_forward.1} parent=11 // pred_region
          _
        $region16: #{bottleneck_forward.1} parent=11 // pred_fallthru
          _
        // Predicated region
        $region17: #{bottleneck_forward.1} parent=11 // pred_check
          %p393 = pneg %p97
        $region18: #{bottleneck_forward.1} parent=11 // pred_check_branch
          %395 = sbr.rel (%p393) target = $region20
        $region19: #{bottleneck_forward.1} parent=11 // pred_region
          _
        $region20: #{bottleneck_forward.1} parent=11 // pred_fallthru
          _
        // Predicated region
        $region21: #{bottleneck_forward.1} parent=11 // pred_check
          %p396 = pneg %p118
        $region22: #{bottleneck_forward.1} parent=11 // pred_check_branch
          %398 = sbr.rel (%p396) target = $region24
        $region23: #{bottleneck_forward.1} parent=11 // pred_region
          _
        $region24: #{bottleneck_forward.1} parent=11 // pred_fallthru
          _
        // Predicated region
        $region25: #{bottleneck_forward.1} parent=11 // pred_check
          %p399 = pneg %p139
        $region26: #{bottleneck_forward.1} parent=11 // pred_check_branch
          %401 = sbr.rel (%p399) target = $region28
        $region27: #{bottleneck_forward.1} parent=11 // pred_region
          _
        $region28: #{bottleneck_forward.1} parent=11 // pred_fallthru
          _
        // Predicated region
        $region29: #{bottleneck_forward.1} parent=11 // pred_check
          %p402 = pneg %p160
        $region30: #{bottleneck_forward.1} parent=11 // pred_check_branch
          %404 = sbr.rel (%p402) target = $region32
        $region31: #{bottleneck_forward.1} parent=11 // pred_region
          _
        $region32: #{bottleneck_forward.1} parent=11 // pred_fallthru
          _
        // Predicated region
        $region33: #{bottleneck_forward.1} parent=11 // pred_check
          %p405 = pneg %p181
        $region34: #{bottleneck_forward.1} parent=11 // pred_check_branch
          %407 = sbr.rel (%p405) target = $region36
        $region35: #{bottleneck_forward.1} parent=11 // pred_region
          _
        $region36: #{bottleneck_forward.1} parent=11 // pred_fallthru
          _
        // Predicated region
        $region37: #{bottleneck_forward.1} parent=11 // pred_check
          %p408 = pneg %p202
        $region38: #{bottleneck_forward.1} parent=11 // pred_check_branch
          %410 = sbr.rel (%p408) target = $region40
        $region39: #{bottleneck_forward.1} parent=11 // pred_region
          %s412 = ssub.s32 4608, 4608
          %413 = vsyncadd [#allocation7], %s412
          %s414 = sshll.u32 [#allocation6], 4
          %s415 = int_to_ptr.vmem [resolvable:$true] %s414
          %420 = dma.hbm_to_vmem [thread:$0]  %s7, 4608, %s415, [#allocation7], 64, 64, 4
        $region40: #{bottleneck_forward.1} parent=11 // pred_fallthru
          _
        // Predicated region
        $region41: #{bottleneck_forward.1} parent=11 // pred_check
          %p421 = pneg %p223
        $region42: #{bottleneck_forward.1} parent=11 // pred_check_branch
          %423 = sbr.rel (%p421) target = $region44
        $region43: #{bottleneck_forward.1} parent=11 // pred_region
          _
        $region44: #{bottleneck_forward.1} parent=11 // pred_fallthru
          _
        // Predicated region
        $region45: #{bottleneck_forward.1} parent=11 // pred_check
          %p424 = pneg %p244
        $region46: #{bottleneck_forward.1} parent=11 // pred_check_branch
          %426 = sbr.rel (%p424) target = $region48
        $region47: #{bottleneck_forward.1} parent=11 // pred_region
          _
        $region48: #{bottleneck_forward.1} parent=11 // pred_fallthru
          _
        // Predicated region
        $region49: #{bottleneck_forward.1} parent=11 // pred_check
          %p427 = pneg %p265
        $region50: #{bottleneck_forward.1} parent=11 // pred_check_branch
          %429 = sbr.rel (%p427) target = $region52
        $region51: #{bottleneck_forward.1} parent=11 // pred_region
          _
        $region52: #{bottleneck_forward.1} parent=11 // pred_fallthru
          _
        // Predicated region
        $region53: #{bottleneck_forward.1} parent=11 // pred_check
          %p430 = pneg %p286
        $region54: #{bottleneck_forward.1} parent=11 // pred_check_branch
          %432 = sbr.rel (%p430) target = $region56
        $region55: #{bottleneck_forward.1} parent=11 // pred_region
          %s434 = ssub.s32 512, 512
          %435 = vsyncadd [#allocation7], %s434
          %s436 = sshll.u32 [#allocation8], 4
          %s437 = int_to_ptr.vmem [resolvable:$true] %s436
          %442 = dma.hbm_to_vmem [thread:$0]  %s11, 512, %s437, [#allocation7], 64, 64, 4
        $region56: #{bottleneck_forward.1} parent=11 // pred_fallthru
          _
        // Predicated region
        $region57: #{bottleneck_forward.1} parent=11 // pred_check
          %p443 = pneg %p307
        $region58: #{bottleneck_forward.1} parent=11 // pred_check_branch
          %445 = sbr.rel (%p443) target = $region60
        $region59: #{bottleneck_forward.1} parent=11 // pred_region
          _
        $region60: #{bottleneck_forward.1} parent=11 // pred_fallthru
          _
        // Predicated region
        $region61: #{bottleneck_forward.1} parent=11 // pred_check
          %p446 = pneg %p328
        $region62: #{bottleneck_forward.1} parent=11 // pred_check_branch
          %448 = sbr.rel (%p446) target = $region64
        $region63: #{bottleneck_forward.1} parent=11 // pred_region
          %s450 = ssub.s32 512, 512
          %451 = vsyncadd [#allocation10], %s450
          %s452 = sshll.u32 [#allocation9], 4
          %s453 = int_to_ptr.vmem [resolvable:$true] %s452
          %458 = dma.hbm_to_vmem [thread:$0]  %s13, 512, %s453, [#allocation10], 64, 64, 4
        $region64: #{bottleneck_forward.1} parent=11 // pred_fallthru
          _
        // Predicated region
        $region65: #{bottleneck_forward.1} parent=11 // pred_check
          %p459 = pneg %p349
        $region66: #{bottleneck_forward.1} parent=11 // pred_check_branch
          %461 = sbr.rel (%p459) target = $region68
        $region67: #{bottleneck_forward.1} parent=11 // pred_region
          %s463 = ssub.s32 16, 16
          %464 = vsyncadd [#allocation10], %s463
          %s466 = sshll.u32 [#allocation11], 4
          %s467 = int_to_ptr.vmem [resolvable:$true] %s466
          %469 = dma.hbm_to_vmem [thread:$0]  %s14, 16, %s467, [#allocation10]
        $region68: #{bottleneck_forward.1} parent=11 // pred_fallthru
          _
      $region12: #{bottleneck_forward.1} parent=5 // pred_fallthru
        _
      %p470 = scmp.lt.s32.totalorder %s29, 2
      // Predicated region
      $region69: #{bottleneck_forward.1} parent=5 // pred_check
        %p471 = pneg %p470
      $region70: #{bottleneck_forward.1} parent=5 // pred_check_branch
        %473 = sbr.rel (%p471) target = $region72
      $region71: #{bottleneck_forward.1} parent=5 // pred_region
        // Predicated region
        $region73: #{bottleneck_forward.1} parent=71 // pred_check
          %p474 = pneg %p49
        $region74: #{bottleneck_forward.1} parent=71 // pred_check_branch
          %476 = sbr.rel (%p474) target = $region76
        $region75: #{bottleneck_forward.1} parent=71 // pred_region
          %s477 = sand.u32 %s39, 1
          %s478 = scalar_lea.sflag [#allocation4], %s477
          %s479 = sand.u32 %s39, 1
          %s480 = smul.addr %s479, 256
          %s481 = scalar_lea.vmem [#allocation3], %s480
          %s483 = ssub.s32 4096, 4096
          %484 = vsyncadd %s478, %s483
          %s485 = smul.addr %s29, 32
          %s486 = smul.addr %s485, 128
          %s487 = scalar_lea.hbm %s0, %s486
          %s488 = sshll.u32 %s481, 4
          %s489 = int_to_ptr.vmem [resolvable:$true] %s488
          %494 = dma.hbm_to_vmem [thread:$0]  %s487, 4096, %s489, %s478, 128, 128, 8
        $region76: #{bottleneck_forward.1} parent=71 // pred_fallthru
          _
      $region72: #{bottleneck_forward.1} parent=5 // pred_fallthru
        _
      %p495 = scmp.le.s32.totalorder 1, %s29
      %p496 = scmp.lt.s32.totalorder %s29, 3
      %p497 = pnand %p495, %p496
      %p498 = pneg %p497
      // Predicated region
      $region77: #{bottleneck_forward.1} parent=5 // pred_check
        _
      $region78: #{bottleneck_forward.1} parent=5 // pred_check_branch
        %500 = sbr.rel (%p497) target = $region80
      $region79: #{bottleneck_forward.1} parent=5 // pred_region
        %s501 = ssub.s32 %s29, 1
        %s502 = sand.u32 %s42, 1
        %s503 = scalar_lea.sflag [#allocation4], %s502
        %s504 = sand.u32 %s42, 1
        %s505 = smul.addr %s504, 256
        %s506 = scalar_lea.vmem [#allocation3], %s505
        // Predicated region
        $region81: #{bottleneck_forward.1} parent=79 // pred_check
          %p507 = pneg %p55
        $region82: #{bottleneck_forward.1} parent=79 // pred_check_branch
          %509 = sbr.rel (%p507) target = $region84
        $region83: #{bottleneck_forward.1} parent=79 // pred_region
          %510 = dma.done %s503, 4096
        $region84: #{bottleneck_forward.1} parent=79 // pred_fallthru
          _
        // Predicated region
        $region85: #{bottleneck_forward.1} parent=79 // pred_check
          %p511 = pneg %p202
        $region86: #{bottleneck_forward.1} parent=79 // pred_check_branch
          %513 = sbr.rel (%p511) target = $region88
        $region87: #{bottleneck_forward.1} parent=79 // pred_region
          %514 = dma.done [#allocation7], 4608
        $region88: #{bottleneck_forward.1} parent=79 // pred_fallthru
          _
        // Predicated region
        $region89: #{bottleneck_forward.1} parent=79 // pred_check
          %p515 = pneg %p286
        $region90: #{bottleneck_forward.1} parent=79 // pred_check_branch
          %517 = sbr.rel (%p515) target = $region92
        $region91: #{bottleneck_forward.1} parent=79 // pred_region
          %518 = dma.done [#allocation7], 512
        $region92: #{bottleneck_forward.1} parent=79 // pred_fallthru
          _
        // Predicated region
        $region93: #{bottleneck_forward.1} parent=79 // pred_check
          %p519 = pneg %p328
        $region94: #{bottleneck_forward.1} parent=79 // pred_check_branch
          %521 = sbr.rel (%p519) target = $region96
        $region95: #{bottleneck_forward.1} parent=79 // pred_region
          %522 = dma.done [#allocation10], 512
        $region96: #{bottleneck_forward.1} parent=79 // pred_fallthru
          _
        // Predicated region
        $region97: #{bottleneck_forward.1} parent=79 // pred_check
          %p523 = pneg %p349
        $region98: #{bottleneck_forward.1} parent=79 // pred_check_branch
          %525 = sbr.rel (%p523) target = $region100
        $region99: #{bottleneck_forward.1} parent=79 // pred_region
          %526 = dma.done [#allocation10], 16
        $region100: #{bottleneck_forward.1} parent=79 // pred_fallthru
          _
        %s527 = sand.u32 %s42, 1
        %s528 = scalar_lea.sflag [#allocation4], %s527
        %s529 = sand.u32 %s42, 1
        %s530 = smul.addr %s529, 256
        %s531 = scalar_lea.vmem [#allocation3], %s530
        %p532 = pneg %p55
        %p533 = pneg %p52
        %p534 = pneg %p76
        %p535 = pneg %p73
        %p536 = pneg %p97
        %p537 = pneg %p94
        %p538 = pneg %p118
        %p539 = pneg %p115
        %p540 = pneg %p139
        %p541 = pneg %p136
        %p542 = pneg %p160
        %p543 = pneg %p157
        %p544 = pneg %p181
        %p545 = pneg %p178
        %p546 = pneg %p202
        %p547 = pneg %p199
        %p548 = pneg %p223
        %p549 = pneg %p220
        %p550 = pneg %p244
        %p551 = pneg %p241
        %p552 = pneg %p265
        %p553 = pneg %p262
        %p554 = pneg %p286
        %p555 = pneg %p283
        %p556 = pneg %p307
        %p557 = pneg %p304
        %p558 = pneg %p328
        %p559 = pneg %p325
        %p560 = pneg %p349
        %p561 = pneg %p346
        %p562 = pneg %p375
        %p563 = pneg %p372
        %s564 = sand.u32 %s362, 1
        %s565 = scalar_lea.sflag [#allocation5], %s564
        %s566 = sand.u32 %s362, 1
        %s567 = smul.addr %s566, 256
        %s568 = scalar_lea.vmem [#allocation12], %s567
        %v570 = vld [vmem:[%s506] sm:$0xff]
        %v571 = vld [vmem:[%s506 + $0x8] sm:$0xff]
        %v572 = vld [vmem:[%s506 + $0x10] sm:$0xff]
        %v573 = vld [vmem:[%s506 + $0x18] sm:$0xff]
        %v574 = vld [vmem:[%s506 + $0x20] sm:$0xff]
        %v575 = vld [vmem:[%s506 + $0x28] sm:$0xff]
        %v576 = vld [vmem:[%s506 + $0x30] sm:$0xff]
        %v577 = vld [vmem:[%s506 + $0x38] sm:$0xff]
        %v578 = vld [vmem:[%s506 + $0x40] sm:$0xff]
        %v579 = vld [vmem:[%s506 + $0x48] sm:$0xff]
        %v580 = vld [vmem:[%s506 + $0x50] sm:$0xff]
        %v581 = vld [vmem:[%s506 + $0x58] sm:$0xff]
        %v582 = vld [vmem:[%s506 + $0x60] sm:$0xff]
        %v583 = vld [vmem:[%s506 + $0x68] sm:$0xff]
        %v584 = vld [vmem:[%s506 + $0x70] sm:$0xff]
        %v585 = vld [vmem:[%s506 + $0x78] sm:$0xff]
        %v586 = vld [vmem:[%s506 + $0x80] sm:$0xff]
        %v587 = vld [vmem:[%s506 + $0x88] sm:$0xff]
        %v588 = vld [vmem:[%s506 + $0x90] sm:$0xff]
        %v589 = vld [vmem:[%s506 + $0x98] sm:$0xff]
        %v590 = vld [vmem:[%s506 + $0xa0] sm:$0xff]
        %v591 = vld [vmem:[%s506 + $0xa8] sm:$0xff]
        %v592 = vld [vmem:[%s506 + $0xb0] sm:$0xff]
        %v593 = vld [vmem:[%s506 + $0xb8] sm:$0xff]
        %v594 = vld [vmem:[%s506 + $0xc0] sm:$0xff]
        %v595 = vld [vmem:[%s506 + $0xc8] sm:$0xff]
        %v596 = vld [vmem:[%s506 + $0xd0] sm:$0xff]
        %v597 = vld [vmem:[%s506 + $0xd8] sm:$0xff]
        %v598 = vld [vmem:[%s506 + $0xe0] sm:$0xff]
        %v599 = vld [vmem:[%s506 + $0xe8] sm:$0xff]
        %v600 = vld [vmem:[%s506 + $0xf0] sm:$0xff]
        %v601 = vld [vmem:[%s506 + $0xf8] sm:$0xff]
        %v602 = vld [vmem:[%s1] sm:$0x1]
        %v604 = vlaneseq
        %v605 = vshrl.u32 %v604, 7
        %v606 = vsub.s32 0, %v605
        %v607 = vrot.slane %v602, %v606
        %v609 = vmul.f32 %v570, %v607
        %v610 = vmul.f32 %v571, %v607
        %v611 = vmul.f32 %v572, %v607
        %v612 = vmul.f32 %v573, %v607
        %v613 = vmul.f32 %v574, %v607
        %v614 = vmul.f32 %v575, %v607
        %v615 = vmul.f32 %v576, %v607
        %v616 = vmul.f32 %v577, %v607
        %v617 = vmul.f32 %v578, %v607
        %v618 = vmul.f32 %v579, %v607
        %v619 = vmul.f32 %v580, %v607
        %v620 = vmul.f32 %v581, %v607
        %v621 = vmul.f32 %v582, %v607
        %v622 = vmul.f32 %v583, %v607
        %v623 = vmul.f32 %v584, %v607
        %v624 = vmul.f32 %v585, %v607
        %v625 = vmul.f32 %v586, %v607
        %v626 = vmul.f32 %v587, %v607
        %v627 = vmul.f32 %v588, %v607
        %v628 = vmul.f32 %v589, %v607
        %v629 = vmul.f32 %v590, %v607
        %v630 = vmul.f32 %v591, %v607
        %v631 = vmul.f32 %v592, %v607
        %v632 = vmul.f32 %v593, %v607
        %v633 = vmul.f32 %v594, %v607
        %v634 = vmul.f32 %v595, %v607
        %v635 = vmul.f32 %v596, %v607
        %v636 = vmul.f32 %v597, %v607
        %v637 = vmul.f32 %v598, %v607
        %v638 = vmul.f32 %v599, %v607
        %v639 = vmul.f32 %v600, %v607
        %v640 = vmul.f32 %v601, %v607
        %v641 = vld [vmem:[%s2] sm:$0x1]
        %v643 = vlaneseq
        %v644 = vshrl.u32 %v643, 7
        %v645 = vsub.s32 0, %v644
        %v646 = vrot.slane %v641, %v645
        %v648 = vadd.f32 %v609, %v646
        %v649 = vadd.f32 %v610, %v646
        %v650 = vadd.f32 %v611, %v646
        %v651 = vadd.f32 %v612, %v646
        %v652 = vadd.f32 %v613, %v646
        %v653 = vadd.f32 %v614, %v646
        %v654 = vadd.f32 %v615, %v646
        %v655 = vadd.f32 %v616, %v646
        %v656 = vadd.f32 %v617, %v646
        %v657 = vadd.f32 %v618, %v646
        %v658 = vadd.f32 %v619, %v646
        %v659 = vadd.f32 %v620, %v646
        %v660 = vadd.f32 %v621, %v646
        %v661 = vadd.f32 %v622, %v646
        %v662 = vadd.f32 %v623, %v646
        %v663 = vadd.f32 %v624, %v646
        %v664 = vadd.f32 %v625, %v646
        %v665 = vadd.f32 %v626, %v646
        %v666 = vadd.f32 %v627, %v646
        %v667 = vadd.f32 %v628, %v646
        %v668 = vadd.f32 %v629, %v646
        %v669 = vadd.f32 %v630, %v646
        %v670 = vadd.f32 %v631, %v646
        %v671 = vadd.f32 %v632, %v646
        %v672 = vadd.f32 %v633, %v646
        %v673 = vadd.f32 %v634, %v646
        %v674 = vadd.f32 %v635, %v646
        %v675 = vadd.f32 %v636, %v646
        %v676 = vadd.f32 %v637, %v646
        %v677 = vadd.f32 %v638, %v646
        %v678 = vadd.f32 %v639, %v646
        %v679 = vadd.f32 %v640, %v646
        %v680 = vmax.f32 %v648, 0.0
        %v681 = vmax.f32 %v649, 0.0
        %v682 = vmax.f32 %v650, 0.0
        %v683 = vmax.f32 %v651, 0.0
        %v684 = vmax.f32 %v652, 0.0
        %v685 = vmax.f32 %v653, 0.0
        %v686 = vmax.f32 %v654, 0.0
        %v687 = vmax.f32 %v655, 0.0
        %v688 = vmax.f32 %v656, 0.0
        %v689 = vmax.f32 %v657, 0.0
        %v690 = vmax.f32 %v658, 0.0
        %v691 = vmax.f32 %v659, 0.0
        %v692 = vmax.f32 %v660, 0.0
        %v693 = vmax.f32 %v661, 0.0
        %v694 = vmax.f32 %v662, 0.0
        %v695 = vmax.f32 %v663, 0.0
        %v696 = vmax.f32 %v664, 0.0
        %v697 = vmax.f32 %v665, 0.0
        %v698 = vmax.f32 %v666, 0.0
        %v699 = vmax.f32 %v667, 0.0
        %v700 = vmax.f32 %v668, 0.0
        %v701 = vmax.f32 %v669, 0.0
        %v702 = vmax.f32 %v670, 0.0
        %v703 = vmax.f32 %v671, 0.0
        %v704 = vmax.f32 %v672, 0.0
        %v705 = vmax.f32 %v673, 0.0
        %v706 = vmax.f32 %v674, 0.0
        %v707 = vmax.f32 %v675, 0.0
        %v708 = vmax.f32 %v676, 0.0
        %v709 = vmax.f32 %v677, 0.0
        %v710 = vmax.f32 %v678, 0.0
        %v711 = vmax.f32 %v679, 0.0
        %v712 = vpack.c.bf16 %v681, %v680
        %v713 = vpack.c.bf16 %v683, %v682
        %v714 = vpack.c.bf16 %v685, %v684
        %v715 = vpack.c.bf16 %v687, %v686
        %v716 = vpack.c.bf16 %v689, %v688
        %v717 = vpack.c.bf16 %v691, %v690
        %v718 = vpack.c.bf16 %v693, %v692
        %v719 = vpack.c.bf16 %v695, %v694
        %v720 = vpack.c.bf16 %v697, %v696
        %v721 = vpack.c.bf16 %v699, %v698
        %v722 = vpack.c.bf16 %v701, %v700
        %v723 = vpack.c.bf16 %v703, %v702
        %v724 = vpack.c.bf16 %v705, %v704
        %v725 = vpack.c.bf16 %v707, %v706
        %v726 = vpack.c.bf16 %v709, %v708
        %v727 = vpack.c.bf16 %v711, %v710
        %v728 = vld [vmem:[%s3] sm:$0xf]
        %v729 = vld [vmem:[%s3 + $0x4] sm:$0xf]
        %v730 = vld [vmem:[%s3 + $0x8] sm:$0xf]
        %v731 = vld [vmem:[%s3 + $0xc] sm:$0xf]
        %v732 = vld [vmem:[%s3 + $0x10] sm:$0xf]
        %v733 = vld [vmem:[%s3 + $0x14] sm:$0xf]
        %v734 = vld [vmem:[%s3 + $0x18] sm:$0xf]
        %v735 = vld [vmem:[%s3 + $0x1c] sm:$0xf]
        %v736 = vld [vmem:[%s4] sm:$0x1]
        %v738 = vlaneseq
        %v739 = vshrl.u32 %v738, 7
        %v740 = vsub.s32 0, %v739
        %v741 = vrot.slane %v736, %v740
        %v751 = vunpack.c.l.b16 %v728
        %v752 = vunpack.c.l.b16 %v729
        %v753 = vunpack.c.l.b16 %v730
        %v754 = vunpack.c.l.b16 %v731
        %v755 = vunpack.c.l.b16 %v732
        %v756 = vunpack.c.l.b16 %v733
        %v757 = vunpack.c.l.b16 %v734
        %v758 = vunpack.c.l.b16 %v735
        %v759 = vpack.c.b16 %v752, %v751
        %v760 = vpack.c.b16 %v754, %v753
        %v761 = vpack.c.b16 %v756, %v755
        %v762 = vpack.c.b16 %v758, %v757
        %vm767 = vcmask 523264
        %v769 = vsel %vm767, %v712, 0
        %v772 = vsel %vm767, %v713, 0
        %v775 = vsel %vm767, %v714, 0
        %v778 = vsel %vm767, %v715, 0
        %v781 = vsel %vm767, %v716, 0
        %v784 = vsel %vm767, %v717, 0
        %v787 = vsel %vm767, %v718, 0
        %v790 = vsel %vm767, %v719, 0
        %v793 = vsel %vm767, %v720, 0
        %v796 = vsel %vm767, %v721, 0
        %v799 = vsel %vm767, %v722, 0
        %v802 = vsel %vm767, %v723, 0
        %v805 = vsel %vm767, %v724, 0
        %v808 = vsel %vm767, %v725, 0
        %v811 = vsel %vm767, %v726, 0
        %v814 = vsel %vm767, %v727, 0
        %816 = vmatprep.subr.bf16.mxu0 0
        %817 = vmatpush1.bf16.msra.mxu0 %v759
        %818 = vmatprep.subr.bf16.mxu0 0
        %819 = vmatpush1.bf16.msra.mxu0 %v760
        %820 = vmatprep.subr.bf16.mxu0 0
        %821 = vmatpush1.bf16.msra.mxu0 %v761
        %822 = vmatprep.subr.bf16.mxu0 0
        %823 = vmatpush1.bf16.msra.mxu0 %v762
        %824 = vmatprep.subr.bf16.mxu0 0
        %825 = vmatpush1.bf16.msra.mxu0 0
        %826 = vmatprep.subr.bf16.mxu0 0
        %827 = vmatpush1.bf16.msra.mxu0 0
        %828 = vmatprep.subr.bf16.mxu0 0
        %829 = vmatpush1.bf16.msra.mxu0 0
        %830 = vmatprep.subr.bf16.mxu0 0
        %831 = vmatpush1.bf16.msra.mxu0 0
        %832 = vmatprep.subr.bf16.mxu0 0
        %833 = vmatpush1.bf16.msra.mxu0 0
        %834 = vmatprep.subr.bf16.mxu0 0
        %835 = vmatpush1.bf16.msra.mxu0 0
        %836 = vmatprep.subr.bf16.mxu0 0
        %837 = vmatpush1.bf16.msra.mxu0 0
        %838 = vmatprep.subr.bf16.mxu0 0
        %839 = vmatpush1.bf16.msra.mxu0 0
        %840 = vmatprep.subr.bf16.mxu0 0
        %841 = vmatpush1.bf16.msra.mxu0 0
        %842 = vmatprep.subr.bf16.mxu0 0
        %843 = vmatpush1.bf16.msra.mxu0 0
        %844 = vmatprep.subr.bf16.mxu0 0
        %845 = vmatpush1.bf16.msra.mxu0 0
        %846 = vmatprep.subr.bf16.mxu0 0
        %847 = vmatpush1.bf16.msra.mxu0 0
        %848 = vmatprep.mubr.bf16.mxu0 0
        %849 = vmatmul.mubr.bf16.gmra.mrb[0].mxu0 %v769
        %v850 = vpop.f32.mrb[0].mxu0
        %v851 = vadd.f32 %v741, %v850
        %v852 = vpop.f32.mrb[0].mxu0
        %v853 = vpop.f32.mrb[0].mxu0
        %v854 = vadd.f32 %v741, %v853
        %v855 = vpop.f32.mrb[0].mxu0
        %856 = vmatprep.mubr.bf16.mxu0 0
        %857 = vmatmul.mubr.bf16.gmra.mrb[0].mxu0 %v772
        %v858 = vpop.f32.mrb[0].mxu0
        %v859 = vadd.f32 %v741, %v858
        %v860 = vpop.f32.mrb[0].mxu0
        %v861 = vpop.f32.mrb[0].mxu0
        %v862 = vadd.f32 %v741, %v861
        %v863 = vpop.f32.mrb[0].mxu0
        %864 = vmatprep.mubr.bf16.mxu0 0
        %865 = vmatmul.mubr.bf16.gmra.mrb[0].mxu0 %v775
        %v866 = vpop.f32.mrb[0].mxu0
        %v867 = vadd.f32 %v741, %v866
        %v868 = vpop.f32.mrb[0].mxu0
        %v869 = vpop.f32.mrb[0].mxu0
        %v870 = vadd.f32 %v741, %v869
        %v871 = vpop.f32.mrb[0].mxu0
        %872 = vmatprep.mubr.bf16.mxu0 0
        %873 = vmatmul.mubr.bf16.gmra.mrb[0].mxu0 %v778
        %v874 = vpop.f32.mrb[0].mxu0
        %v875 = vadd.f32 %v741, %v874
        %v876 = vpop.f32.mrb[0].mxu0
        %v877 = vpop.f32.mrb[0].mxu0
        %v878 = vadd.f32 %v741, %v877
        %v879 = vpop.f32.mrb[0].mxu0
        %880 = vmatprep.mubr.bf16.mxu0 0
        %881 = vmatmul.mubr.bf16.gmra.mrb[0].mxu0 %v781
        %v882 = vpop.f32.mrb[0].mxu0
        %v883 = vadd.f32 %v741, %v882
        %v884 = vpop.f32.mrb[0].mxu0
        %v885 = vpop.f32.mrb[0].mxu0
        %v886 = vadd.f32 %v741, %v885
        %v887 = vpop.f32.mrb[0].mxu0
        %888 = vmatprep.mubr.bf16.mxu0 0
        %889 = vmatmul.mubr.bf16.gmra.mrb[0].mxu0 %v784
        %v890 = vpop.f32.mrb[0].mxu0
        %v891 = vadd.f32 %v741, %v890
        %v892 = vpop.f32.mrb[0].mxu0
        %v893 = vpop.f32.mrb[0].mxu0
        %v894 = vadd.f32 %v741, %v893
        %v895 = vpop.f32.mrb[0].mxu0
        %896 = vmatprep.mubr.bf16.mxu0 0
        %897 = vmatmul.mubr.bf16.gmra.mrb[0].mxu0 %v787
        %v898 = vpop.f32.mrb[0].mxu0
        %v899 = vadd.f32 %v741, %v898
        %v900 = vpop.f32.mrb[0].mxu0
        %v901 = vpop.f32.mrb[0].mxu0
        %v902 = vadd.f32 %v741, %v901
        %v903 = vpop.f32.mrb[0].mxu0
        %904 = vmatprep.mubr.bf16.mxu0 0
        %905 = vmatmul.mubr.bf16.gmra.mrb[0].mxu0 %v790
        %v906 = vpop.f32.mrb[0].mxu0
        %v907 = vadd.f32 %v741, %v906
        %v908 = vpop.f32.mrb[0].mxu0
        %v909 = vpop.f32.mrb[0].mxu0
        %v910 = vadd.f32 %v741, %v909
        %v911 = vpop.f32.mrb[0].mxu0
        %912 = vmatprep.mubr.bf16.mxu0 0
        %913 = vmatmul.mubr.bf16.gmra.mrb[0].mxu0 %v793
        %v914 = vpop.f32.mrb[0].mxu0
        %v915 = vadd.f32 %v741, %v914
        %v916 = vpop.f32.mrb[0].mxu0
        %v917 = vpop.f32.mrb[0].mxu0
        %v918 = vadd.f32 %v741, %v917
        %v919 = vpop.f32.mrb[0].mxu0
        %920 = vmatprep.mubr.bf16.mxu0 0
        %921 = vmatmul.mubr.bf16.gmra.mrb[0].mxu0 %v796
        %v922 = vpop.f32.mrb[0].mxu0
        %v923 = vadd.f32 %v741, %v922
        %v924 = vpop.f32.mrb[0].mxu0
        %v925 = vpop.f32.mrb[0].mxu0
        %v926 = vadd.f32 %v741, %v925
        %v927 = vpop.f32.mrb[0].mxu0
        %928 = vmatprep.mubr.bf16.mxu0 0
        %929 = vmatmul.mubr.bf16.gmra.mrb[0].mxu0 %v799
        %v930 = vpop.f32.mrb[0].mxu0
        %v931 = vadd.f32 %v741, %v930
        %v932 = vpop.f32.mrb[0].mxu0
        %v933 = vpop.f32.mrb[0].mxu0
        %v934 = vadd.f32 %v741, %v933
        %v935 = vpop.f32.mrb[0].mxu0
        %936 = vmatprep.mubr.bf16.mxu0 0
        %937 = vmatmul.mubr.bf16.gmra.mrb[0].mxu0 %v802
        %v938 = vpop.f32.mrb[0].mxu0
        %v939 = vadd.f32 %v741, %v938
        %v940 = vpop.f32.mrb[0].mxu0
        %v941 = vpop.f32.mrb[0].mxu0
        %v942 = vadd.f32 %v741, %v941
        %v943 = vpop.f32.mrb[0].mxu0
        %944 = vmatprep.mubr.bf16.mxu0 0
        %945 = vmatmul.mubr.bf16.gmra.mrb[0].mxu0 %v805
        %v946 = vpop.f32.mrb[0].mxu0
        %v947 = vadd.f32 %v741, %v946
        %v948 = vpop.f32.mrb[0].mxu0
        %v949 = vpop.f32.mrb[0].mxu0
        %v950 = vadd.f32 %v741, %v949
        %v951 = vpop.f32.mrb[0].mxu0
        %952 = vmatprep.mubr.bf16.mxu0 0
        %953 = vmatmul.mubr.bf16.gmra.mrb[0].mxu0 %v808
        %v954 = vpop.f32.mrb[0].mxu0
        %v955 = vadd.f32 %v741, %v954
        %v956 = vpop.f32.mrb[0].mxu0
        %v957 = vpop.f32.mrb[0].mxu0
        %v958 = vadd.f32 %v741, %v957
        %v959 = vpop.f32.mrb[0].mxu0
        %960 = vmatprep.mubr.bf16.mxu0 0
        %961 = vmatmul.mubr.bf16.gmra.mrb[0].mxu0 %v811
        %v962 = vpop.f32.mrb[0].mxu0
        %v963 = vadd.f32 %v741, %v962
        %v964 = vpop.f32.mrb[0].mxu0
        %v965 = vpop.f32.mrb[0].mxu0
        %v966 = vadd.f32 %v741, %v965
        %v967 = vpop.f32.mrb[0].mxu0
        %968 = vmatprep.mubr.bf16.mxu0 0
        %969 = vmatmul.mubr.bf16.gmra.mrb[0].mxu0 %v814
        %v970 = vpop.f32.mrb[0].mxu0
        %v971 = vadd.f32 %v741, %v970
        %v972 = vpop.f32.mrb[0].mxu0
        %v973 = vpop.f32.mrb[0].mxu0
        %v974 = vadd.f32 %v741, %v973
        %v975 = vpop.f32.mrb[0].mxu0
        %976 = vdwg.mxu0
        %v977 = vld [vmem:[%s5] sm:$0x1]
        %v979 = vlaneseq
        %v980 = vshrl.u32 %v979, 7
        %v981 = vsub.s32 0, %v980
        %v982 = vrot.slane %v977, %v981
        %v984 = vmul.f32 %v851, %v982
        %v985 = vmul.f32 %v854, %v982
        %v986 = vmul.f32 %v859, %v982
        %v987 = vmul.f32 %v862, %v982
        %v988 = vmul.f32 %v867, %v982
        %v989 = vmul.f32 %v870, %v982
        %v990 = vmul.f32 %v875, %v982
        %v991 = vmul.f32 %v878, %v982
        %v992 = vmul.f32 %v883, %v982
        %v993 = vmul.f32 %v886, %v982
        %v994 = vmul.f32 %v891, %v982
        %v995 = vmul.f32 %v894, %v982
        %v996 = vmul.f32 %v899, %v982
        %v997 = vmul.f32 %v902, %v982
        %v998 = vmul.f32 %v907, %v982
        %v999 = vmul.f32 %v910, %v982
        %v1000 = vmul.f32 %v915, %v982
        %v1001 = vmul.f32 %v918, %v982
        %v1002 = vmul.f32 %v923, %v982
        %v1003 = vmul.f32 %v926, %v982
        %v1004 = vmul.f32 %v931, %v982
        %v1005 = vmul.f32 %v934, %v982
        %v1006 = vmul.f32 %v939, %v982
        %v1007 = vmul.f32 %v942, %v982
        %v1008 = vmul.f32 %v947, %v982
        %v1009 = vmul.f32 %v950, %v982
        %v1010 = vmul.f32 %v955, %v982
        %v1011 = vmul.f32 %v958, %v982
        %v1012 = vmul.f32 %v963, %v982
        %v1013 = vmul.f32 %v966, %v982
        %v1014 = vmul.f32 %v971, %v982
        %v1015 = vmul.f32 %v974, %v982
        %v1016 = vld [vmem:[%s6] sm:$0x1]
        %v1018 = vlaneseq
        %v1019 = vshrl.u32 %v1018, 7
        %v1020 = vsub.s32 0, %v1019
        %v1021 = vrot.slane %v1016, %v1020
        %v1023 = vadd.f32 %v984, %v1021
        %v1024 = vadd.f32 %v985, %v1021
        %v1025 = vadd.f32 %v986, %v1021
        %v1026 = vadd.f32 %v987, %v1021
        %v1027 = vadd.f32 %v988, %v1021
        %v1028 = vadd.f32 %v989, %v1021
        %v1029 = vadd.f32 %v990, %v1021
        %v1030 = vadd.f32 %v991, %v1021
        %v1031 = vadd.f32 %v992, %v1021
        %v1032 = vadd.f32 %v993, %v1021
        %v1033 = vadd.f32 %v994, %v1021
        %v1034 = vadd.f32 %v995, %v1021
        %v1035 = vadd.f32 %v996, %v1021
        %v1036 = vadd.f32 %v997, %v1021
        %v1037 = vadd.f32 %v998, %v1021
        %v1038 = vadd.f32 %v999, %v1021
        %v1039 = vadd.f32 %v1000, %v1021
        %v1040 = vadd.f32 %v1001, %v1021
        %v1041 = vadd.f32 %v1002, %v1021
        %v1042 = vadd.f32 %v1003, %v1021
        %v1043 = vadd.f32 %v1004, %v1021
        %v1044 = vadd.f32 %v1005, %v1021
        %v1045 = vadd.f32 %v1006, %v1021
        %v1046 = vadd.f32 %v1007, %v1021
        %v1047 = vadd.f32 %v1008, %v1021
        %v1048 = vadd.f32 %v1009, %v1021
        %v1049 = vadd.f32 %v1010, %v1021
        %v1050 = vadd.f32 %v1011, %v1021
        %v1051 = vadd.f32 %v1012, %v1021
        %v1052 = vadd.f32 %v1013, %v1021
        %v1053 = vadd.f32 %v1014, %v1021
        %v1054 = vadd.f32 %v1015, %v1021
        %v1055 = vmax.f32 %v1023, 0.0
        %v1056 = vmax.f32 %v1024, 0.0
        %v1057 = vmax.f32 %v1025, 0.0
        %v1058 = vmax.f32 %v1026, 0.0
        %v1059 = vmax.f32 %v1027, 0.0
        %v1060 = vmax.f32 %v1028, 0.0
        %v1061 = vmax.f32 %v1029, 0.0
        %v1062 = vmax.f32 %v1030, 0.0
        %v1063 = vmax.f32 %v1031, 0.0
        %v1064 = vmax.f32 %v1032, 0.0
        %v1065 = vmax.f32 %v1033, 0.0
        %v1066 = vmax.f32 %v1034, 0.0
        %v1067 = vmax.f32 %v1035, 0.0
        %v1068 = vmax.f32 %v1036, 0.0
        %v1069 = vmax.f32 %v1037, 0.0
        %v1070 = vmax.f32 %v1038, 0.0
        %v1071 = vmax.f32 %v1039, 0.0
        %v1072 = vmax.f32 %v1040, 0.0
        %v1073 = vmax.f32 %v1041, 0.0
        %v1074 = vmax.f32 %v1042, 0.0
        %v1075 = vmax.f32 %v1043, 0.0
        %v1076 = vmax.f32 %v1044, 0.0
        %v1077 = vmax.f32 %v1045, 0.0
        %v1078 = vmax.f32 %v1046, 0.0
        %v1079 = vmax.f32 %v1047, 0.0
        %v1080 = vmax.f32 %v1048, 0.0
        %v1081 = vmax.f32 %v1049, 0.0
        %v1082 = vmax.f32 %v1050, 0.0
        %v1083 = vmax.f32 %v1051, 0.0
        %v1084 = vmax.f32 %v1052, 0.0
        %v1085 = vmax.f32 %v1053, 0.0
        %v1086 = vmax.f32 %v1054, 0.0
        %1087 = vst.msk [vmem:[#allocation2] sm:$0xff] %vm767, 0.0
        %1088 = vst.msk [vmem:[#allocation2 + $0x8] sm:$0xff] %vm767, 0.0
        %1089 = vst.msk [vmem:[#allocation2 + $0x10] sm:$0xff] %vm767, 0.0
        %1090 = vst.msk [vmem:[#allocation2 + $0x18] sm:$0xff] %vm767, 0.0
        %1091 = vst.msk [vmem:[#allocation2 + $0x20] sm:$0xff] %vm767, 0.0
        %1092 = vst.msk [vmem:[#allocation2 + $0x28] sm:$0xff] %vm767, 0.0
        %1093 = vst.msk [vmem:[#allocation2 + $0x30] sm:$0xff] %vm767, 0.0
        %1094 = vst.msk [vmem:[#allocation2 + $0x38] sm:$0xff] %vm767, 0.0
        %1095 = vst.msk [vmem:[#allocation2 + $0x40] sm:$0xff] %vm767, 0.0
        %1096 = vst.msk [vmem:[#allocation2 + $0x48] sm:$0xff] %vm767, 0.0
        %1097 = vst.msk [vmem:[#allocation2 + $0x50] sm:$0xff] %vm767, 0.0
        %1098 = vst.msk [vmem:[#allocation2 + $0x58] sm:$0xff] %vm767, 0.0
        %1099 = vst.msk [vmem:[#allocation2 + $0x60] sm:$0xff] %vm767, 0.0
        %1100 = vst.msk [vmem:[#allocation2 + $0x68] sm:$0xff] %vm767, 0.0
        %1101 = vst.msk [vmem:[#allocation2 + $0x70] sm:$0xff] %vm767, 0.0
        %1102 = vst.msk [vmem:[#allocation2 + $0x78] sm:$0xff] %vm767, 0.0
        %1103 = vst.msk [vmem:[#allocation2 + $0x80] sm:$0xff] %vm767, 0.0
        %1104 = vst.msk [vmem:[#allocation2 + $0x88] sm:$0xff] %vm767, 0.0
        %1105 = vst.msk [vmem:[#allocation2 + $0x90] sm:$0xff] %vm767, 0.0
        %1106 = vst.msk [vmem:[#allocation2 + $0x98] sm:$0xff] %vm767, 0.0
        %1107 = vst.msk [vmem:[#allocation2 + $0xa0] sm:$0xff] %vm767, 0.0
        %1108 = vst.msk [vmem:[#allocation2 + $0xa8] sm:$0xff] %vm767, 0.0
        %1109 = vst.msk [vmem:[#allocation2 + $0xb0] sm:$0xff] %vm767, 0.0
        %1110 = vst.msk [vmem:[#allocation2 + $0xb8] sm:$0xff] %vm767, 0.0
        %1111 = vst.msk [vmem:[#allocation2 + $0xc0] sm:$0xff] %vm767, 0.0
        %1112 = vst.msk [vmem:[#allocation2 + $0xc8] sm:$0xff] %vm767, 0.0
        %1113 = vst.msk [vmem:[#allocation2 + $0xd0] sm:$0xff] %vm767, 0.0
        %1114 = vst.msk [vmem:[#allocation2 + $0xd8] sm:$0xff] %vm767, 0.0
        %1115 = vst.msk [vmem:[#allocation2 + $0xe0] sm:$0xff] %vm767, 0.0
        %1116 = vst.msk [vmem:[#allocation2 + $0xe8] sm:$0xff] %vm767, 0.0
        %1117 = vst.msk [vmem:[#allocation2 + $0xf0] sm:$0xff] %vm767, 0.0
        %1118 = vst.msk [vmem:[#allocation2 + $0xf8] sm:$0xff] %vm767, 0.0
        %1119 = vst.msk [vmem:[#allocation2 + $0x100] sm:$0xff] %vm767, 0.0
        %1120 = vst.msk [vmem:[#allocation2 + $0x108] sm:$0xff] %vm767, 0.0
        %1121 = vst.msk [vmem:[#allocation2 + $0x110] sm:$0xff] %vm767, 0.0
        %1122 = vst.msk [vmem:[#allocation2 + $0x118] sm:$0xff] %vm767, 0.0
        %1123 = vst.msk [vmem:[#allocation2 + $0x120] sm:$0xff] %vm767, 0.0
        %1124 = vst.msk [vmem:[#allocation2 + $0x128] sm:$0xff] %vm767, 0.0
        %1125 = vst.msk [vmem:[#allocation2 + $0x130] sm:$0xff] %vm767, 0.0
        %1126 = vst.msk [vmem:[#allocation2 + $0x138] sm:$0xff] %vm767, 0.0
        %1127 = vst.msk [vmem:[#allocation2 + $0x140] sm:$0xff] %vm767, 0.0
        %1128 = vst.msk [vmem:[#allocation2 + $0x148] sm:$0xff] %vm767, 0.0
        %1129 = vst.msk [vmem:[#allocation2 + $0x150] sm:$0xff] %vm767, 0.0
        %1130 = vst.msk [vmem:[#allocation2 + $0x158] sm:$0xff] %vm767, 0.0
        %1131 = vst.msk [vmem:[#allocation2 + $0x160] sm:$0xff] %vm767, 0.0
        %1132 = vst.msk [vmem:[#allocation2 + $0x168] sm:$0xff] %vm767, 0.0
        %1133 = vst.msk [vmem:[#allocation2 + $0x170] sm:$0xff] %vm767, 0.0
        %1134 = vst.msk [vmem:[#allocation2 + $0x178] sm:$0xff] %vm767, 0.0
        %1135 = vst.msk [vmem:[#allocation2 + $0x180] sm:$0xff] %vm767, 0.0
        %1136 = vst.msk [vmem:[#allocation2 + $0x188] sm:$0xff] %vm767, 0.0
        %1137 = vst.msk [vmem:[#allocation2 + $0x190] sm:$0xff] %vm767, 0.0
        %1138 = vst.msk [vmem:[#allocation2 + $0x198] sm:$0xff] %vm767, 0.0
        %1139 = vst.msk [vmem:[#allocation2 + $0x1a0] sm:$0xff] %vm767, 0.0
        %1140 = vst.msk [vmem:[#allocation2 + $0x1a8] sm:$0xff] %vm767, 0.0
        %1141 = vst.msk [vmem:[#allocation2 + $0x1b0] sm:$0xff] %vm767, 0.0
        %1142 = vst.msk [vmem:[#allocation2 + $0x1b8] sm:$0xff] %vm767, 0.0
        %1143 = vst.msk [vmem:[#allocation2 + $0x1c0] sm:$0xff] %vm767, 0.0
        %1144 = vst.msk [vmem:[#allocation2 + $0x1c8] sm:$0xff] %vm767, 0.0
        %1145 = vst.msk [vmem:[#allocation2 + $0x1d0] sm:$0xff] %vm767, 0.0
        %1146 = vst.msk [vmem:[#allocation2 + $0x1d8] sm:$0xff] %vm767, 0.0
        %1147 = vst.msk [vmem:[#allocation2 + $0x1e0] sm:$0xff] %vm767, 0.0
        %1148 = vst.msk [vmem:[#allocation2 + $0x1e8] sm:$0xff] %vm767, 0.0
        %1149 = vst.msk [vmem:[#allocation2 + $0x1f0] sm:$0xff] %vm767, 0.0
        %1150 = vst.msk [vmem:[#allocation2 + $0x1f8] sm:$0xff] %vm767, 0.0
        %1151 = vst.msk [vmem:[#allocation2 + $0x200] sm:$0xff] %vm767, 0.0
        %1152 = vst.msk [vmem:[#allocation2 + $0x208] sm:$0xff] %vm767, 0.0
        %1153 = vst.msk [vmem:[#allocation2 + $0x210] sm:$0xff] %vm767, 0.0
        %1154 = vst.msk [vmem:[#allocation2 + $0x218] sm:$0xff] %vm767, 0.0
        %1155 = vst.msk [vmem:[#allocation2 + $0x220] sm:$0xff] %vm767, 0.0
        %1156 = vst.msk [vmem:[#allocation2 + $0x228] sm:$0xff] %vm767, 0.0
        %1157 = vst.msk [vmem:[#allocation2 + $0x230] sm:$0xff] %vm767, 0.0
        %1158 = vst.msk [vmem:[#allocation2 + $0x238] sm:$0xff] %vm767, 0.0
        %s1159 = scalar_lea.vmem [#allocation2], 32
        %1160 = vst.msk [vmem:[%s1159 + $0x8] sm:$0xff] %vm767, %v1055
        %1161 = vst.msk [vmem:[%s1159 + $0x10] sm:$0xff] %vm767, %v1056
        %1162 = vst.msk [vmem:[%s1159 + $0x28] sm:$0xff] %vm767, %v1057
        %1163 = vst.msk [vmem:[%s1159 + $0x30] sm:$0xff] %vm767, %v1058
        %1164 = vst.msk [vmem:[%s1159 + $0x48] sm:$0xff] %vm767, %v1059
        %1165 = vst.msk [vmem:[%s1159 + $0x50] sm:$0xff] %vm767, %v1060
        %1166 = vst.msk [vmem:[%s1159 + $0x68] sm:$0xff] %vm767, %v1061
        %1167 = vst.msk [vmem:[%s1159 + $0x70] sm:$0xff] %vm767, %v1062
        %1168 = vst.msk [vmem:[%s1159 + $0x88] sm:$0xff] %vm767, %v1063
        %1169 = vst.msk [vmem:[%s1159 + $0x90] sm:$0xff] %vm767, %v1064
        %1170 = vst.msk [vmem:[%s1159 + $0xa8] sm:$0xff] %vm767, %v1065
        %1171 = vst.msk [vmem:[%s1159 + $0xb0] sm:$0xff] %vm767, %v1066
        %1172 = vst.msk [vmem:[%s1159 + $0xc8] sm:$0xff] %vm767, %v1067
        %1173 = vst.msk [vmem:[%s1159 + $0xd0] sm:$0xff] %vm767, %v1068
        %1174 = vst.msk [vmem:[%s1159 + $0xe8] sm:$0xff] %vm767, %v1069
        %1175 = vst.msk [vmem:[%s1159 + $0xf0] sm:$0xff] %vm767, %v1070
        %1176 = vst.msk [vmem:[%s1159 + $0x108] sm:$0xff] %vm767, %v1071
        %1177 = vst.msk [vmem:[%s1159 + $0x110] sm:$0xff] %vm767, %v1072
        %1178 = vst.msk [vmem:[%s1159 + $0x128] sm:$0xff] %vm767, %v1073
        %1179 = vst.msk [vmem:[%s1159 + $0x130] sm:$0xff] %vm767, %v1074
        %1180 = vst.msk [vmem:[%s1159 + $0x148] sm:$0xff] %vm767, %v1075
        %1181 = vst.msk [vmem:[%s1159 + $0x150] sm:$0xff] %vm767, %v1076
        %1182 = vst.msk [vmem:[%s1159 + $0x168] sm:$0xff] %vm767, %v1077
        %1183 = vst.msk [vmem:[%s1159 + $0x170] sm:$0xff] %vm767, %v1078
        %1184 = vst.msk [vmem:[%s1159 + $0x188] sm:$0xff] %vm767, %v1079
        %1185 = vst.msk [vmem:[%s1159 + $0x190] sm:$0xff] %vm767, %v1080
        %1186 = vst.msk [vmem:[%s1159 + $0x1a8] sm:$0xff] %vm767, %v1081
        %1187 = vst.msk [vmem:[%s1159 + $0x1b0] sm:$0xff] %vm767, %v1082
        %1188 = vst.msk [vmem:[%s1159 + $0x1c8] sm:$0xff] %vm767, %v1083
        %1189 = vst.msk [vmem:[%s1159 + $0x1d0] sm:$0xff] %vm767, %v1084
        %1190 = vst.msk [vmem:[%s1159 + $0x1e8] sm:$0xff] %vm767, %v1085
        %1191 = vst.msk [vmem:[%s1159 + $0x1f0] sm:$0xff] %vm767, %v1086
        %v1192 = vld [vmem:[#allocation2 + $0x7] sm:$0xff]
        %v1193 = vld [vmem:[#allocation2 + $0xf] sm:$0xff]
        %v1194 = vld [vmem:[#allocation2 + $0x27] sm:$0xff]
        %v1195 = vld [vmem:[#allocation2 + $0x2f] sm:$0xff]
        %v1196 = vld [vmem:[#allocation2 + $0x47] sm:$0xff]
        %v1197 = vld [vmem:[#allocation2 + $0x4f] sm:$0xff]
        %v1198 = vld [vmem:[#allocation2 + $0x67] sm:$0xff]
        %v1199 = vld [vmem:[#allocation2 + $0x6f] sm:$0xff]
        %v1200 = vld [vmem:[#allocation2 + $0x87] sm:$0xff]
        %v1201 = vld [vmem:[#allocation2 + $0x8f] sm:$0xff]
        %v1202 = vld [vmem:[#allocation2 + $0xa7] sm:$0xff]
        %v1203 = vld [vmem:[#allocation2 + $0xaf] sm:$0xff]
        %v1204 = vld [vmem:[#allocation2 + $0xc7] sm:$0xff]
        %v1205 = vld [vmem:[#allocation2 + $0xcf] sm:$0xff]
        %v1206 = vld [vmem:[#allocation2 + $0xe7] sm:$0xff]
        %v1207 = vld [vmem:[#allocation2 + $0xef] sm:$0xff]
        %v1208 = vld [vmem:[#allocation2 + $0x107] sm:$0xff]
        %v1209 = vld [vmem:[#allocation2 + $0x10f] sm:$0xff]
        %v1210 = vld [vmem:[#allocation2 + $0x127] sm:$0xff]
        %v1211 = vld [vmem:[#allocation2 + $0x12f] sm:$0xff]
        %v1212 = vld [vmem:[#allocation2 + $0x147] sm:$0xff]
        %v1213 = vld [vmem:[#allocation2 + $0x14f] sm:$0xff]
        %v1214 = vld [vmem:[#allocation2 + $0x167] sm:$0xff]
        %v1215 = vld [vmem:[#allocation2 + $0x16f] sm:$0xff]
        %v1216 = vld [vmem:[#allocation2 + $0x187] sm:$0xff]
        %v1217 = vld [vmem:[#allocation2 + $0x18f] sm:$0xff]
        %v1218 = vld [vmem:[#allocation2 + $0x1a7] sm:$0xff]
        %v1219 = vld [vmem:[#allocation2 + $0x1af] sm:$0xff]
        %v1220 = vld [vmem:[#allocation2 + $0x1c7] sm:$0xff]
        %v1221 = vld [vmem:[#allocation2 + $0x1cf] sm:$0xff]
        %v1222 = vld [vmem:[#allocation2 + $0x1e7] sm:$0xff]
        %v1223 = vld [vmem:[#allocation2 + $0x1ef] sm:$0xff]
        %v1224 = vld [vmem:[#allocation2 + $0x207] sm:$0xff]
        %v1225 = vld [vmem:[#allocation2 + $0x20f] sm:$0xff]
        %v1226 = vld [vmem:[#allocation2 + $0x227] sm:$0xff]
        %v1227 = vld [vmem:[#allocation2 + $0x22f] sm:$0xff]
        %v1228 = vpack.c.bf16 %v1193, %v1192
        %v1229 = vpack.c.bf16 %v1195, %v1194
        %v1230 = vpack.c.bf16 %v1197, %v1196
        %v1231 = vpack.c.bf16 %v1199, %v1198
        %v1232 = vpack.c.bf16 %v1201, %v1200
        %v1233 = vpack.c.bf16 %v1203, %v1202
        %v1234 = vpack.c.bf16 %v1205, %v1204
        %v1235 = vpack.c.bf16 %v1207, %v1206
        %v1236 = vpack.c.bf16 %v1209, %v1208
        %v1237 = vpack.c.bf16 %v1211, %v1210
        %v1238 = vpack.c.bf16 %v1213, %v1212
        %v1239 = vpack.c.bf16 %v1215, %v1214
        %v1240 = vpack.c.bf16 %v1217, %v1216
        %v1241 = vpack.c.bf16 %v1219, %v1218
        %v1242 = vpack.c.bf16 %v1221, %v1220
        %v1243 = vpack.c.bf16 %v1223, %v1222
        %v1244 = vpack.c.bf16 %v1225, %v1224
        %v1245 = vpack.c.bf16 %v1227, %v1226
        %v1246 = vld [vmem:[#allocation6] sm:$0xf]
        %v1247 = vld [vmem:[#allocation6 + $0x4] sm:$0xf]
        %v1248 = vld [vmem:[#allocation6 + $0x8] sm:$0xf]
        %v1249 = vld [vmem:[#allocation6 + $0xc] sm:$0xf]
        %v1250 = vld [vmem:[#allocation6 + $0x10] sm:$0xf]
        %v1251 = vld [vmem:[#allocation6 + $0x14] sm:$0xf]
        %v1252 = vld [vmem:[#allocation6 + $0x18] sm:$0xf]
        %v1253 = vld [vmem:[#allocation6 + $0x1c] sm:$0xf]
        %s1254 = scalar_lea.vmem [#allocation6], 96
        %v1255 = vld [vmem:[%s1254] sm:$0xf]
        %v1256 = vld [vmem:[%s1254 + $0x4] sm:$0xf]
        %v1257 = vld [vmem:[%s1254 + $0x8] sm:$0xf]
        %v1258 = vld [vmem:[%s1254 + $0xc] sm:$0xf]
        %v1259 = vld [vmem:[%s1254 + $0x10] sm:$0xf]
        %v1260 = vld [vmem:[%s1254 + $0x14] sm:$0xf]
        %v1261 = vld [vmem:[%s1254 + $0x18] sm:$0xf]
        %v1262 = vld [vmem:[%s1254 + $0x1c] sm:$0xf]
        %v1271 = vunpack.c.l.b16 %v1255
        %v1272 = vunpack.c.l.b16 %v1256
        %v1273 = vunpack.c.l.b16 %v1257
        %v1274 = vunpack.c.l.b16 %v1258
        %v1275 = vunpack.c.l.b16 %v1259
        %v1276 = vunpack.c.l.b16 %v1260
        %v1277 = vunpack.c.l.b16 %v1261
        %v1278 = vunpack.c.l.b16 %v1262
        %v1279 = vpack.c.b16 %v1272, %v1271
        %v1280 = vpack.c.b16 %v1274, %v1273
        %v1281 = vpack.c.b16 %v1276, %v1275
        %v1282 = vpack.c.b16 %v1278, %v1277
        %v1288 = vsel %vm767, %v1229, 0
        %v1291 = vsel %vm767, %v1230, 0
        %v1294 = vsel %vm767, %v1231, 0
        %v1297 = vsel %vm767, %v1232, 0
        %v1300 = vsel %vm767, %v1233, 0
        %v1303 = vsel %vm767, %v1234, 0
        %v1306 = vsel %vm767, %v1235, 0
        %v1309 = vsel %vm767, %v1236, 0
        %v1312 = vsel %vm767, %v1237, 0
        %v1315 = vsel %vm767, %v1238, 0
        %v1318 = vsel %vm767, %v1239, 0
        %v1321 = vsel %vm767, %v1240, 0
        %v1324 = vsel %vm767, %v1241, 0
        %v1327 = vsel %vm767, %v1242, 0
        %v1330 = vsel %vm767, %v1243, 0
        %v1333 = vsel %vm767, %v1244, 0
        %1335 = vmatprep.subr.bf16.mxu0 0
        %1336 = vmatpush1.bf16.msra.mxu0 %v1279
        %1337 = vmatprep.subr.bf16.mxu0 0
        %1338 = vmatpush1.bf16.msra.mxu0 %v1280
        %1339 = vmatprep.subr.bf16.mxu0 0
        %1340 = vmatpush1.bf16.msra.mxu0 %v1281
        %1341 = vmatprep.subr.bf16.mxu0 0
        %1342 = vmatpush1.bf16.msra.mxu0 %v1282
        %1343 = vmatprep.subr.bf16.mxu0 0
        %1344 = vmatpush1.bf16.msra.mxu0 0
        %1345 = vmatprep.subr.bf16.mxu0 0
        %1346 = vmatpush1.bf16.msra.mxu0 0
        %1347 = vmatprep.subr.bf16.mxu0 0
        %1348 = vmatpush1.bf16.msra.mxu0 0
        %1349 = vmatprep.subr.bf16.mxu0 0
        %1350 = vmatpush1.bf16.msra.mxu0 0
        %1351 = vmatprep.subr.bf16.mxu0 0
        %1352 = vmatpush1.bf16.msra.mxu0 0
        %1353 = vmatprep.subr.bf16.mxu0 0
        %1354 = vmatpush1.bf16.msra.mxu0 0
        %1355 = vmatprep.subr.bf16.mxu0 0
        %1356 = vmatpush1.bf16.msra.mxu0 0
        %1357 = vmatprep.subr.bf16.mxu0 0
        %1358 = vmatpush1.bf16.msra.mxu0 0
        %1359 = vmatprep.subr.bf16.mxu0 0
        %1360 = vmatpush1.bf16.msra.mxu0 0
        %1361 = vmatprep.subr.bf16.mxu0 0
        %1362 = vmatpush1.bf16.msra.mxu0 0
        %1363 = vmatprep.subr.bf16.mxu0 0
        %1364 = vmatpush1.bf16.msra.mxu0 0
        %1365 = vmatprep.subr.bf16.mxu0 0
        %1366 = vmatpush1.bf16.msra.mxu0 0
        %1367 = vmatprep.mubr.bf16.mxu0 0
        %1368 = vmatmul.mubr.bf16.gmra.mrb[0].mxu0 %v1288
        %v1369 = vpop.f32.mrb[0].mxu0
        %v1370 = vadd.f32 0.0, %v1369
        %v1371 = vpop.f32.mrb[0].mxu0
        %v1372 = vpop.f32.mrb[0].mxu0
        %v1373 = vadd.f32 0.0, %v1372
        %v1374 = vpop.f32.mrb[0].mxu0
        %1375 = vmatprep.mubr.bf16.mxu0 0
        %1376 = vmatmul.mubr.bf16.gmra.mrb[0].mxu0 %v1291
        %v1377 = vpop.f32.mrb[0].mxu0
        %v1378 = vadd.f32 0.0, %v1377
        %v1379 = vpop.f32.mrb[0].mxu0
        %v1380 = vpop.f32.mrb[0].mxu0
        %v1381 = vadd.f32 0.0, %v1380
        %v1382 = vpop.f32.mrb[0].mxu0
        %1383 = vmatprep.mubr.bf16.mxu0 0
        %1384 = vmatmul.mubr.bf16.gmra.mrb[0].mxu0 %v1294
        %v1385 = vpop.f32.mrb[0].mxu0
        %v1386 = vadd.f32 0.0, %v1385
        %v1387 = vpop.f32.mrb[0].mxu0
        %v1388 = vpop.f32.mrb[0].mxu0
        %v1389 = vadd.f32 0.0, %v1388
        %v1390 = vpop.f32.mrb[0].mxu0
        %1391 = vmatprep.mubr.bf16.mxu0 0
        %1392 = vmatmul.mubr.bf16.gmra.mrb[0].mxu0 %v1297
        %v1393 = vpop.f32.mrb[0].mxu0
        %v1394 = vadd.f32 0.0, %v1393
        %v1395 = vpop.f32.mrb[0].mxu0
        %v1396 = vpop.f32.mrb[0].mxu0
        %v1397 = vadd.f32 0.0, %v1396
        %v1398 = vpop.f32.mrb[0].mxu0
        %1399 = vmatprep.mubr.bf16.mxu0 0
        %1400 = vmatmul.mubr.bf16.gmra.mrb[0].mxu0 %v1300
        %v1401 = vpop.f32.mrb[0].mxu0
        %v1402 = vadd.f32 0.0, %v1401
        %v1403 = vpop.f32.mrb[0].mxu0
        %v1404 = vpop.f32.mrb[0].mxu0
        %v1405 = vadd.f32 0.0, %v1404
        %v1406 = vpop.f32.mrb[0].mxu0
        %1407 = vmatprep.mubr.bf16.mxu0 0
        %1408 = vmatmul.mubr.bf16.gmra.mrb[0].mxu0 %v1303
        %v1409 = vpop.f32.mrb[0].mxu0
        %v1410 = vadd.f32 0.0, %v1409
        %v1411 = vpop.f32.mrb[0].mxu0
        %v1412 = vpop.f32.mrb[0].mxu0
        %v1413 = vadd.f32 0.0, %v1412
        %v1414 = vpop.f32.mrb[0].mxu0
        %1415 = vmatprep.mubr.bf16.mxu0 0
        %1416 = vmatmul.mubr.bf16.gmra.mrb[0].mxu0 %v1306
        %v1417 = vpop.f32.mrb[0].mxu0
        %v1418 = vadd.f32 0.0, %v1417
        %v1419 = vpop.f32.mrb[0].mxu0
        %v1420 = vpop.f32.mrb[0].mxu0
        %v1421 = vadd.f32 0.0, %v1420
        %v1422 = vpop.f32.mrb[0].mxu0
        %1423 = vmatprep.mubr.bf16.mxu0 0
        %1424 = vmatmul.mubr.bf16.gmra.mrb[0].mxu0 %v1309
        %v1425 = vpop.f32.mrb[0].mxu0
        %v1426 = vadd.f32 0.0, %v1425
        %v1427 = vpop.f32.mrb[0].mxu0
        %v1428 = vpop.f32.mrb[0].mxu0
        %v1429 = vadd.f32 0.0, %v1428
        %v1430 = vpop.f32.mrb[0].mxu0
        %1431 = vmatprep.mubr.bf16.mxu0 0
        %1432 = vmatmul.mubr.bf16.gmra.mrb[0].mxu0 %v1312
        %v1433 = vpop.f32.mrb[0].mxu0
        %v1434 = vadd.f32 0.0, %v1433
        %v1435 = vpop.f32.mrb[0].mxu0
        %v1436 = vpop.f32.mrb[0].mxu0
        %v1437 = vadd.f32 0.0, %v1436
        %v1438 = vpop.f32.mrb[0].mxu0
        %1439 = vmatprep.mubr.bf16.mxu0 0
        %1440 = vmatmul.mubr.bf16.gmra.mrb[0].mxu0 %v1315
        %v1441 = vpop.f32.mrb[0].mxu0
        %v1442 = vadd.f32 0.0, %v1441
        %v1443 = vpop.f32.mrb[0].mxu0
        %v1444 = vpop.f32.mrb[0].mxu0
        %v1445 = vadd.f32 0.0, %v1444
        %v1446 = vpop.f32.mrb[0].mxu0
        %1447 = vmatprep.mubr.bf16.mxu0 0
        %1448 = vmatmul.mubr.bf16.gmra.mrb[0].mxu0 %v1318
        %v1449 = vpop.f32.mrb[0].mxu0
        %v1450 = vadd.f32 0.0, %v1449
        %v1451 = vpop.f32.mrb[0].mxu0
        %v1452 = vpop.f32.mrb[0].mxu0
        %v1453 = vadd.f32 0.0, %v1452
        %v1454 = vpop.f32.mrb[0].mxu0
        %1455 = vmatprep.mubr.bf16.mxu0 0
        %1456 = vmatmul.mubr.bf16.gmra.mrb[0].mxu0 %v1321
        %v1457 = vpop.f32.mrb[0].mxu0
        %v1458 = vadd.f32 0.0, %v1457
        %v1459 = vpop.f32.mrb[0].mxu0
        %v1460 = vpop.f32.mrb[0].mxu0
        %v1461 = vadd.f32 0.0, %v1460
        %v1462 = vpop.f32.mrb[0].mxu0
        %1463 = vmatprep.mubr.bf16.mxu0 0
        %1464 = vmatmul.mubr.bf16.gmra.mrb[0].mxu0 %v1324
        %v1465 = vpop.f32.mrb[0].mxu0
        %v1466 = vadd.f32 0.0, %v1465
        %v1467 = vpop.f32.mrb[0].mxu0
        %v1468 = vpop.f32.mrb[0].mxu0
        %v1469 = vadd.f32 0.0, %v1468
        %v1470 = vpop.f32.mrb[0].mxu0
        %1471 = vmatprep.mubr.bf16.mxu0 0
        %1472 = vmatmul.mubr.bf16.gmra.mrb[0].mxu0 %v1327
        %v1473 = vpop.f32.mrb[0].mxu0
        %v1474 = vadd.f32 0.0, %v1473
        %v1475 = vpop.f32.mrb[0].mxu0
        %v1476 = vpop.f32.mrb[0].mxu0
        %v1477 = vadd.f32 0.0, %v1476
        %v1478 = vpop.f32.mrb[0].mxu0
        %1479 = vmatprep.mubr.bf16.mxu0 0
        %1480 = vmatmul.mubr.bf16.gmra.mrb[0].mxu0 %v1330
        %v1481 = vpop.f32.mrb[0].mxu0
        %v1482 = vadd.f32 0.0, %v1481
        %v1483 = vpop.f32.mrb[0].mxu0
        %v1484 = vpop.f32.mrb[0].mxu0
        %v1485 = vadd.f32 0.0, %v1484
        %v1486 = vpop.f32.mrb[0].mxu0
        %1487 = vmatprep.mubr.bf16.mxu0 0
        %1488 = vmatmul.mubr.bf16.gmra.mrb[0].mxu0 %v1333
        %v1489 = vpop.f32.mrb[0].mxu0
        %v1490 = vadd.f32 0.0, %v1489
        %v1491 = vpop.f32.mrb[0].mxu0
        %v1492 = vpop.f32.mrb[0].mxu0
        %v1493 = vadd.f32 0.0, %v1492
        %v1494 = vpop.f32.mrb[0].mxu0
        %1495 = vdwg.mxu0
        %v1504 = vunpack.c.l.b16 %v1246
        %v1505 = vunpack.c.l.b16 %v1247
        %v1506 = vunpack.c.l.b16 %v1248
        %v1507 = vunpack.c.l.b16 %v1249
        %v1508 = vunpack.c.l.b16 %v1250
        %v1509 = vunpack.c.l.b16 %v1251
        %v1510 = vunpack.c.l.b16 %v1252
        %v1511 = vunpack.c.l.b16 %v1253
        %v1512 = vpack.c.b16 %v1505, %v1504
        %v1513 = vpack.c.b16 %v1507, %v1506
        %v1514 = vpack.c.b16 %v1509, %v1508
        %v1515 = vpack.c.b16 %v1511, %v1510
        %v1521 = vsel %vm767, %v1228, 0
        %1523 = vmatprep.subr.bf16.mxu0 0
        %1524 = vmatpush1.bf16.msra.mxu0 %v1512
        %1525 = vmatprep.subr.bf16.mxu0 0
        %1526 = vmatpush1.bf16.msra.mxu0 %v1513
        %1527 = vmatprep.subr.bf16.mxu0 0
        %1528 = vmatpush1.bf16.msra.mxu0 %v1514
        %1529 = vmatprep.subr.bf16.mxu0 0
        %1530 = vmatpush1.bf16.msra.mxu0 %v1515
        %1531 = vmatprep.subr.bf16.mxu0 0
        %1532 = vmatpush1.bf16.msra.mxu0 0
        %1533 = vmatprep.subr.bf16.mxu0 0
        %1534 = vmatpush1.bf16.msra.mxu0 0
        %1535 = vmatprep.subr.bf16.mxu0 0
        %1536 = vmatpush1.bf16.msra.mxu0 0
        %1537 = vmatprep.subr.bf16.mxu0 0
        %1538 = vmatpush1.bf16.msra.mxu0 0
        %1539 = vmatprep.subr.bf16.mxu0 0
        %1540 = vmatpush1.bf16.msra.mxu0 0
        %1541 = vmatprep.subr.bf16.mxu0 0
        %1542 = vmatpush1.bf16.msra.mxu0 0
        %1543 = vmatprep.subr.bf16.mxu0 0
        %1544 = vmatpush1.bf16.msra.mxu0 0
        %1545 = vmatprep.subr.bf16.mxu0 0
        %1546 = vmatpush1.bf16.msra.mxu0 0
        %1547 = vmatprep.subr.bf16.mxu0 0
        %1548 = vmatpush1.bf16.msra.mxu0 0
        %1549 = vmatprep.subr.bf16.mxu0 0
        %1550 = vmatpush1.bf16.msra.mxu0 0
        %1551 = vmatprep.subr.bf16.mxu0 0
        %1552 = vmatpush1.bf16.msra.mxu0 0
        %1553 = vmatprep.subr.bf16.mxu0 0
        %1554 = vmatpush1.bf16.msra.mxu0 0
        %1555 = vmatprep.mubr.bf16.mxu0 0
        %1556 = vmatmul.mubr.bf16.gmra.mrb[0].mxu0 %v1521
        %v1557 = vpop.f32.mrb[0].mxu0
        %v1558 = vadd.f32 %v1370, %v1557
        %v1559 = vpop.f32.mrb[0].mxu0
        %v1560 = vpop.f32.mrb[0].mxu0
        %v1561 = vadd.f32 %v1373, %v1560
        %v1562 = vpop.f32.mrb[0].mxu0
        %1563 = vmatprep.mubr.bf16.mxu0 0
        %1564 = vmatmul.mubr.bf16.gmra.mrb[0].mxu0 %v1288
        %v1565 = vpop.f32.mrb[0].mxu0
        %v1566 = vadd.f32 %v1378, %v1565
        %v1567 = vpop.f32.mrb[0].mxu0
        %v1568 = vpop.f32.mrb[0].mxu0
        %v1569 = vadd.f32 %v1381, %v1568
        %v1570 = vpop.f32.mrb[0].mxu0
        %1571 = vmatprep.mubr.bf16.mxu0 0
        %1572 = vmatmul.mubr.bf16.gmra.mrb[0].mxu0 %v1291
        %v1573 = vpop.f32.mrb[0].mxu0
        %v1574 = vadd.f32 %v1386, %v1573
        %v1575 = vpop.f32.mrb[0].mxu0
        %v1576 = vpop.f32.mrb[0].mxu0
        %v1577 = vadd.f32 %v1389, %v1576
        %v1578 = vpop.f32.mrb[0].mxu0
        %1579 = vmatprep.mubr.bf16.mxu0 0
        %1580 = vmatmul.mubr.bf16.gmra.mrb[0].mxu0 %v1294
        %v1581 = vpop.f32.mrb[0].mxu0
        %v1582 = vadd.f32 %v1394, %v1581
        %v1583 = vpop.f32.mrb[0].mxu0
        %v1584 = vpop.f32.mrb[0].mxu0
        %v1585 = vadd.f32 %v1397, %v1584
        %v1586 = vpop.f32.mrb[0].mxu0
        %1587 = vmatprep.mubr.bf16.mxu0 0
        %1588 = vmatmul.mubr.bf16.gmra.mrb[0].mxu0 %v1297
        %v1589 = vpop.f32.mrb[0].mxu0
        %v1590 = vadd.f32 %v1402, %v1589
        %v1591 = vpop.f32.mrb[0].mxu0
        %v1592 = vpop.f32.mrb[0].mxu0
        %v1593 = vadd.f32 %v1405, %v1592
        %v1594 = vpop.f32.mrb[0].mxu0
        %1595 = vmatprep.mubr.bf16.mxu0 0
        %1596 = vmatmul.mubr.bf16.gmra.mrb[0].mxu0 %v1300
        %v1597 = vpop.f32.mrb[0].mxu0
        %v1598 = vadd.f32 %v1410, %v1597
        %v1599 = vpop.f32.mrb[0].mxu0
        %v1600 = vpop.f32.mrb[0].mxu0
        %v1601 = vadd.f32 %v1413, %v1600
        %v1602 = vpop.f32.mrb[0].mxu0
        %1603 = vmatprep.mubr.bf16.mxu0 0
        %1604 = vmatmul.mubr.bf16.gmra.mrb[0].mxu0 %v1303
        %v1605 = vpop.f32.mrb[0].mxu0
        %v1606 = vadd.f32 %v1418, %v1605
        %v1607 = vpop.f32.mrb[0].mxu0
        %v1608 = vpop.f32.mrb[0].mxu0
        %v1609 = vadd.f32 %v1421, %v1608
        %v1610 = vpop.f32.mrb[0].mxu0
        %1611 = vmatprep.mubr.bf16.mxu0 0
        %1612 = vmatmul.mubr.bf16.gmra.mrb[0].mxu0 %v1306
        %v1613 = vpop.f32.mrb[0].mxu0
        %v1614 = vadd.f32 %v1426, %v1613
        %v1615 = vpop.f32.mrb[0].mxu0
        %v1616 = vpop.f32.mrb[0].mxu0
        %v1617 = vadd.f32 %v1429, %v1616
        %v1618 = vpop.f32.mrb[0].mxu0
        %1619 = vmatprep.mubr.bf16.mxu0 0
        %1620 = vmatmul.mubr.bf16.gmra.mrb[0].mxu0 %v1309
        %v1621 = vpop.f32.mrb[0].mxu0
        %v1622 = vadd.f32 %v1434, %v1621
        %v1623 = vpop.f32.mrb[0].mxu0
        %v1624 = vpop.f32.mrb[0].mxu0
        %v1625 = vadd.f32 %v1437, %v1624
        %v1626 = vpop.f32.mrb[0].mxu0
        %1627 = vmatprep.mubr.bf16.mxu0 0
        %1628 = vmatmul.mubr.bf16.gmra.mrb[0].mxu0 %v1312
        %v1629 = vpop.f32.mrb[0].mxu0
        %v1630 = vadd.f32 %v1442, %v1629
        %v1631 = vpop.f32.mrb[0].mxu0
        %v1632 = vpop.f32.mrb[0].mxu0
        %v1633 = vadd.f32 %v1445, %v1632
        %v1634 = vpop.f32.mrb[0].mxu0
        %1635 = vmatprep.mubr.bf16.mxu0 0
        %1636 = vmatmul.mubr.bf16.gmra.mrb[0].mxu0 %v1315
        %v1637 = vpop.f32.mrb[0].mxu0
        %v1638 = vadd.f32 %v1450, %v1637
        %v1639 = vpop.f32.mrb[0].mxu0
        %v1640 = vpop.f32.mrb[0].mxu0
        %v1641 = vadd.f32 %v1453, %v1640
        %v1642 = vpop.f32.mrb[0].mxu0
        %1643 = vmatprep.mubr.bf16.mxu0 0
        %1644 = vmatmul.mubr.bf16.gmra.mrb[0].mxu0 %v1318
        %v1645 = vpop.f32.mrb[0].mxu0
        %v1646 = vadd.f32 %v1458, %v1645
        %v1647 = vpop.f32.mrb[0].mxu0
        %v1648 = vpop.f32.mrb[0].mxu0
        %v1649 = vadd.f32 %v1461, %v1648
        %v1650 = vpop.f32.mrb[0].mxu0
        %1651 = vmatprep.mubr.bf16.mxu0 0
        %1652 = vmatmul.mubr.bf16.gmra.mrb[0].mxu0 %v1321
        %v1653 = vpop.f32.mrb[0].mxu0
        %v1654 = vadd.f32 %v1466, %v1653
        %v1655 = vpop.f32.mrb[0].mxu0
        %v1656 = vpop.f32.mrb[0].mxu0
        %v1657 = vadd.f32 %v1469, %v1656
        %v1658 = vpop.f32.mrb[0].mxu0
        %1659 = vmatprep.mubr.bf16.mxu0 0
        %1660 = vmatmul.mubr.bf16.gmra.mrb[0].mxu0 %v1324
        %v1661 = vpop.f32.mrb[0].mxu0
        %v1662 = vadd.f32 %v1474, %v1661
        %v1663 = vpop.f32.mrb[0].mxu0
        %v1664 = vpop.f32.mrb[0].mxu0
        %v1665 = vadd.f32 %v1477, %v1664
        %v1666 = vpop.f32.mrb[0].mxu0
        %1667 = vmatprep.mubr.bf16.mxu0 0
        %1668 = vmatmul.mubr.bf16.gmra.mrb[0].mxu0 %v1327
        %v1669 = vpop.f32.mrb[0].mxu0
        %v1670 = vadd.f32 %v1482, %v1669
        %v1671 = vpop.f32.mrb[0].mxu0
        %v1672 = vpop.f32.mrb[0].mxu0
        %v1673 = vadd.f32 %v1485, %v1672
        %v1674 = vpop.f32.mrb[0].mxu0
        %1675 = vmatprep.mubr.bf16.mxu0 0
        %1676 = vmatmul.mubr.bf16.gmra.mrb[0].mxu0 %v1330
        %v1677 = vpop.f32.mrb[0].mxu0
        %v1678 = vadd.f32 %v1490, %v1677
        %v1679 = vpop.f32.mrb[0].mxu0
        %v1680 = vpop.f32.mrb[0].mxu0
        %v1681 = vadd.f32 %v1493, %v1680
        %v1682 = vpop.f32.mrb[0].mxu0
        %1683 = vdwg.mxu0
        %s1684 = scalar_lea.vmem [#allocation6], 192
        %v1685 = vld [vmem:[%s1684] sm:$0xf]
        %v1686 = vld [vmem:[%s1684 + $0x4] sm:$0xf]
        %v1687 = vld [vmem:[%s1684 + $0x8] sm:$0xf]
        %v1688 = vld [vmem:[%s1684 + $0xc] sm:$0xf]
        %v1689 = vld [vmem:[%s1684 + $0x10] sm:$0xf]
        %v1690 = vld [vmem:[%s1684 + $0x14] sm:$0xf]
        %v1691 = vld [vmem:[%s1684 + $0x18] sm:$0xf]
        %v1692 = vld [vmem:[%s1684 + $0x1c] sm:$0xf]
        %v1701 = vunpack.c.l.b16 %v1685
        %v1702 = vunpack.c.l.b16 %v1686
        %v1703 = vunpack.c.l.b16 %v1687
        %v1704 = vunpack.c.l.b16 %v1688
        %v1705 = vunpack.c.l.b16 %v1689
        %v1706 = vunpack.c.l.b16 %v1690
        %v1707 = vunpack.c.l.b16 %v1691
        %v1708 = vunpack.c.l.b16 %v1692
        %v1709 = vpack.c.b16 %v1702, %v1701
        %v1710 = vpack.c.b16 %v1704, %v1703
        %v1711 = vpack.c.b16 %v1706, %v1705
        %v1712 = vpack.c.b16 %v1708, %v1707
        %v1718 = vsel %vm767, %v1245, 0
        %1720 = vmatprep.subr.bf16.mxu0 0
        %1721 = vmatpush1.bf16.msra.mxu0 %v1709
        %1722 = vmatprep.subr.bf16.mxu0 0
        %1723 = vmatpush1.bf16.msra.mxu0 %v1710
        %1724 = vmatprep.subr.bf16.mxu0 0
        %1725 = vmatpush1.bf16.msra.mxu0 %v1711
        %1726 = vmatprep.subr.bf16.mxu0 0
        %1727 = vmatpush1.bf16.msra.mxu0 %v1712
        %1728 = vmatprep.subr.bf16.mxu0 0
        %1729 = vmatpush1.bf16.msra.mxu0 0
        %1730 = vmatprep.subr.bf16.mxu0 0
        %1731 = vmatpush1.bf16.msra.mxu0 0
        %1732 = vmatprep.subr.bf16.mxu0 0
        %1733 = vmatpush1.bf16.msra.mxu0 0
        %1734 = vmatprep.subr.bf16.mxu0 0
        %1735 = vmatpush1.bf16.msra.mxu0 0
        %1736 = vmatprep.subr.bf16.mxu0 0
        %1737 = vmatpush1.bf16.msra.mxu0 0
        %1738 = vmatprep.subr.bf16.mxu0 0
        %1739 = vmatpush1.bf16.msra.mxu0 0
        %1740 = vmatprep.subr.bf16.mxu0 0
        %1741 = vmatpush1.bf16.msra.mxu0 0
        %1742 = vmatprep.subr.bf16.mxu0 0
        %1743 = vmatpush1.bf16.msra.mxu0 0
        %1744 = vmatprep.subr.bf16.mxu0 0
        %1745 = vmatpush1.bf16.msra.mxu0 0
        %1746 = vmatprep.subr.bf16.mxu0 0
        %1747 = vmatpush1.bf16.msra.mxu0 0
        %1748 = vmatprep.subr.bf16.mxu0 0
        %1749 = vmatpush1.bf16.msra.mxu0 0
        %1750 = vmatprep.subr.bf16.mxu0 0
        %1751 = vmatpush1.bf16.msra.mxu0 0
        %1752 = vmatprep.mubr.bf16.mxu0 0
        %1753 = vmatmul.mubr.bf16.gmra.mrb[0].mxu0 %v1291
        %v1754 = vpop.f32.mrb[0].mxu0
        %v1755 = vadd.f32 0.0, %v1754
        %v1756 = vpop.f32.mrb[0].mxu0
        %v1757 = vpop.f32.mrb[0].mxu0
        %v1758 = vadd.f32 0.0, %v1757
        %v1759 = vpop.f32.mrb[0].mxu0
        %1760 = vmatprep.mubr.bf16.mxu0 0
        %1761 = vmatmul.mubr.bf16.gmra.mrb[0].mxu0 %v1294
        %v1762 = vpop.f32.mrb[0].mxu0
        %v1763 = vadd.f32 0.0, %v1762
        %v1764 = vpop.f32.mrb[0].mxu0
        %v1765 = vpop.f32.mrb[0].mxu0
        %v1766 = vadd.f32 0.0, %v1765
        %v1767 = vpop.f32.mrb[0].mxu0
        %1768 = vmatprep.mubr.bf16.mxu0 0
        %1769 = vmatmul.mubr.bf16.gmra.mrb[0].mxu0 %v1297
        %v1770 = vpop.f32.mrb[0].mxu0
        %v1771 = vadd.f32 0.0, %v1770
        %v1772 = vpop.f32.mrb[0].mxu0
        %v1773 = vpop.f32.mrb[0].mxu0
        %v1774 = vadd.f32 0.0, %v1773
        %v1775 = vpop.f32.mrb[0].mxu0
        %1776 = vmatprep.mubr.bf16.mxu0 0
        %1777 = vmatmul.mubr.bf16.gmra.mrb[0].mxu0 %v1300
        %v1778 = vpop.f32.mrb[0].mxu0
        %v1779 = vadd.f32 0.0, %v1778
        %v1780 = vpop.f32.mrb[0].mxu0
        %v1781 = vpop.f32.mrb[0].mxu0
        %v1782 = vadd.f32 0.0, %v1781
        %v1783 = vpop.f32.mrb[0].mxu0
        %1784 = vmatprep.mubr.bf16.mxu0 0
        %1785 = vmatmul.mubr.bf16.gmra.mrb[0].mxu0 %v1303
        %v1786 = vpop.f32.mrb[0].mxu0
        %v1787 = vadd.f32 0.0, %v1786
        %v1788 = vpop.f32.mrb[0].mxu0
        %v1789 = vpop.f32.mrb[0].mxu0
        %v1790 = vadd.f32 0.0, %v1789
        %v1791 = vpop.f32.mrb[0].mxu0
        %1792 = vmatprep.mubr.bf16.mxu0 0
        %1793 = vmatmul.mubr.bf16.gmra.mrb[0].mxu0 %v1306
        %v1794 = vpop.f32.mrb[0].mxu0
        %v1795 = vadd.f32 0.0, %v1794
        %v1796 = vpop.f32.mrb[0].mxu0
        %v1797 = vpop.f32.mrb[0].mxu0
        %v1798 = vadd.f32 0.0, %v1797
        %v1799 = vpop.f32.mrb[0].mxu0
        %1800 = vmatprep.mubr.bf16.mxu0 0
        %1801 = vmatmul.mubr.bf16.gmra.mrb[0].mxu0 %v1309
        %v1802 = vpop.f32.mrb[0].mxu0
        %v1803 = vadd.f32 0.0, %v1802
        %v1804 = vpop.f32.mrb[0].mxu0
        %v1805 = vpop.f32.mrb[0].mxu0
        %v1806 = vadd.f32 0.0, %v1805
        %v1807 = vpop.f32.mrb[0].mxu0
        %1808 = vmatprep.mubr.bf16.mxu0 0
        %1809 = vmatmul.mubr.bf16.gmra.mrb[0].mxu0 %v1312
        %v1810 = vpop.f32.mrb[0].mxu0
        %v1811 = vadd.f32 0.0, %v1810
        %v1812 = vpop.f32.mrb[0].mxu0
        %v1813 = vpop.f32.mrb[0].mxu0
        %v1814 = vadd.f32 0.0, %v1813
        %v1815 = vpop.f32.mrb[0].mxu0
        %1816 = vmatprep.mubr.bf16.mxu0 0
        %1817 = vmatmul.mubr.bf16.gmra.mrb[0].mxu0 %v1315
        %v1818 = vpop.f32.mrb[0].mxu0
        %v1819 = vadd.f32 0.0, %v1818
        %v1820 = vpop.f32.mrb[0].mxu0
        %v1821 = vpop.f32.mrb[0].mxu0
        %v1822 = vadd.f32 0.0, %v1821
        %v1823 = vpop.f32.mrb[0].mxu0
        %1824 = vmatprep.mubr.bf16.mxu0 0
        %1825 = vmatmul.mubr.bf16.gmra.mrb[0].mxu0 %v1318
        %v1826 = vpop.f32.mrb[0].mxu0
        %v1827 = vadd.f32 0.0, %v1826
        %v1828 = vpop.f32.mrb[0].mxu0
        %v1829 = vpop.f32.mrb[0].mxu0
        %v1830 = vadd.f32 0.0, %v1829
        %v1831 = vpop.f32.mrb[0].mxu0
        %1832 = vmatprep.mubr.bf16.mxu0 0
        %1833 = vmatmul.mubr.bf16.gmra.mrb[0].mxu0 %v1321
        %v1834 = vpop.f32.mrb[0].mxu0
        %v1835 = vadd.f32 0.0, %v1834
        %v1836 = vpop.f32.mrb[0].mxu0
        %v1837 = vpop.f32.mrb[0].mxu0
        %v1838 = vadd.f32 0.0, %v1837
        %v1839 = vpop.f32.mrb[0].mxu0
        %1840 = vmatprep.mubr.bf16.mxu0 0
        %1841 = vmatmul.mubr.bf16.gmra.mrb[0].mxu0 %v1324
        %v1842 = vpop.f32.mrb[0].mxu0
        %v1843 = vadd.f32 0.0, %v1842
        %v1844 = vpop.f32.mrb[0].mxu0
        %v1845 = vpop.f32.mrb[0].mxu0
        %v1846 = vadd.f32 0.0, %v1845
        %v1847 = vpop.f32.mrb[0].mxu0
        %1848 = vmatprep.mubr.bf16.mxu0 0
        %1849 = vmatmul.mubr.bf16.gmra.mrb[0].mxu0 %v1327
        %v1850 = vpop.f32.mrb[0].mxu0
        %v1851 = vadd.f32 0.0, %v1850
        %v1852 = vpop.f32.mrb[0].mxu0
        %v1853 = vpop.f32.mrb[0].mxu0
        %v1854 = vadd.f32 0.0, %v1853
        %v1855 = vpop.f32.mrb[0].mxu0
        %1856 = vmatprep.mubr.bf16.mxu0 0
        %1857 = vmatmul.mubr.bf16.gmra.mrb[0].mxu0 %v1330
        %v1858 = vpop.f32.mrb[0].mxu0
        %v1859 = vadd.f32 0.0, %v1858
        %v1860 = vpop.f32.mrb[0].mxu0
        %v1861 = vpop.f32.mrb[0].mxu0
        %v1862 = vadd.f32 0.0, %v1861
        %v1863 = vpop.f32.mrb[0].mxu0
        %1864 = vmatprep.mubr.bf16.mxu0 0
        %1865 = vmatmul.mubr.bf16.gmra.mrb[0].mxu0 %v1333
        %v1866 = vpop.f32.mrb[0].mxu0
        %v1867 = vadd.f32 0.0, %v1866
        %v1868 = vpop.f32.mrb[0].mxu0
        %v1869 = vpop.f32.mrb[0].mxu0
        %v1870 = vadd.f32 0.0, %v1869
        %v1871 = vpop.f32.mrb[0].mxu0
        %1872 = vmatprep.mubr.bf16.mxu0 0
        %1873 = vmatmul.mubr.bf16.gmra.mrb[0].mxu0 %v1718
        %v1874 = vpop.f32.mrb[0].mxu0
        %v1875 = vadd.f32 0.0, %v1874
        %v1876 = vpop.f32.mrb[0].mxu0
        %v1877 = vpop.f32.mrb[0].mxu0
        %v1878 = vadd.f32 0.0, %v1877
        %v1879 = vpop.f32.mrb[0].mxu0
        %1880 = vdwg.mxu0
        %v1881 = vadd.f32 %v1558, %v1755
        %v1882 = vadd.f32 %v1561, %v1758
        %v1883 = vadd.f32 %v1566, %v1763
        %v1884 = vadd.f32 %v1569, %v1766
        %v1885 = vadd.f32 %v1574, %v1771
        %v1886 = vadd.f32 %v1577, %v1774
        %v1887 = vadd.f32 %v1582, %v1779
        %v1888 = vadd.f32 %v1585, %v1782
        %v1889 = vadd.f32 %v1590, %v1787
        %v1890 = vadd.f32 %v1593, %v1790
        %v1891 = vadd.f32 %v1598, %v1795
        %v1892 = vadd.f32 %v1601, %v1798
        %v1893 = vadd.f32 %v1606, %v1803
        %v1894 = vadd.f32 %v1609, %v1806
        %v1895 = vadd.f32 %v1614, %v1811
        %v1896 = vadd.f32 %v1617, %v1814
        %v1897 = vadd.f32 %v1622, %v1819
        %v1898 = vadd.f32 %v1625, %v1822
        %v1899 = vadd.f32 %v1630, %v1827
        %v1900 = vadd.f32 %v1633, %v1830
        %v1901 = vadd.f32 %v1638, %v1835
        %v1902 = vadd.f32 %v1641, %v1838
        %v1903 = vadd.f32 %v1646, %v1843
        %v1904 = vadd.f32 %v1649, %v1846
        %v1905 = vadd.f32 %v1654, %v1851
        %v1906 = vadd.f32 %v1657, %v1854
        %v1907 = vadd.f32 %v1662, %v1859
        %v1908 = vadd.f32 %v1665, %v1862
        %v1909 = vadd.f32 %v1670, %v1867
        %v1910 = vadd.f32 %v1673, %v1870
        %v1911 = vadd.f32 %v1678, %v1875
        %v1912 = vadd.f32 %v1681, %v1878
        %v1913 = vld [vmem:[#allocation2 + $0x8] sm:$0xff]
        %v1914 = vld [vmem:[#allocation2 + $0x10] sm:$0xff]
        %v1915 = vld [vmem:[#allocation2 + $0x28] sm:$0xff]
        %v1916 = vld [vmem:[#allocation2 + $0x30] sm:$0xff]
        %v1917 = vld [vmem:[#allocation2 + $0x48] sm:$0xff]
        %v1918 = vld [vmem:[#allocation2 + $0x50] sm:$0xff]
        %v1919 = vld [vmem:[#allocation2 + $0x68] sm:$0xff]
        %v1920 = vld [vmem:[#allocation2 + $0x70] sm:$0xff]
        %v1921 = vld [vmem:[#allocation2 + $0x88] sm:$0xff]
        %v1922 = vld [vmem:[#allocation2 + $0x90] sm:$0xff]
        %v1923 = vld [vmem:[#allocation2 + $0xa8] sm:$0xff]
        %v1924 = vld [vmem:[#allocation2 + $0xb0] sm:$0xff]
        %v1925 = vld [vmem:[#allocation2 + $0xc8] sm:$0xff]
        %v1926 = vld [vmem:[#allocation2 + $0xd0] sm:$0xff]
        %v1927 = vld [vmem:[#allocation2 + $0xe8] sm:$0xff]
        %v1928 = vld [vmem:[#allocation2 + $0xf0] sm:$0xff]
        %v1929 = vld [vmem:[#allocation2 + $0x108] sm:$0xff]
        %v1930 = vld [vmem:[#allocation2 + $0x110] sm:$0xff]
        %v1931 = vld [vmem:[#allocation2 + $0x128] sm:$0xff]
        %v1932 = vld [vmem:[#allocation2 + $0x130] sm:$0xff]
        %v1933 = vld [vmem:[#allocation2 + $0x148] sm:$0xff]
        %v1934 = vld [vmem:[#allocation2 + $0x150] sm:$0xff]
        %v1935 = vld [vmem:[#allocation2 + $0x168] sm:$0xff]
        %v1936 = vld [vmem:[#allocation2 + $0x170] sm:$0xff]
        %v1937 = vld [vmem:[#allocation2 + $0x188] sm:$0xff]
        %v1938 = vld [vmem:[#allocation2 + $0x190] sm:$0xff]
        %v1939 = vld [vmem:[#allocation2 + $0x1a8] sm:$0xff]
        %v1940 = vld [vmem:[#allocation2 + $0x1b0] sm:$0xff]
        %v1941 = vld [vmem:[#allocation2 + $0x1c8] sm:$0xff]
        %v1942 = vld [vmem:[#allocation2 + $0x1d0] sm:$0xff]
        %v1943 = vld [vmem:[#allocation2 + $0x1e8] sm:$0xff]
        %v1944 = vld [vmem:[#allocation2 + $0x1f0] sm:$0xff]
        %v1945 = vld [vmem:[#allocation2 + $0x208] sm:$0xff]
        %v1946 = vld [vmem:[#allocation2 + $0x210] sm:$0xff]
        %v1947 = vld [vmem:[#allocation2 + $0x228] sm:$0xff]
        %v1948 = vld [vmem:[#allocation2 + $0x230] sm:$0xff]
        %v1949 = vpack.c.bf16 %v1914, %v1913
        %v1950 = vpack.c.bf16 %v1916, %v1915
        %v1951 = vpack.c.bf16 %v1918, %v1917
        %v1952 = vpack.c.bf16 %v1920, %v1919
        %v1953 = vpack.c.bf16 %v1922, %v1921
        %v1954 = vpack.c.bf16 %v1924, %v1923
        %v1955 = vpack.c.bf16 %v1926, %v1925
        %v1956 = vpack.c.bf16 %v1928, %v1927
        %v1957 = vpack.c.bf16 %v1930, %v1929
        %v1958 = vpack.c.bf16 %v1932, %v1931
        %v1959 = vpack.c.bf16 %v1934, %v1933
        %v1960 = vpack.c.bf16 %v1936, %v1935
        %v1961 = vpack.c.bf16 %v1938, %v1937
        %v1962 = vpack.c.bf16 %v1940, %v1939
        %v1963 = vpack.c.bf16 %v1942, %v1941
        %v1964 = vpack.c.bf16 %v1944, %v1943
        %v1965 = vpack.c.bf16 %v1946, %v1945
        %v1966 = vpack.c.bf16 %v1948, %v1947
        %s1967 = scalar_lea.vmem [#allocation6], 32
        %v1968 = vld [vmem:[%s1967] sm:$0xf]
        %v1969 = vld [vmem:[%s1967 + $0x4] sm:$0xf]
        %v1970 = vld [vmem:[%s1967 + $0x8] sm:$0xf]
        %v1971 = vld [vmem:[%s1967 + $0xc] sm:$0xf]
        %v1972 = vld [vmem:[%s1967 + $0x10] sm:$0xf]
        %v1973 = vld [vmem:[%s1967 + $0x14] sm:$0xf]
        %v1974 = vld [vmem:[%s1967 + $0x18] sm:$0xf]
        %v1975 = vld [vmem:[%s1967 + $0x1c] sm:$0xf]
        %v1984 = vunpack.c.l.b16 %v1968
        %v1985 = vunpack.c.l.b16 %v1969
        %v1986 = vunpack.c.l.b16 %v1970
        %v1987 = vunpack.c.l.b16 %v1971
        %v1988 = vunpack.c.l.b16 %v1972
        %v1989 = vunpack.c.l.b16 %v1973
        %v1990 = vunpack.c.l.b16 %v1974
        %v1991 = vunpack.c.l.b16 %v1975
        %v1992 = vpack.c.b16 %v1985, %v1984
        %v1993 = vpack.c.b16 %v1987, %v1986
        %v1994 = vpack.c.b16 %v1989, %v1988
        %v1995 = vpack.c.b16 %v1991, %v1990
        %v2001 = vsel %vm767, %v1949, 0
        %v2004 = vsel %vm767, %v1950, 0
        %v2007 = vsel %vm767, %v1951, 0
        %v2010 = vsel %vm767, %v1952, 0
        %v2013 = vsel %vm767, %v1953, 0
        %v2016 = vsel %vm767, %v1954, 0
        %v2019 = vsel %vm767, %v1955, 0
        %v2022 = vsel %vm767, %v1956, 0
        %v2025 = vsel %vm767, %v1957, 0
        %v2028 = vsel %vm767, %v1958, 0
        %v2031 = vsel %vm767, %v1959, 0
        %v2034 = vsel %vm767, %v1960, 0
        %v2037 = vsel %vm767, %v1961, 0
        %v2040 = vsel %vm767, %v1962, 0
        %v2043 = vsel %vm767, %v1963, 0
        %v2046 = vsel %vm767, %v1964, 0
        %2048 = vmatprep.subr.bf16.mxu0 0
        %2049 = vmatpush1.bf16.msra.mxu0 %v1992
        %2050 = vmatprep.subr.bf16.mxu0 0
        %2051 = vmatpush1.bf16.msra.mxu0 %v1993
        %2052 = vmatprep.subr.bf16.mxu0 0
        %2053 = vmatpush1.bf16.msra.mxu0 %v1994
        %2054 = vmatprep.subr.bf16.mxu0 0
        %2055 = vmatpush1.bf16.msra.mxu0 %v1995
        %2056 = vmatprep.subr.bf16.mxu0 0
        %2057 = vmatpush1.bf16.msra.mxu0 0
        %2058 = vmatprep.subr.bf16.mxu0 0
        %2059 = vmatpush1.bf16.msra.mxu0 0
        %2060 = vmatprep.subr.bf16.mxu0 0
        %2061 = vmatpush1.bf16.msra.mxu0 0
        %2062 = vmatprep.subr.bf16.mxu0 0
        %2063 = vmatpush1.bf16.msra.mxu0 0
        %2064 = vmatprep.subr.bf16.mxu0 0
        %2065 = vmatpush1.bf16.msra.mxu0 0
        %2066 = vmatprep.subr.bf16.mxu0 0
        %2067 = vmatpush1.bf16.msra.mxu0 0
        %2068 = vmatprep.subr.bf16.mxu0 0
        %2069 = vmatpush1.bf16.msra.mxu0 0
        %2070 = vmatprep.subr.bf16.mxu0 0
        %2071 = vmatpush1.bf16.msra.mxu0 0
        %2072 = vmatprep.subr.bf16.mxu0 0
        %2073 = vmatpush1.bf16.msra.mxu0 0
        %2074 = vmatprep.subr.bf16.mxu0 0
        %2075 = vmatpush1.bf16.msra.mxu0 0
        %2076 = vmatprep.subr.bf16.mxu0 0
        %2077 = vmatpush1.bf16.msra.mxu0 0
        %2078 = vmatprep.subr.bf16.mxu0 0
        %2079 = vmatpush1.bf16.msra.mxu0 0
        %2080 = vmatprep.mubr.bf16.mxu0 0
        %2081 = vmatmul.mubr.bf16.gmra.mrb[0].mxu0 %v2001
        %v2082 = vpop.f32.mrb[0].mxu0
        %v2083 = vadd.f32 0.0, %v2082
        %v2084 = vpop.f32.mrb[0].mxu0
        %v2085 = vpop.f32.mrb[0].mxu0
        %v2086 = vadd.f32 0.0, %v2085
        %v2087 = vpop.f32.mrb[0].mxu0
        %2088 = vmatprep.mubr.bf16.mxu0 0
        %2089 = vmatmul.mubr.bf16.gmra.mrb[0].mxu0 %v2004
        %v2090 = vpop.f32.mrb[0].mxu0
        %v2091 = vadd.f32 0.0, %v2090
        %v2092 = vpop.f32.mrb[0].mxu0
        %v2093 = vpop.f32.mrb[0].mxu0
        %v2094 = vadd.f32 0.0, %v2093
        %v2095 = vpop.f32.mrb[0].mxu0
        %2096 = vmatprep.mubr.bf16.mxu0 0
        %2097 = vmatmul.mubr.bf16.gmra.mrb[0].mxu0 %v2007
        %v2098 = vpop.f32.mrb[0].mxu0
        %v2099 = vadd.f32 0.0, %v2098
        %v2100 = vpop.f32.mrb[0].mxu0
        %v2101 = vpop.f32.mrb[0].mxu0
        %v2102 = vadd.f32 0.0, %v2101
        %v2103 = vpop.f32.mrb[0].mxu0
        %2104 = vmatprep.mubr.bf16.mxu0 0
        %2105 = vmatmul.mubr.bf16.gmra.mrb[0].mxu0 %v2010
        %v2106 = vpop.f32.mrb[0].mxu0
        %v2107 = vadd.f32 0.0, %v2106
        %v2108 = vpop.f32.mrb[0].mxu0
        %v2109 = vpop.f32.mrb[0].mxu0
        %v2110 = vadd.f32 0.0, %v2109
        %v2111 = vpop.f32.mrb[0].mxu0
        %2112 = vmatprep.mubr.bf16.mxu0 0
        %2113 = vmatmul.mubr.bf16.gmra.mrb[0].mxu0 %v2013
        %v2114 = vpop.f32.mrb[0].mxu0
        %v2115 = vadd.f32 0.0, %v2114
        %v2116 = vpop.f32.mrb[0].mxu0
        %v2117 = vpop.f32.mrb[0].mxu0
        %v2118 = vadd.f32 0.0, %v2117
        %v2119 = vpop.f32.mrb[0].mxu0
        %2120 = vmatprep.mubr.bf16.mxu0 0
        %2121 = vmatmul.mubr.bf16.gmra.mrb[0].mxu0 %v2016
        %v2122 = vpop.f32.mrb[0].mxu0
        %v2123 = vadd.f32 0.0, %v2122
        %v2124 = vpop.f32.mrb[0].mxu0
        %v2125 = vpop.f32.mrb[0].mxu0
        %v2126 = vadd.f32 0.0, %v2125
        %v2127 = vpop.f32.mrb[0].mxu0
        %2128 = vmatprep.mubr.bf16.mxu0 0
        %2129 = vmatmul.mubr.bf16.gmra.mrb[0].mxu0 %v2019
        %v2130 = vpop.f32.mrb[0].mxu0
        %v2131 = vadd.f32 0.0, %v2130
        %v2132 = vpop.f32.mrb[0].mxu0
        %v2133 = vpop.f32.mrb[0].mxu0
        %v2134 = vadd.f32 0.0, %v2133
        %v2135 = vpop.f32.mrb[0].mxu0
        %2136 = vmatprep.mubr.bf16.mxu0 0
        %2137 = vmatmul.mubr.bf16.gmra.mrb[0].mxu0 %v2022
        %v2138 = vpop.f32.mrb[0].mxu0
        %v2139 = vadd.f32 0.0, %v2138
        %v2140 = vpop.f32.mrb[0].mxu0
        %v2141 = vpop.f32.mrb[0].mxu0
        %v2142 = vadd.f32 0.0, %v2141
        %v2143 = vpop.f32.mrb[0].mxu0
        %2144 = vmatprep.mubr.bf16.mxu0 0
        %2145 = vmatmul.mubr.bf16.gmra.mrb[0].mxu0 %v2025
        %v2146 = vpop.f32.mrb[0].mxu0
        %v2147 = vadd.f32 0.0, %v2146
        %v2148 = vpop.f32.mrb[0].mxu0
        %v2149 = vpop.f32.mrb[0].mxu0
        %v2150 = vadd.f32 0.0, %v2149
        %v2151 = vpop.f32.mrb[0].mxu0
        %2152 = vmatprep.mubr.bf16.mxu0 0
        %2153 = vmatmul.mubr.bf16.gmra.mrb[0].mxu0 %v2028
        %v2154 = vpop.f32.mrb[0].mxu0
        %v2155 = vadd.f32 0.0, %v2154
        %v2156 = vpop.f32.mrb[0].mxu0
        %v2157 = vpop.f32.mrb[0].mxu0
        %v2158 = vadd.f32 0.0, %v2157
        %v2159 = vpop.f32.mrb[0].mxu0
        %2160 = vmatprep.mubr.bf16.mxu0 0
        %2161 = vmatmul.mubr.bf16.gmra.mrb[0].mxu0 %v2031
        %v2162 = vpop.f32.mrb[0].mxu0
        %v2163 = vadd.f32 0.0, %v2162
        %v2164 = vpop.f32.mrb[0].mxu0
        %v2165 = vpop.f32.mrb[0].mxu0
        %v2166 = vadd.f32 0.0, %v2165
        %v2167 = vpop.f32.mrb[0].mxu0
        %2168 = vmatprep.mubr.bf16.mxu0 0
        %2169 = vmatmul.mubr.bf16.gmra.mrb[0].mxu0 %v2034
        %v2170 = vpop.f32.mrb[0].mxu0
        %v2171 = vadd.f32 0.0, %v2170
        %v2172 = vpop.f32.mrb[0].mxu0
        %v2173 = vpop.f32.mrb[0].mxu0
        %v2174 = vadd.f32 0.0, %v2173
        %v2175 = vpop.f32.mrb[0].mxu0
        %2176 = vmatprep.mubr.bf16.mxu0 0
        %2177 = vmatmul.mubr.bf16.gmra.mrb[0].mxu0 %v2037
        %v2178 = vpop.f32.mrb[0].mxu0
        %v2179 = vadd.f32 0.0, %v2178
        %v2180 = vpop.f32.mrb[0].mxu0
        %v2181 = vpop.f32.mrb[0].mxu0
        %v2182 = vadd.f32 0.0, %v2181
        %v2183 = vpop.f32.mrb[0].mxu0
        %2184 = vmatprep.mubr.bf16.mxu0 0
        %2185 = vmatmul.mubr.bf16.gmra.mrb[0].mxu0 %v2040
        %v2186 = vpop.f32.mrb[0].mxu0
        %v2187 = vadd.f32 0.0, %v2186
        %v2188 = vpop.f32.mrb[0].mxu0
        %v2189 = vpop.f32.mrb[0].mxu0
        %v2190 = vadd.f32 0.0, %v2189
        %v2191 = vpop.f32.mrb[0].mxu0
        %2192 = vmatprep.mubr.bf16.mxu0 0
        %2193 = vmatmul.mubr.bf16.gmra.mrb[0].mxu0 %v2043
        %v2194 = vpop.f32.mrb[0].mxu0
        %v2195 = vadd.f32 0.0, %v2194
        %v2196 = vpop.f32.mrb[0].mxu0
        %v2197 = vpop.f32.mrb[0].mxu0
        %v2198 = vadd.f32 0.0, %v2197
        %v2199 = vpop.f32.mrb[0].mxu0
        %2200 = vmatprep.mubr.bf16.mxu0 0
        %2201 = vmatmul.mubr.bf16.gmra.mrb[0].mxu0 %v2046
        %v2202 = vpop.f32.mrb[0].mxu0
        %v2203 = vadd.f32 0.0, %v2202
        %v2204 = vpop.f32.mrb[0].mxu0
        %v2205 = vpop.f32.mrb[0].mxu0
        %v2206 = vadd.f32 0.0, %v2205
        %v2207 = vpop.f32.mrb[0].mxu0
        %2208 = vdwg.mxu0
        %v2209 = vadd.f32 %v1881, %v2083
        %v2210 = vadd.f32 %v1882, %v2086
        %v2211 = vadd.f32 %v1883, %v2091
        %v2212 = vadd.f32 %v1884, %v2094
        %v2213 = vadd.f32 %v1885, %v2099
        %v2214 = vadd.f32 %v1886, %v2102
        %v2215 = vadd.f32 %v1887, %v2107
        %v2216 = vadd.f32 %v1888, %v2110
        %v2217 = vadd.f32 %v1889, %v2115
        %v2218 = vadd.f32 %v1890, %v2118
        %v2219 = vadd.f32 %v1891, %v2123
        %v2220 = vadd.f32 %v1892, %v2126
        %v2221 = vadd.f32 %v1893, %v2131
        %v2222 = vadd.f32 %v1894, %v2134
        %v2223 = vadd.f32 %v1895, %v2139
        %v2224 = vadd.f32 %v1896, %v2142
        %v2225 = vadd.f32 %v1897, %v2147
        %v2226 = vadd.f32 %v1898, %v2150
        %v2227 = vadd.f32 %v1899, %v2155
        %v2228 = vadd.f32 %v1900, %v2158
        %v2229 = vadd.f32 %v1901, %v2163
        %v2230 = vadd.f32 %v1902, %v2166
        %v2231 = vadd.f32 %v1903, %v2171
        %v2232 = vadd.f32 %v1904, %v2174
        %v2233 = vadd.f32 %v1905, %v2179
        %v2234 = vadd.f32 %v1906, %v2182
        %v2235 = vadd.f32 %v1907, %v2187
        %v2236 = vadd.f32 %v1908, %v2190
        %v2237 = vadd.f32 %v1909, %v2195
        %v2238 = vadd.f32 %v1910, %v2198
        %v2239 = vadd.f32 %v1911, %v2203
        %v2240 = vadd.f32 %v1912, %v2206
        %s2241 = scalar_lea.vmem [#allocation6], 128
        %v2242 = vld [vmem:[%s2241] sm:$0xf]
        %v2243 = vld [vmem:[%s2241 + $0x4] sm:$0xf]
        %v2244 = vld [vmem:[%s2241 + $0x8] sm:$0xf]
        %v2245 = vld [vmem:[%s2241 + $0xc] sm:$0xf]
        %v2246 = vld [vmem:[%s2241 + $0x10] sm:$0xf]
        %v2247 = vld [vmem:[%s2241 + $0x14] sm:$0xf]
        %v2248 = vld [vmem:[%s2241 + $0x18] sm:$0xf]
        %v2249 = vld [vmem:[%s2241 + $0x1c] sm:$0xf]
        %v2258 = vunpack.c.l.b16 %v2242
        %v2259 = vunpack.c.l.b16 %v2243
        %v2260 = vunpack.c.l.b16 %v2244
        %v2261 = vunpack.c.l.b16 %v2245
        %v2262 = vunpack.c.l.b16 %v2246
        %v2263 = vunpack.c.l.b16 %v2247
        %v2264 = vunpack.c.l.b16 %v2248
        %v2265 = vunpack.c.l.b16 %v2249
        %v2266 = vpack.c.b16 %v2259, %v2258
        %v2267 = vpack.c.b16 %v2261, %v2260
        %v2268 = vpack.c.b16 %v2263, %v2262
        %v2269 = vpack.c.b16 %v2265, %v2264
        %v2275 = vsel %vm767, %v1965, 0
        %2277 = vmatprep.subr.bf16.mxu0 0
        %2278 = vmatpush1.bf16.msra.mxu0 %v2266
        %2279 = vmatprep.subr.bf16.mxu0 0
        %2280 = vmatpush1.bf16.msra.mxu0 %v2267
        %2281 = vmatprep.subr.bf16.mxu0 0
        %2282 = vmatpush1.bf16.msra.mxu0 %v2268
        %2283 = vmatprep.subr.bf16.mxu0 0
        %2284 = vmatpush1.bf16.msra.mxu0 %v2269
        %2285 = vmatprep.subr.bf16.mxu0 0
        %2286 = vmatpush1.bf16.msra.mxu0 0
        %2287 = vmatprep.subr.bf16.mxu0 0
        %2288 = vmatpush1.bf16.msra.mxu0 0
        %2289 = vmatprep.subr.bf16.mxu0 0
        %2290 = vmatpush1.bf16.msra.mxu0 0
        %2291 = vmatprep.subr.bf16.mxu0 0
        %2292 = vmatpush1.bf16.msra.mxu0 0
        %2293 = vmatprep.subr.bf16.mxu0 0
        %2294 = vmatpush1.bf16.msra.mxu0 0
        %2295 = vmatprep.subr.bf16.mxu0 0
        %2296 = vmatpush1.bf16.msra.mxu0 0
        %2297 = vmatprep.subr.bf16.mxu0 0
        %2298 = vmatpush1.bf16.msra.mxu0 0
        %2299 = vmatprep.subr.bf16.mxu0 0
        %2300 = vmatpush1.bf16.msra.mxu0 0
        %2301 = vmatprep.subr.bf16.mxu0 0
        %2302 = vmatpush1.bf16.msra.mxu0 0
        %2303 = vmatprep.subr.bf16.mxu0 0
        %2304 = vmatpush1.bf16.msra.mxu0 0
        %2305 = vmatprep.subr.bf16.mxu0 0
        %2306 = vmatpush1.bf16.msra.mxu0 0
        %2307 = vmatprep.subr.bf16.mxu0 0
        %2308 = vmatpush1.bf16.msra.mxu0 0
        %2309 = vmatprep.mubr.bf16.mxu0 0
        %2310 = vmatmul.mubr.bf16.gmra.mrb[0].mxu0 %v2004
        %v2311 = vpop.f32.mrb[0].mxu0
        %v2312 = vadd.f32 0.0, %v2311
        %v2313 = vpop.f32.mrb[0].mxu0
        %v2314 = vpop.f32.mrb[0].mxu0
        %v2315 = vadd.f32 0.0, %v2314
        %v2316 = vpop.f32.mrb[0].mxu0
        %2317 = vmatprep.mubr.bf16.mxu0 0
        %2318 = vmatmul.mubr.bf16.gmra.mrb[0].mxu0 %v2007
        %v2319 = vpop.f32.mrb[0].mxu0
        %v2320 = vadd.f32 0.0, %v2319
        %v2321 = vpop.f32.mrb[0].mxu0
        %v2322 = vpop.f32.mrb[0].mxu0
        %v2323 = vadd.f32 0.0, %v2322
        %v2324 = vpop.f32.mrb[0].mxu0
        %2325 = vmatprep.mubr.bf16.mxu0 0
        %2326 = vmatmul.mubr.bf16.gmra.mrb[0].mxu0 %v2010
        %v2327 = vpop.f32.mrb[0].mxu0
        %v2328 = vadd.f32 0.0, %v2327
        %v2329 = vpop.f32.mrb[0].mxu0
        %v2330 = vpop.f32.mrb[0].mxu0
        %v2331 = vadd.f32 0.0, %v2330
        %v2332 = vpop.f32.mrb[0].mxu0
        %2333 = vmatprep.mubr.bf16.mxu0 0
        %2334 = vmatmul.mubr.bf16.gmra.mrb[0].mxu0 %v2013
        %v2335 = vpop.f32.mrb[0].mxu0
        %v2336 = vadd.f32 0.0, %v2335
        %v2337 = vpop.f32.mrb[0].mxu0
        %v2338 = vpop.f32.mrb[0].mxu0
        %v2339 = vadd.f32 0.0, %v2338
        %v2340 = vpop.f32.mrb[0].mxu0
        %2341 = vmatprep.mubr.bf16.mxu0 0
        %2342 = vmatmul.mubr.bf16.gmra.mrb[0].mxu0 %v2016
        %v2343 = vpop.f32.mrb[0].mxu0
        %v2344 = vadd.f32 0.0, %v2343
        %v2345 = vpop.f32.mrb[0].mxu0
        %v2346 = vpop.f32.mrb[0].mxu0
        %v2347 = vadd.f32 0.0, %v2346
        %v2348 = vpop.f32.mrb[0].mxu0
        %2349 = vmatprep.mubr.bf16.mxu0 0
        %2350 = vmatmul.mubr.bf16.gmra.mrb[0].mxu0 %v2019
        %v2351 = vpop.f32.mrb[0].mxu0
        %v2352 = vadd.f32 0.0, %v2351
        %v2353 = vpop.f32.mrb[0].mxu0
        %v2354 = vpop.f32.mrb[0].mxu0
        %v2355 = vadd.f32 0.0, %v2354
        %v2356 = vpop.f32.mrb[0].mxu0
        %2357 = vmatprep.mubr.bf16.mxu0 0
        %2358 = vmatmul.mubr.bf16.gmra.mrb[0].mxu0 %v2022
        %v2359 = vpop.f32.mrb[0].mxu0
        %v2360 = vadd.f32 0.0, %v2359
        %v2361 = vpop.f32.mrb[0].mxu0
        %v2362 = vpop.f32.mrb[0].mxu0
        %v2363 = vadd.f32 0.0, %v2362
        %v2364 = vpop.f32.mrb[0].mxu0
        %2365 = vmatprep.mubr.bf16.mxu0 0
        %2366 = vmatmul.mubr.bf16.gmra.mrb[0].mxu0 %v2025
        %v2367 = vpop.f32.mrb[0].mxu0
        %v2368 = vadd.f32 0.0, %v2367
        %v2369 = vpop.f32.mrb[0].mxu0
        %v2370 = vpop.f32.mrb[0].mxu0
        %v2371 = vadd.f32 0.0, %v2370
        %v2372 = vpop.f32.mrb[0].mxu0
        %2373 = vmatprep.mubr.bf16.mxu0 0
        %2374 = vmatmul.mubr.bf16.gmra.mrb[0].mxu0 %v2028
        %v2375 = vpop.f32.mrb[0].mxu0
        %v2376 = vadd.f32 0.0, %v2375
        %v2377 = vpop.f32.mrb[0].mxu0
        %v2378 = vpop.f32.mrb[0].mxu0
        %v2379 = vadd.f32 0.0, %v2378
        %v2380 = vpop.f32.mrb[0].mxu0
        %2381 = vmatprep.mubr.bf16.mxu0 0
        %2382 = vmatmul.mubr.bf16.gmra.mrb[0].mxu0 %v2031
        %v2383 = vpop.f32.mrb[0].mxu0
        %v2384 = vadd.f32 0.0, %v2383
        %v2385 = vpop.f32.mrb[0].mxu0
        %v2386 = vpop.f32.mrb[0].mxu0
        %v2387 = vadd.f32 0.0, %v2386
        %v2388 = vpop.f32.mrb[0].mxu0
        %2389 = vmatprep.mubr.bf16.mxu0 0
        %2390 = vmatmul.mubr.bf16.gmra.mrb[0].mxu0 %v2034
        %v2391 = vpop.f32.mrb[0].mxu0
        %v2392 = vadd.f32 0.0, %v2391
        %v2393 = vpop.f32.mrb[0].mxu0
        %v2394 = vpop.f32.mrb[0].mxu0
        %v2395 = vadd.f32 0.0, %v2394
        %v2396 = vpop.f32.mrb[0].mxu0
        %2397 = vmatprep.mubr.bf16.mxu0 0
        %2398 = vmatmul.mubr.bf16.gmra.mrb[0].mxu0 %v2037
        %v2399 = vpop.f32.mrb[0].mxu0
        %v2400 = vadd.f32 0.0, %v2399
        %v2401 = vpop.f32.mrb[0].mxu0
        %v2402 = vpop.f32.mrb[0].mxu0
        %v2403 = vadd.f32 0.0, %v2402
        %v2404 = vpop.f32.mrb[0].mxu0
        %2405 = vmatprep.mubr.bf16.mxu0 0
        %2406 = vmatmul.mubr.bf16.gmra.mrb[0].mxu0 %v2040
        %v2407 = vpop.f32.mrb[0].mxu0
        %v2408 = vadd.f32 0.0, %v2407
        %v2409 = vpop.f32.mrb[0].mxu0
        %v2410 = vpop.f32.mrb[0].mxu0
        %v2411 = vadd.f32 0.0, %v2410
        %v2412 = vpop.f32.mrb[0].mxu0
        %2413 = vmatprep.mubr.bf16.mxu0 0
        %2414 = vmatmul.mubr.bf16.gmra.mrb[0].mxu0 %v2043
        %v2415 = vpop.f32.mrb[0].mxu0
        %v2416 = vadd.f32 0.0, %v2415
        %v2417 = vpop.f32.mrb[0].mxu0
        %v2418 = vpop.f32.mrb[0].mxu0
        %v2419 = vadd.f32 0.0, %v2418
        %v2420 = vpop.f32.mrb[0].mxu0
        %2421 = vmatprep.mubr.bf16.mxu0 0
        %2422 = vmatmul.mubr.bf16.gmra.mrb[0].mxu0 %v2046
        %v2423 = vpop.f32.mrb[0].mxu0
        %v2424 = vadd.f32 0.0, %v2423
        %v2425 = vpop.f32.mrb[0].mxu0
        %v2426 = vpop.f32.mrb[0].mxu0
        %v2427 = vadd.f32 0.0, %v2426
        %v2428 = vpop.f32.mrb[0].mxu0
        %2429 = vmatprep.mubr.bf16.mxu0 0
        %2430 = vmatmul.mubr.bf16.gmra.mrb[0].mxu0 %v2275
        %v2431 = vpop.f32.mrb[0].mxu0
        %v2432 = vadd.f32 0.0, %v2431
        %v2433 = vpop.f32.mrb[0].mxu0
        %v2434 = vpop.f32.mrb[0].mxu0
        %v2435 = vadd.f32 0.0, %v2434
        %v2436 = vpop.f32.mrb[0].mxu0
        %2437 = vdwg.mxu0
        %v2438 = vadd.f32 %v2209, %v2312
        %v2439 = vadd.f32 %v2210, %v2315
        %v2440 = vadd.f32 %v2211, %v2320
        %v2441 = vadd.f32 %v2212, %v2323
        %v2442 = vadd.f32 %v2213, %v2328
        %v2443 = vadd.f32 %v2214, %v2331
        %v2444 = vadd.f32 %v2215, %v2336
        %v2445 = vadd.f32 %v2216, %v2339
        %v2446 = vadd.f32 %v2217, %v2344
        %v2447 = vadd.f32 %v2218, %v2347
        %v2448 = vadd.f32 %v2219, %v2352
        %v2449 = vadd.f32 %v2220, %v2355
        %v2450 = vadd.f32 %v2221, %v2360
        %v2451 = vadd.f32 %v2222, %v2363
        %v2452 = vadd.f32 %v2223, %v2368
        %v2453 = vadd.f32 %v2224, %v2371
        %v2454 = vadd.f32 %v2225, %v2376
        %v2455 = vadd.f32 %v2226, %v2379
        %v2456 = vadd.f32 %v2227, %v2384
        %v2457 = vadd.f32 %v2228, %v2387
        %v2458 = vadd.f32 %v2229, %v2392
        %v2459 = vadd.f32 %v2230, %v2395
        %v2460 = vadd.f32 %v2231, %v2400
        %v2461 = vadd.f32 %v2232, %v2403
        %v2462 = vadd.f32 %v2233, %v2408
        %v2463 = vadd.f32 %v2234, %v2411
        %v2464 = vadd.f32 %v2235, %v2416
        %v2465 = vadd.f32 %v2236, %v2419
        %v2466 = vadd.f32 %v2237, %v2424
        %v2467 = vadd.f32 %v2238, %v2427
        %v2468 = vadd.f32 %v2239, %v2432
        %v2469 = vadd.f32 %v2240, %v2435
        %s2470 = scalar_lea.vmem [#allocation6], 224
        %v2471 = vld [vmem:[%s2470] sm:$0xf]
        %v2472 = vld [vmem:[%s2470 + $0x4] sm:$0xf]
        %v2473 = vld [vmem:[%s2470 + $0x8] sm:$0xf]
        %v2474 = vld [vmem:[%s2470 + $0xc] sm:$0xf]
        %v2475 = vld [vmem:[%s2470 + $0x10] sm:$0xf]
        %v2476 = vld [vmem:[%s2470 + $0x14] sm:$0xf]
        %v2477 = vld [vmem:[%s2470 + $0x18] sm:$0xf]
        %v2478 = vld [vmem:[%s2470 + $0x1c] sm:$0xf]
        %v2487 = vunpack.c.l.b16 %v2471
        %v2488 = vunpack.c.l.b16 %v2472
        %v2489 = vunpack.c.l.b16 %v2473
        %v2490 = vunpack.c.l.b16 %v2474
        %v2491 = vunpack.c.l.b16 %v2475
        %v2492 = vunpack.c.l.b16 %v2476
        %v2493 = vunpack.c.l.b16 %v2477
        %v2494 = vunpack.c.l.b16 %v2478
        %v2495 = vpack.c.b16 %v2488, %v2487
        %v2496 = vpack.c.b16 %v2490, %v2489
        %v2497 = vpack.c.b16 %v2492, %v2491
        %v2498 = vpack.c.b16 %v2494, %v2493
        %v2504 = vsel %vm767, %v1966, 0
        %2506 = vmatprep.subr.bf16.mxu0 0
        %2507 = vmatpush1.bf16.msra.mxu0 %v2495
        %2508 = vmatprep.subr.bf16.mxu0 0
        %2509 = vmatpush1.bf16.msra.mxu0 %v2496
        %2510 = vmatprep.subr.bf16.mxu0 0
        %2511 = vmatpush1.bf16.msra.mxu0 %v2497
        %2512 = vmatprep.subr.bf16.mxu0 0
        %2513 = vmatpush1.bf16.msra.mxu0 %v2498
        %2514 = vmatprep.subr.bf16.mxu0 0
        %2515 = vmatpush1.bf16.msra.mxu0 0
        %2516 = vmatprep.subr.bf16.mxu0 0
        %2517 = vmatpush1.bf16.msra.mxu0 0
        %2518 = vmatprep.subr.bf16.mxu0 0
        %2519 = vmatpush1.bf16.msra.mxu0 0
        %2520 = vmatprep.subr.bf16.mxu0 0
        %2521 = vmatpush1.bf16.msra.mxu0 0
        %2522 = vmatprep.subr.bf16.mxu0 0
        %2523 = vmatpush1.bf16.msra.mxu0 0
        %2524 = vmatprep.subr.bf16.mxu0 0
        %2525 = vmatpush1.bf16.msra.mxu0 0
        %2526 = vmatprep.subr.bf16.mxu0 0
        %2527 = vmatpush1.bf16.msra.mxu0 0
        %2528 = vmatprep.subr.bf16.mxu0 0
        %2529 = vmatpush1.bf16.msra.mxu0 0
        %2530 = vmatprep.subr.bf16.mxu0 0
        %2531 = vmatpush1.bf16.msra.mxu0 0
        %2532 = vmatprep.subr.bf16.mxu0 0
        %2533 = vmatpush1.bf16.msra.mxu0 0
        %2534 = vmatprep.subr.bf16.mxu0 0
        %2535 = vmatpush1.bf16.msra.mxu0 0
        %2536 = vmatprep.subr.bf16.mxu0 0
        %2537 = vmatpush1.bf16.msra.mxu0 0
        %2538 = vmatprep.mubr.bf16.mxu0 0
        %2539 = vmatmul.mubr.bf16.gmra.mrb[0].mxu0 %v2007
        %v2540 = vpop.f32.mrb[0].mxu0
        %v2541 = vadd.f32 0.0, %v2540
        %v2542 = vpop.f32.mrb[0].mxu0
        %v2543 = vpop.f32.mrb[0].mxu0
        %v2544 = vadd.f32 0.0, %v2543
        %v2545 = vpop.f32.mrb[0].mxu0
        %2546 = vmatprep.mubr.bf16.mxu0 0
        %2547 = vmatmul.mubr.bf16.gmra.mrb[0].mxu0 %v2010
        %v2548 = vpop.f32.mrb[0].mxu0
        %v2549 = vadd.f32 0.0, %v2548
        %v2550 = vpop.f32.mrb[0].mxu0
        %v2551 = vpop.f32.mrb[0].mxu0
        %v2552 = vadd.f32 0.0, %v2551
        %v2553 = vpop.f32.mrb[0].mxu0
        %2554 = vmatprep.mubr.bf16.mxu0 0
        %2555 = vmatmul.mubr.bf16.gmra.mrb[0].mxu0 %v2013
        %v2556 = vpop.f32.mrb[0].mxu0
        %v2557 = vadd.f32 0.0, %v2556
        %v2558 = vpop.f32.mrb[0].mxu0
        %v2559 = vpop.f32.mrb[0].mxu0
        %v2560 = vadd.f32 0.0, %v2559
        %v2561 = vpop.f32.mrb[0].mxu0
        %2562 = vmatprep.mubr.bf16.mxu0 0
        %2563 = vmatmul.mubr.bf16.gmra.mrb[0].mxu0 %v2016
        %v2564 = vpop.f32.mrb[0].mxu0
        %v2565 = vadd.f32 0.0, %v2564
        %v2566 = vpop.f32.mrb[0].mxu0
        %v2567 = vpop.f32.mrb[0].mxu0
        %v2568 = vadd.f32 0.0, %v2567
        %v2569 = vpop.f32.mrb[0].mxu0
        %2570 = vmatprep.mubr.bf16.mxu0 0
        %2571 = vmatmul.mubr.bf16.gmra.mrb[0].mxu0 %v2019
        %v2572 = vpop.f32.mrb[0].mxu0
        %v2573 = vadd.f32 0.0, %v2572
        %v2574 = vpop.f32.mrb[0].mxu0
        %v2575 = vpop.f32.mrb[0].mxu0
        %v2576 = vadd.f32 0.0, %v2575
        %v2577 = vpop.f32.mrb[0].mxu0
        %2578 = vmatprep.mubr.bf16.mxu0 0
        %2579 = vmatmul.mubr.bf16.gmra.mrb[0].mxu0 %v2022
        %v2580 = vpop.f32.mrb[0].mxu0
        %v2581 = vadd.f32 0.0, %v2580
        %v2582 = vpop.f32.mrb[0].mxu0
        %v2583 = vpop.f32.mrb[0].mxu0
        %v2584 = vadd.f32 0.0, %v2583
        %v2585 = vpop.f32.mrb[0].mxu0
        %2586 = vmatprep.mubr.bf16.mxu0 0
        %2587 = vmatmul.mubr.bf16.gmra.mrb[0].mxu0 %v2025
        %v2588 = vpop.f32.mrb[0].mxu0
        %v2589 = vadd.f32 0.0, %v2588
        %v2590 = vpop.f32.mrb[0].mxu0
        %v2591 = vpop.f32.mrb[0].mxu0
        %v2592 = vadd.f32 0.0, %v2591
        %v2593 = vpop.f32.mrb[0].mxu0
        %2594 = vmatprep.mubr.bf16.mxu0 0
        %2595 = vmatmul.mubr.bf16.gmra.mrb[0].mxu0 %v2028
        %v2596 = vpop.f32.mrb[0].mxu0
        %v2597 = vadd.f32 0.0, %v2596
        %v2598 = vpop.f32.mrb[0].mxu0
        %v2599 = vpop.f32.mrb[0].mxu0
        %v2600 = vadd.f32 0.0, %v2599
        %v2601 = vpop.f32.mrb[0].mxu0
        %2602 = vmatprep.mubr.bf16.mxu0 0
        %2603 = vmatmul.mubr.bf16.gmra.mrb[0].mxu0 %v2031
        %v2604 = vpop.f32.mrb[0].mxu0
        %v2605 = vadd.f32 0.0, %v2604
        %v2606 = vpop.f32.mrb[0].mxu0
        %v2607 = vpop.f32.mrb[0].mxu0
        %v2608 = vadd.f32 0.0, %v2607
        %v2609 = vpop.f32.mrb[0].mxu0
        %2610 = vmatprep.mubr.bf16.mxu0 0
        %2611 = vmatmul.mubr.bf16.gmra.mrb[0].mxu0 %v2034
        %v2612 = vpop.f32.mrb[0].mxu0
        %v2613 = vadd.f32 0.0, %v2612
        %v2614 = vpop.f32.mrb[0].mxu0
        %v2615 = vpop.f32.mrb[0].mxu0
        %v2616 = vadd.f32 0.0, %v2615
        %v2617 = vpop.f32.mrb[0].mxu0
        %2618 = vmatprep.mubr.bf16.mxu0 0
        %2619 = vmatmul.mubr.bf16.gmra.mrb[0].mxu0 %v2037
        %v2620 = vpop.f32.mrb[0].mxu0
        %v2621 = vadd.f32 0.0, %v2620
        %v2622 = vpop.f32.mrb[0].mxu0
        %v2623 = vpop.f32.mrb[0].mxu0
        %v2624 = vadd.f32 0.0, %v2623
        %v2625 = vpop.f32.mrb[0].mxu0
        %2626 = vmatprep.mubr.bf16.mxu0 0
        %2627 = vmatmul.mubr.bf16.gmra.mrb[0].mxu0 %v2040
        %v2628 = vpop.f32.mrb[0].mxu0
        %v2629 = vadd.f32 0.0, %v2628
        %v2630 = vpop.f32.mrb[0].mxu0
        %v2631 = vpop.f32.mrb[0].mxu0
        %v2632 = vadd.f32 0.0, %v2631
        %v2633 = vpop.f32.mrb[0].mxu0
        %2634 = vmatprep.mubr.bf16.mxu0 0
        %2635 = vmatmul.mubr.bf16.gmra.mrb[0].mxu0 %v2043
        %v2636 = vpop.f32.mrb[0].mxu0
        %v2637 = vadd.f32 0.0, %v2636
        %v2638 = vpop.f32.mrb[0].mxu0
        %v2639 = vpop.f32.mrb[0].mxu0
        %v2640 = vadd.f32 0.0, %v2639
        %v2641 = vpop.f32.mrb[0].mxu0
        %2642 = vmatprep.mubr.bf16.mxu0 0
        %2643 = vmatmul.mubr.bf16.gmra.mrb[0].mxu0 %v2046
        %v2644 = vpop.f32.mrb[0].mxu0
        %v2645 = vadd.f32 0.0, %v2644
        %v2646 = vpop.f32.mrb[0].mxu0
        %v2647 = vpop.f32.mrb[0].mxu0
        %v2648 = vadd.f32 0.0, %v2647
        %v2649 = vpop.f32.mrb[0].mxu0
        %2650 = vmatprep.mubr.bf16.mxu0 0
        %2651 = vmatmul.mubr.bf16.gmra.mrb[0].mxu0 %v2275
        %v2652 = vpop.f32.mrb[0].mxu0
        %v2653 = vadd.f32 0.0, %v2652
        %v2654 = vpop.f32.mrb[0].mxu0
        %v2655 = vpop.f32.mrb[0].mxu0
        %v2656 = vadd.f32 0.0, %v2655
        %v2657 = vpop.f32.mrb[0].mxu0
        %2658 = vmatprep.mubr.bf16.mxu0 0
        %2659 = vmatmul.mubr.bf16.gmra.mrb[0].mxu0 %v2504
        %v2660 = vpop.f32.mrb[0].mxu0
        %v2661 = vadd.f32 0.0, %v2660
        %v2662 = vpop.f32.mrb[0].mxu0
        %v2663 = vpop.f32.mrb[0].mxu0
        %v2664 = vadd.f32 0.0, %v2663
        %v2665 = vpop.f32.mrb[0].mxu0
        %2666 = vdwg.mxu0
        %v2667 = vadd.f32 %v2438, %v2541
        %v2668 = vadd.f32 %v2439, %v2544
        %v2669 = vadd.f32 %v2440, %v2549
        %v2670 = vadd.f32 %v2441, %v2552
        %v2671 = vadd.f32 %v2442, %v2557
        %v2672 = vadd.f32 %v2443, %v2560
        %v2673 = vadd.f32 %v2444, %v2565
        %v2674 = vadd.f32 %v2445, %v2568
        %v2675 = vadd.f32 %v2446, %v2573
        %v2676 = vadd.f32 %v2447, %v2576
        %v2677 = vadd.f32 %v2448, %v2581
        %v2678 = vadd.f32 %v2449, %v2584
        %v2679 = vadd.f32 %v2450, %v2589
        %v2680 = vadd.f32 %v2451, %v2592
        %v2681 = vadd.f32 %v2452, %v2597
        %v2682 = vadd.f32 %v2453, %v2600
        %v2683 = vadd.f32 %v2454, %v2605
        %v2684 = vadd.f32 %v2455, %v2608
        %v2685 = vadd.f32 %v2456, %v2613
        %v2686 = vadd.f32 %v2457, %v2616
        %v2687 = vadd.f32 %v2458, %v2621
        %v2688 = vadd.f32 %v2459, %v2624
        %v2689 = vadd.f32 %v2460, %v2629
        %v2690 = vadd.f32 %v2461, %v2632
        %v2691 = vadd.f32 %v2462, %v2637
        %v2692 = vadd.f32 %v2463, %v2640
        %v2693 = vadd.f32 %v2464, %v2645
        %v2694 = vadd.f32 %v2465, %v2648
        %v2695 = vadd.f32 %v2466, %v2653
        %v2696 = vadd.f32 %v2467, %v2656
        %v2697 = vadd.f32 %v2468, %v2661
        %v2698 = vadd.f32 %v2469, %v2664
        %v2699 = vld [vmem:[#allocation2 + $0x9] sm:$0xff]
        %v2700 = vld [vmem:[#allocation2 + $0x11] sm:$0xff]
        %v2701 = vld [vmem:[#allocation2 + $0x29] sm:$0xff]
        %v2702 = vld [vmem:[#allocation2 + $0x31] sm:$0xff]
        %v2703 = vld [vmem:[#allocation2 + $0x49] sm:$0xff]
        %v2704 = vld [vmem:[#allocation2 + $0x51] sm:$0xff]
        %v2705 = vld [vmem:[#allocation2 + $0x69] sm:$0xff]
        %v2706 = vld [vmem:[#allocation2 + $0x71] sm:$0xff]
        %v2707 = vld [vmem:[#allocation2 + $0x89] sm:$0xff]
        %v2708 = vld [vmem:[#allocation2 + $0x91] sm:$0xff]
        %v2709 = vld [vmem:[#allocation2 + $0xa9] sm:$0xff]
        %v2710 = vld [vmem:[#allocation2 + $0xb1] sm:$0xff]
        %v2711 = vld [vmem:[#allocation2 + $0xc9] sm:$0xff]
        %v2712 = vld [vmem:[#allocation2 + $0xd1] sm:$0xff]
        %v2713 = vld [vmem:[#allocation2 + $0xe9] sm:$0xff]
        %v2714 = vld [vmem:[#allocation2 + $0xf1] sm:$0xff]
        %v2715 = vld [vmem:[#allocation2 + $0x109] sm:$0xff]
        %v2716 = vld [vmem:[#allocation2 + $0x111] sm:$0xff]
        %v2717 = vld [vmem:[#allocation2 + $0x129] sm:$0xff]
        %v2718 = vld [vmem:[#allocation2 + $0x131] sm:$0xff]
        %v2719 = vld [vmem:[#allocation2 + $0x149] sm:$0xff]
        %v2720 = vld [vmem:[#allocation2 + $0x151] sm:$0xff]
        %v2721 = vld [vmem:[#allocation2 + $0x169] sm:$0xff]
        %v2722 = vld [vmem:[#allocation2 + $0x171] sm:$0xff]
        %v2723 = vld [vmem:[#allocation2 + $0x189] sm:$0xff]
        %v2724 = vld [vmem:[#allocation2 + $0x191] sm:$0xff]
        %v2725 = vld [vmem:[#allocation2 + $0x1a9] sm:$0xff]
        %v2726 = vld [vmem:[#allocation2 + $0x1b1] sm:$0xff]
        %v2727 = vld [vmem:[#allocation2 + $0x1c9] sm:$0xff]
        %v2728 = vld [vmem:[#allocation2 + $0x1d1] sm:$0xff]
        %v2729 = vld [vmem:[#allocation2 + $0x1e9] sm:$0xff]
        %v2730 = vld [vmem:[#allocation2 + $0x1f1] sm:$0xff]
        %v2731 = vld [vmem:[#allocation2 + $0x209] sm:$0xff]
        %v2732 = vld [vmem:[#allocation2 + $0x211] sm:$0xff]
        %v2733 = vld [vmem:[#allocation2 + $0x229] sm:$0xff]
        %v2734 = vld [vmem:[#allocation2 + $0x231] sm:$0xff]
        %v2735 = vpack.c.bf16 %v2700, %v2699
        %v2736 = vpack.c.bf16 %v2702, %v2701
        %v2737 = vpack.c.bf16 %v2704, %v2703
        %v2738 = vpack.c.bf16 %v2706, %v2705
        %v2739 = vpack.c.bf16 %v2708, %v2707
        %v2740 = vpack.c.bf16 %v2710, %v2709
        %v2741 = vpack.c.bf16 %v2712, %v2711
        %v2742 = vpack.c.bf16 %v2714, %v2713
        %v2743 = vpack.c.bf16 %v2716, %v2715
        %v2744 = vpack.c.bf16 %v2718, %v2717
        %v2745 = vpack.c.bf16 %v2720, %v2719
        %v2746 = vpack.c.bf16 %v2722, %v2721
        %v2747 = vpack.c.bf16 %v2724, %v2723
        %v2748 = vpack.c.bf16 %v2726, %v2725
        %v2749 = vpack.c.bf16 %v2728, %v2727
        %v2750 = vpack.c.bf16 %v2730, %v2729
        %v2751 = vpack.c.bf16 %v2732, %v2731
        %v2752 = vpack.c.bf16 %v2734, %v2733
        %s2753 = scalar_lea.vmem [#allocation6], 64
        %v2754 = vld [vmem:[%s2753] sm:$0xf]
        %v2755 = vld [vmem:[%s2753 + $0x4] sm:$0xf]
        %v2756 = vld [vmem:[%s2753 + $0x8] sm:$0xf]
        %v2757 = vld [vmem:[%s2753 + $0xc] sm:$0xf]
        %v2758 = vld [vmem:[%s2753 + $0x10] sm:$0xf]
        %v2759 = vld [vmem:[%s2753 + $0x14] sm:$0xf]
        %v2760 = vld [vmem:[%s2753 + $0x18] sm:$0xf]
        %v2761 = vld [vmem:[%s2753 + $0x1c] sm:$0xf]
        %v2770 = vunpack.c.l.b16 %v2754
        %v2771 = vunpack.c.l.b16 %v2755
        %v2772 = vunpack.c.l.b16 %v2756
        %v2773 = vunpack.c.l.b16 %v2757
        %v2774 = vunpack.c.l.b16 %v2758
        %v2775 = vunpack.c.l.b16 %v2759
        %v2776 = vunpack.c.l.b16 %v2760
        %v2777 = vunpack.c.l.b16 %v2761
        %v2778 = vpack.c.b16 %v2771, %v2770
        %v2779 = vpack.c.b16 %v2773, %v2772
        %v2780 = vpack.c.b16 %v2775, %v2774
        %v2781 = vpack.c.b16 %v2777, %v2776
        %v2787 = vsel %vm767, %v2735, 0
        %v2790 = vsel %vm767, %v2736, 0
        %v2793 = vsel %vm767, %v2737, 0
        %v2796 = vsel %vm767, %v2738, 0
        %v2799 = vsel %vm767, %v2739, 0
        %v2802 = vsel %vm767, %v2740, 0
        %v2805 = vsel %vm767, %v2741, 0
        %v2808 = vsel %vm767, %v2742, 0
        %v2811 = vsel %vm767, %v2743, 0
        %v2814 = vsel %vm767, %v2744, 0
        %v2817 = vsel %vm767, %v2745, 0
        %v2820 = vsel %vm767, %v2746, 0
        %v2823 = vsel %vm767, %v2747, 0
        %v2826 = vsel %vm767, %v2748, 0
        %v2829 = vsel %vm767, %v2749, 0
        %v2832 = vsel %vm767, %v2750, 0
        %2834 = vmatprep.subr.bf16.mxu0 0
        %2835 = vmatpush1.bf16.msra.mxu0 %v2778
        %2836 = vmatprep.subr.bf16.mxu0 0
        %2837 = vmatpush1.bf16.msra.mxu0 %v2779
        %2838 = vmatprep.subr.bf16.mxu0 0
        %2839 = vmatpush1.bf16.msra.mxu0 %v2780
        %2840 = vmatprep.subr.bf16.mxu0 0
        %2841 = vmatpush1.bf16.msra.mxu0 %v2781
        %2842 = vmatprep.subr.bf16.mxu0 0
        %2843 = vmatpush1.bf16.msra.mxu0 0
        %2844 = vmatprep.subr.bf16.mxu0 0
        %2845 = vmatpush1.bf16.msra.mxu0 0
        %2846 = vmatprep.subr.bf16.mxu0 0
        %2847 = vmatpush1.bf16.msra.mxu0 0
        %2848 = vmatprep.subr.bf16.mxu0 0
        %2849 = vmatpush1.bf16.msra.mxu0 0
        %2850 = vmatprep.subr.bf16.mxu0 0
        %2851 = vmatpush1.bf16.msra.mxu0 0
        %2852 = vmatprep.subr.bf16.mxu0 0
        %2853 = vmatpush1.bf16.msra.mxu0 0
        %2854 = vmatprep.subr.bf16.mxu0 0
        %2855 = vmatpush1.bf16.msra.mxu0 0
        %2856 = vmatprep.subr.bf16.mxu0 0
        %2857 = vmatpush1.bf16.msra.mxu0 0
        %2858 = vmatprep.subr.bf16.mxu0 0
        %2859 = vmatpush1.bf16.msra.mxu0 0
        %2860 = vmatprep.subr.bf16.mxu0 0
        %2861 = vmatpush1.bf16.msra.mxu0 0
        %2862 = vmatprep.subr.bf16.mxu0 0
        %2863 = vmatpush1.bf16.msra.mxu0 0
        %2864 = vmatprep.subr.bf16.mxu0 0
        %2865 = vmatpush1.bf16.msra.mxu0 0
        %2866 = vmatprep.mubr.bf16.mxu0 0
        %2867 = vmatmul.mubr.bf16.gmra.mrb[0].mxu0 %v2787
        %v2868 = vpop.f32.mrb[0].mxu0
        %v2869 = vadd.f32 0.0, %v2868
        %v2870 = vpop.f32.mrb[0].mxu0
        %v2871 = vpop.f32.mrb[0].mxu0
        %v2872 = vadd.f32 0.0, %v2871
        %v2873 = vpop.f32.mrb[0].mxu0
        %2874 = vmatprep.mubr.bf16.mxu0 0
        %2875 = vmatmul.mubr.bf16.gmra.mrb[0].mxu0 %v2790
        %v2876 = vpop.f32.mrb[0].mxu0
        %v2877 = vadd.f32 0.0, %v2876
        %v2878 = vpop.f32.mrb[0].mxu0
        %v2879 = vpop.f32.mrb[0].mxu0
        %v2880 = vadd.f32 0.0, %v2879
        %v2881 = vpop.f32.mrb[0].mxu0
        %2882 = vmatprep.mubr.bf16.mxu0 0
        %2883 = vmatmul.mubr.bf16.gmra.mrb[0].mxu0 %v2793
        %v2884 = vpop.f32.mrb[0].mxu0
        %v2885 = vadd.f32 0.0, %v2884
        %v2886 = vpop.f32.mrb[0].mxu0
        %v2887 = vpop.f32.mrb[0].mxu0
        %v2888 = vadd.f32 0.0, %v2887
        %v2889 = vpop.f32.mrb[0].mxu0
        %2890 = vmatprep.mubr.bf16.mxu0 0
        %2891 = vmatmul.mubr.bf16.gmra.mrb[0].mxu0 %v2796
        %v2892 = vpop.f32.mrb[0].mxu0
        %v2893 = vadd.f32 0.0, %v2892
        %v2894 = vpop.f32.mrb[0].mxu0
        %v2895 = vpop.f32.mrb[0].mxu0
        %v2896 = vadd.f32 0.0, %v2895
        %v2897 = vpop.f32.mrb[0].mxu0
        %2898 = vmatprep.mubr.bf16.mxu0 0
        %2899 = vmatmul.mubr.bf16.gmra.mrb[0].mxu0 %v2799
        %v2900 = vpop.f32.mrb[0].mxu0
        %v2901 = vadd.f32 0.0, %v2900
        %v2902 = vpop.f32.mrb[0].mxu0
        %v2903 = vpop.f32.mrb[0].mxu0
        %v2904 = vadd.f32 0.0, %v2903
        %v2905 = vpop.f32.mrb[0].mxu0
        %2906 = vmatprep.mubr.bf16.mxu0 0
        %2907 = vmatmul.mubr.bf16.gmra.mrb[0].mxu0 %v2802
        %v2908 = vpop.f32.mrb[0].mxu0
        %v2909 = vadd.f32 0.0, %v2908
        %v2910 = vpop.f32.mrb[0].mxu0
        %v2911 = vpop.f32.mrb[0].mxu0
        %v2912 = vadd.f32 0.0, %v2911
        %v2913 = vpop.f32.mrb[0].mxu0
        %2914 = vmatprep.mubr.bf16.mxu0 0
        %2915 = vmatmul.mubr.bf16.gmra.mrb[0].mxu0 %v2805
        %v2916 = vpop.f32.mrb[0].mxu0
        %v2917 = vadd.f32 0.0, %v2916
        %v2918 = vpop.f32.mrb[0].mxu0
        %v2919 = vpop.f32.mrb[0].mxu0
        %v2920 = vadd.f32 0.0, %v2919
        %v2921 = vpop.f32.mrb[0].mxu0
        %2922 = vmatprep.mubr.bf16.mxu0 0
        %2923 = vmatmul.mubr.bf16.gmra.mrb[0].mxu0 %v2808
        %v2924 = vpop.f32.mrb[0].mxu0
        %v2925 = vadd.f32 0.0, %v2924
        %v2926 = vpop.f32.mrb[0].mxu0
        %v2927 = vpop.f32.mrb[0].mxu0
        %v2928 = vadd.f32 0.0, %v2927
        %v2929 = vpop.f32.mrb[0].mxu0
        %2930 = vmatprep.mubr.bf16.mxu0 0
        %2931 = vmatmul.mubr.bf16.gmra.mrb[0].mxu0 %v2811
        %v2932 = vpop.f32.mrb[0].mxu0
        %v2933 = vadd.f32 0.0, %v2932
        %v2934 = vpop.f32.mrb[0].mxu0
        %v2935 = vpop.f32.mrb[0].mxu0
        %v2936 = vadd.f32 0.0, %v2935
        %v2937 = vpop.f32.mrb[0].mxu0
        %2938 = vmatprep.mubr.bf16.mxu0 0
        %2939 = vmatmul.mubr.bf16.gmra.mrb[0].mxu0 %v2814
        %v2940 = vpop.f32.mrb[0].mxu0
        %v2941 = vadd.f32 0.0, %v2940
        %v2942 = vpop.f32.mrb[0].mxu0
        %v2943 = vpop.f32.mrb[0].mxu0
        %v2944 = vadd.f32 0.0, %v2943
        %v2945 = vpop.f32.mrb[0].mxu0
        %2946 = vmatprep.mubr.bf16.mxu0 0
        %2947 = vmatmul.mubr.bf16.gmra.mrb[0].mxu0 %v2817
        %v2948 = vpop.f32.mrb[0].mxu0
        %v2949 = vadd.f32 0.0, %v2948
        %v2950 = vpop.f32.mrb[0].mxu0
        %v2951 = vpop.f32.mrb[0].mxu0
        %v2952 = vadd.f32 0.0, %v2951
        %v2953 = vpop.f32.mrb[0].mxu0
        %2954 = vmatprep.mubr.bf16.mxu0 0
        %2955 = vmatmul.mubr.bf16.gmra.mrb[0].mxu0 %v2820
        %v2956 = vpop.f32.mrb[0].mxu0
        %v2957 = vadd.f32 0.0, %v2956
        %v2958 = vpop.f32.mrb[0].mxu0
        %v2959 = vpop.f32.mrb[0].mxu0
        %v2960 = vadd.f32 0.0, %v2959
        %v2961 = vpop.f32.mrb[0].mxu0
        %2962 = vmatprep.mubr.bf16.mxu0 0
        %2963 = vmatmul.mubr.bf16.gmra.mrb[0].mxu0 %v2823
        %v2964 = vpop.f32.mrb[0].mxu0
        %v2965 = vadd.f32 0.0, %v2964
        %v2966 = vpop.f32.mrb[0].mxu0
        %v2967 = vpop.f32.mrb[0].mxu0
        %v2968 = vadd.f32 0.0, %v2967
        %v2969 = vpop.f32.mrb[0].mxu0
        %2970 = vmatprep.mubr.bf16.mxu0 0
        %2971 = vmatmul.mubr.bf16.gmra.mrb[0].mxu0 %v2826
        %v2972 = vpop.f32.mrb[0].mxu0
        %v2973 = vadd.f32 0.0, %v2972
        %v2974 = vpop.f32.mrb[0].mxu0
        %v2975 = vpop.f32.mrb[0].mxu0
        %v2976 = vadd.f32 0.0, %v2975
        %v2977 = vpop.f32.mrb[0].mxu0
        %2978 = vmatprep.mubr.bf16.mxu0 0
        %2979 = vmatmul.mubr.bf16.gmra.mrb[0].mxu0 %v2829
        %v2980 = vpop.f32.mrb[0].mxu0
        %v2981 = vadd.f32 0.0, %v2980
        %v2982 = vpop.f32.mrb[0].mxu0
        %v2983 = vpop.f32.mrb[0].mxu0
        %v2984 = vadd.f32 0.0, %v2983
        %v2985 = vpop.f32.mrb[0].mxu0
        %2986 = vmatprep.mubr.bf16.mxu0 0
        %2987 = vmatmul.mubr.bf16.gmra.mrb[0].mxu0 %v2832
        %v2988 = vpop.f32.mrb[0].mxu0
        %v2989 = vadd.f32 0.0, %v2988
        %v2990 = vpop.f32.mrb[0].mxu0
        %v2991 = vpop.f32.mrb[0].mxu0
        %v2992 = vadd.f32 0.0, %v2991
        %v2993 = vpop.f32.mrb[0].mxu0
        %2994 = vdwg.mxu0
        %v2995 = vadd.f32 %v2667, %v2869
        %v2996 = vadd.f32 %v2668, %v2872
        %v2997 = vadd.f32 %v2669, %v2877
        %v2998 = vadd.f32 %v2670, %v2880
        %v2999 = vadd.f32 %v2671, %v2885
        %v3000 = vadd.f32 %v2672, %v2888
        %v3001 = vadd.f32 %v2673, %v2893
        %v3002 = vadd.f32 %v2674, %v2896
        %v3003 = vadd.f32 %v2675, %v2901
        %v3004 = vadd.f32 %v2676, %v2904
        %v3005 = vadd.f32 %v2677, %v2909
        %v3006 = vadd.f32 %v2678, %v2912
        %v3007 = vadd.f32 %v2679, %v2917
        %v3008 = vadd.f32 %v2680, %v2920
        %v3009 = vadd.f32 %v2681, %v2925
        %v3010 = vadd.f32 %v2682, %v2928
        %v3011 = vadd.f32 %v2683, %v2933
        %v3012 = vadd.f32 %v2684, %v2936
        %v3013 = vadd.f32 %v2685, %v2941
        %v3014 = vadd.f32 %v2686, %v2944
        %v3015 = vadd.f32 %v2687, %v2949
        %v3016 = vadd.f32 %v2688, %v2952
        %v3017 = vadd.f32 %v2689, %v2957
        %v3018 = vadd.f32 %v2690, %v2960
        %v3019 = vadd.f32 %v2691, %v2965
        %v3020 = vadd.f32 %v2692, %v2968
        %v3021 = vadd.f32 %v2693, %v2973
        %v3022 = vadd.f32 %v2694, %v2976
        %v3023 = vadd.f32 %v2695, %v2981
        %v3024 = vadd.f32 %v2696, %v2984
        %v3025 = vadd.f32 %v2697, %v2989
        %v3026 = vadd.f32 %v2698, %v2992
        %s3027 = scalar_lea.vmem [#allocation6], 160
        %v3028 = vld [vmem:[%s3027] sm:$0xf]
        %v3029 = vld [vmem:[%s3027 + $0x4] sm:$0xf]
        %v3030 = vld [vmem:[%s3027 + $0x8] sm:$0xf]
        %v3031 = vld [vmem:[%s3027 + $0xc] sm:$0xf]
        %v3032 = vld [vmem:[%s3027 + $0x10] sm:$0xf]
        %v3033 = vld [vmem:[%s3027 + $0x14] sm:$0xf]
        %v3034 = vld [vmem:[%s3027 + $0x18] sm:$0xf]
        %v3035 = vld [vmem:[%s3027 + $0x1c] sm:$0xf]
        %v3044 = vunpack.c.l.b16 %v3028
        %v3045 = vunpack.c.l.b16 %v3029
        %v3046 = vunpack.c.l.b16 %v3030
        %v3047 = vunpack.c.l.b16 %v3031
        %v3048 = vunpack.c.l.b16 %v3032
        %v3049 = vunpack.c.l.b16 %v3033
        %v3050 = vunpack.c.l.b16 %v3034
        %v3051 = vunpack.c.l.b16 %v3035
        %v3052 = vpack.c.b16 %v3045, %v3044
        %v3053 = vpack.c.b16 %v3047, %v3046
        %v3054 = vpack.c.b16 %v3049, %v3048
        %v3055 = vpack.c.b16 %v3051, %v3050
        %v3061 = vsel %vm767, %v2751, 0
        %3063 = vmatprep.subr.bf16.mxu0 0
        %3064 = vmatpush1.bf16.msra.mxu0 %v3052
        %3065 = vmatprep.subr.bf16.mxu0 0
        %3066 = vmatpush1.bf16.msra.mxu0 %v3053
        %3067 = vmatprep.subr.bf16.mxu0 0
        %3068 = vmatpush1.bf16.msra.mxu0 %v3054
        %3069 = vmatprep.subr.bf16.mxu0 0
        %3070 = vmatpush1.bf16.msra.mxu0 %v3055
        %3071 = vmatprep.subr.bf16.mxu0 0
        %3072 = vmatpush1.bf16.msra.mxu0 0
        %3073 = vmatprep.subr.bf16.mxu0 0
        %3074 = vmatpush1.bf16.msra.mxu0 0
        %3075 = vmatprep.subr.bf16.mxu0 0
        %3076 = vmatpush1.bf16.msra.mxu0 0
        %3077 = vmatprep.subr.bf16.mxu0 0
        %3078 = vmatpush1.bf16.msra.mxu0 0
        %3079 = vmatprep.subr.bf16.mxu0 0
        %3080 = vmatpush1.bf16.msra.mxu0 0
        %3081 = vmatprep.subr.bf16.mxu0 0
        %3082 = vmatpush1.bf16.msra.mxu0 0
        %3083 = vmatprep.subr.bf16.mxu0 0
        %3084 = vmatpush1.bf16.msra.mxu0 0
        %3085 = vmatprep.subr.bf16.mxu0 0
        %3086 = vmatpush1.bf16.msra.mxu0 0
        %3087 = vmatprep.subr.bf16.mxu0 0
        %3088 = vmatpush1.bf16.msra.mxu0 0
        %3089 = vmatprep.subr.bf16.mxu0 0
        %3090 = vmatpush1.bf16.msra.mxu0 0
        %3091 = vmatprep.subr.bf16.mxu0 0
        %3092 = vmatpush1.bf16.msra.mxu0 0
        %3093 = vmatprep.subr.bf16.mxu0 0
        %3094 = vmatpush1.bf16.msra.mxu0 0
        %3095 = vmatprep.mubr.bf16.mxu0 0
        %3096 = vmatmul.mubr.bf16.gmra.mrb[0].mxu0 %v2790
        %v3097 = vpop.f32.mrb[0].mxu0
        %v3098 = vadd.f32 0.0, %v3097
        %v3099 = vpop.f32.mrb[0].mxu0
        %v3100 = vpop.f32.mrb[0].mxu0
        %v3101 = vadd.f32 0.0, %v3100
        %v3102 = vpop.f32.mrb[0].mxu0
        %3103 = vmatprep.mubr.bf16.mxu0 0
        %3104 = vmatmul.mubr.bf16.gmra.mrb[0].mxu0 %v2793
        %v3105 = vpop.f32.mrb[0].mxu0
        %v3106 = vadd.f32 0.0, %v3105
        %v3107 = vpop.f32.mrb[0].mxu0
        %v3108 = vpop.f32.mrb[0].mxu0
        %v3109 = vadd.f32 0.0, %v3108
        %v3110 = vpop.f32.mrb[0].mxu0
        %3111 = vmatprep.mubr.bf16.mxu0 0
        %3112 = vmatmul.mubr.bf16.gmra.mrb[0].mxu0 %v2796
        %v3113 = vpop.f32.mrb[0].mxu0
        %v3114 = vadd.f32 0.0, %v3113
        %v3115 = vpop.f32.mrb[0].mxu0
        %v3116 = vpop.f32.mrb[0].mxu0
        %v3117 = vadd.f32 0.0, %v3116
        %v3118 = vpop.f32.mrb[0].mxu0
        %3119 = vmatprep.mubr.bf16.mxu0 0
        %3120 = vmatmul.mubr.bf16.gmra.mrb[0].mxu0 %v2799
        %v3121 = vpop.f32.mrb[0].mxu0
        %v3122 = vadd.f32 0.0, %v3121
        %v3123 = vpop.f32.mrb[0].mxu0
        %v3124 = vpop.f32.mrb[0].mxu0
        %v3125 = vadd.f32 0.0, %v3124
        %v3126 = vpop.f32.mrb[0].mxu0
        %3127 = vmatprep.mubr.bf16.mxu0 0
        %3128 = vmatmul.mubr.bf16.gmra.mrb[0].mxu0 %v2802
        %v3129 = vpop.f32.mrb[0].mxu0
        %v3130 = vadd.f32 0.0, %v3129
        %v3131 = vpop.f32.mrb[0].mxu0
        %v3132 = vpop.f32.mrb[0].mxu0
        %v3133 = vadd.f32 0.0, %v3132
        %v3134 = vpop.f32.mrb[0].mxu0
        %3135 = vmatprep.mubr.bf16.mxu0 0
        %3136 = vmatmul.mubr.bf16.gmra.mrb[0].mxu0 %v2805
        %v3137 = vpop.f32.mrb[0].mxu0
        %v3138 = vadd.f32 0.0, %v3137
        %v3139 = vpop.f32.mrb[0].mxu0
        %v3140 = vpop.f32.mrb[0].mxu0
        %v3141 = vadd.f32 0.0, %v3140
        %v3142 = vpop.f32.mrb[0].mxu0
        %3143 = vmatprep.mubr.bf16.mxu0 0
        %3144 = vmatmul.mubr.bf16.gmra.mrb[0].mxu0 %v2808
        %v3145 = vpop.f32.mrb[0].mxu0
        %v3146 = vadd.f32 0.0, %v3145
        %v3147 = vpop.f32.mrb[0].mxu0
        %v3148 = vpop.f32.mrb[0].mxu0
        %v3149 = vadd.f32 0.0, %v3148
        %v3150 = vpop.f32.mrb[0].mxu0
        %3151 = vmatprep.mubr.bf16.mxu0 0
        %3152 = vmatmul.mubr.bf16.gmra.mrb[0].mxu0 %v2811
        %v3153 = vpop.f32.mrb[0].mxu0
        %v3154 = vadd.f32 0.0, %v3153
        %v3155 = vpop.f32.mrb[0].mxu0
        %v3156 = vpop.f32.mrb[0].mxu0
        %v3157 = vadd.f32 0.0, %v3156
        %v3158 = vpop.f32.mrb[0].mxu0
        %3159 = vmatprep.mubr.bf16.mxu0 0
        %3160 = vmatmul.mubr.bf16.gmra.mrb[0].mxu0 %v2814
        %v3161 = vpop.f32.mrb[0].mxu0
        %v3162 = vadd.f32 0.0, %v3161
        %v3163 = vpop.f32.mrb[0].mxu0
        %v3164 = vpop.f32.mrb[0].mxu0
        %v3165 = vadd.f32 0.0, %v3164
        %v3166 = vpop.f32.mrb[0].mxu0
        %3167 = vmatprep.mubr.bf16.mxu0 0
        %3168 = vmatmul.mubr.bf16.gmra.mrb[0].mxu0 %v2817
        %v3169 = vpop.f32.mrb[0].mxu0
        %v3170 = vadd.f32 0.0, %v3169
        %v3171 = vpop.f32.mrb[0].mxu0
        %v3172 = vpop.f32.mrb[0].mxu0
        %v3173 = vadd.f32 0.0, %v3172
        %v3174 = vpop.f32.mrb[0].mxu0
        %3175 = vmatprep.mubr.bf16.mxu0 0
        %3176 = vmatmul.mubr.bf16.gmra.mrb[0].mxu0 %v2820
        %v3177 = vpop.f32.mrb[0].mxu0
        %v3178 = vadd.f32 0.0, %v3177
        %v3179 = vpop.f32.mrb[0].mxu0
        %v3180 = vpop.f32.mrb[0].mxu0
        %v3181 = vadd.f32 0.0, %v3180
        %v3182 = vpop.f32.mrb[0].mxu0
        %3183 = vmatprep.mubr.bf16.mxu0 0
        %3184 = vmatmul.mubr.bf16.gmra.mrb[0].mxu0 %v2823
        %v3185 = vpop.f32.mrb[0].mxu0
        %v3186 = vadd.f32 0.0, %v3185
        %v3187 = vpop.f32.mrb[0].mxu0
        %v3188 = vpop.f32.mrb[0].mxu0
        %v3189 = vadd.f32 0.0, %v3188
        %v3190 = vpop.f32.mrb[0].mxu0
        %3191 = vmatprep.mubr.bf16.mxu0 0
        %3192 = vmatmul.mubr.bf16.gmra.mrb[0].mxu0 %v2826
        %v3193 = vpop.f32.mrb[0].mxu0
        %v3194 = vadd.f32 0.0, %v3193
        %v3195 = vpop.f32.mrb[0].mxu0
        %v3196 = vpop.f32.mrb[0].mxu0
        %v3197 = vadd.f32 0.0, %v3196
        %v3198 = vpop.f32.mrb[0].mxu0
        %3199 = vmatprep.mubr.bf16.mxu0 0
        %3200 = vmatmul.mubr.bf16.gmra.mrb[0].mxu0 %v2829
        %v3201 = vpop.f32.mrb[0].mxu0
        %v3202 = vadd.f32 0.0, %v3201
        %v3203 = vpop.f32.mrb[0].mxu0
        %v3204 = vpop.f32.mrb[0].mxu0
        %v3205 = vadd.f32 0.0, %v3204
        %v3206 = vpop.f32.mrb[0].mxu0
        %3207 = vmatprep.mubr.bf16.mxu0 0
        %3208 = vmatmul.mubr.bf16.gmra.mrb[0].mxu0 %v2832
        %v3209 = vpop.f32.mrb[0].mxu0
        %v3210 = vadd.f32 0.0, %v3209
        %v3211 = vpop.f32.mrb[0].mxu0
        %v3212 = vpop.f32.mrb[0].mxu0
        %v3213 = vadd.f32 0.0, %v3212
        %v3214 = vpop.f32.mrb[0].mxu0
        %3215 = vmatprep.mubr.bf16.mxu0 0
        %3216 = vmatmul.mubr.bf16.gmra.mrb[0].mxu0 %v3061
        %v3217 = vpop.f32.mrb[0].mxu0
        %v3218 = vadd.f32 0.0, %v3217
        %v3219 = vpop.f32.mrb[0].mxu0
        %v3220 = vpop.f32.mrb[0].mxu0
        %v3221 = vadd.f32 0.0, %v3220
        %v3222 = vpop.f32.mrb[0].mxu0
        %3223 = vdwg.mxu0
        %v3224 = vadd.f32 %v2995, %v3098
        %v3225 = vadd.f32 %v2996, %v3101
        %v3226 = vadd.f32 %v2997, %v3106
        %v3227 = vadd.f32 %v2998, %v3109
        %v3228 = vadd.f32 %v2999, %v3114
        %v3229 = vadd.f32 %v3000, %v3117
        %v3230 = vadd.f32 %v3001, %v3122
        %v3231 = vadd.f32 %v3002, %v3125
        %v3232 = vadd.f32 %v3003, %v3130
        %v3233 = vadd.f32 %v3004, %v3133
        %v3234 = vadd.f32 %v3005, %v3138
        %v3235 = vadd.f32 %v3006, %v3141
        %v3236 = vadd.f32 %v3007, %v3146
        %v3237 = vadd.f32 %v3008, %v3149
        %v3238 = vadd.f32 %v3009, %v3154
        %v3239 = vadd.f32 %v3010, %v3157
        %v3240 = vadd.f32 %v3011, %v3162
        %v3241 = vadd.f32 %v3012, %v3165
        %v3242 = vadd.f32 %v3013, %v3170
        %v3243 = vadd.f32 %v3014, %v3173
        %v3244 = vadd.f32 %v3015, %v3178
        %v3245 = vadd.f32 %v3016, %v3181
        %v3246 = vadd.f32 %v3017, %v3186
        %v3247 = vadd.f32 %v3018, %v3189
        %v3248 = vadd.f32 %v3019, %v3194
        %v3249 = vadd.f32 %v3020, %v3197
        %v3250 = vadd.f32 %v3021, %v3202
        %v3251 = vadd.f32 %v3022, %v3205
        %v3252 = vadd.f32 %v3023, %v3210
        %v3253 = vadd.f32 %v3024, %v3213
        %v3254 = vadd.f32 %v3025, %v3218
        %v3255 = vadd.f32 %v3026, %v3221
        %s3256 = scalar_lea.vmem [#allocation6], 256
        %v3257 = vld [vmem:[%s3256] sm:$0xf]
        %v3258 = vld [vmem:[%s3256 + $0x4] sm:$0xf]
        %v3259 = vld [vmem:[%s3256 + $0x8] sm:$0xf]
        %v3260 = vld [vmem:[%s3256 + $0xc] sm:$0xf]
        %v3261 = vld [vmem:[%s3256 + $0x10] sm:$0xf]
        %v3262 = vld [vmem:[%s3256 + $0x14] sm:$0xf]
        %v3263 = vld [vmem:[%s3256 + $0x18] sm:$0xf]
        %v3264 = vld [vmem:[%s3256 + $0x1c] sm:$0xf]
        %v3273 = vunpack.c.l.b16 %v3257
        %v3274 = vunpack.c.l.b16 %v3258
        %v3275 = vunpack.c.l.b16 %v3259
        %v3276 = vunpack.c.l.b16 %v3260
        %v3277 = vunpack.c.l.b16 %v3261
        %v3278 = vunpack.c.l.b16 %v3262
        %v3279 = vunpack.c.l.b16 %v3263
        %v3280 = vunpack.c.l.b16 %v3264
        %v3281 = vpack.c.b16 %v3274, %v3273
        %v3282 = vpack.c.b16 %v3276, %v3275
        %v3283 = vpack.c.b16 %v3278, %v3277
        %v3284 = vpack.c.b16 %v3280, %v3279
        %v3290 = vsel %vm767, %v2752, 0
        %3292 = vmatprep.subr.bf16.mxu0 0
        %3293 = vmatpush1.bf16.msra.mxu0 %v3281
        %3294 = vmatprep.subr.bf16.mxu0 0
        %3295 = vmatpush1.bf16.msra.mxu0 %v3282
        %3296 = vmatprep.subr.bf16.mxu0 0
        %3297 = vmatpush1.bf16.msra.mxu0 %v3283
        %3298 = vmatprep.subr.bf16.mxu0 0
        %3299 = vmatpush1.bf16.msra.mxu0 %v3284
        %3300 = vmatprep.subr.bf16.mxu0 0
        %3301 = vmatpush1.bf16.msra.mxu0 0
        %3302 = vmatprep.subr.bf16.mxu0 0
        %3303 = vmatpush1.bf16.msra.mxu0 0
        %3304 = vmatprep.subr.bf16.mxu0 0
        %3305 = vmatpush1.bf16.msra.mxu0 0
        %3306 = vmatprep.subr.bf16.mxu0 0
        %3307 = vmatpush1.bf16.msra.mxu0 0
        %3308 = vmatprep.subr.bf16.mxu0 0
        %3309 = vmatpush1.bf16.msra.mxu0 0
        %3310 = vmatprep.subr.bf16.mxu0 0
        %3311 = vmatpush1.bf16.msra.mxu0 0
        %3312 = vmatprep.subr.bf16.mxu0 0
        %3313 = vmatpush1.bf16.msra.mxu0 0
        %3314 = vmatprep.subr.bf16.mxu0 0
        %3315 = vmatpush1.bf16.msra.mxu0 0
        %3316 = vmatprep.subr.bf16.mxu0 0
        %3317 = vmatpush1.bf16.msra.mxu0 0
        %3318 = vmatprep.subr.bf16.mxu0 0
        %3319 = vmatpush1.bf16.msra.mxu0 0
        %3320 = vmatprep.subr.bf16.mxu0 0
        %3321 = vmatpush1.bf16.msra.mxu0 0
        %3322 = vmatprep.subr.bf16.mxu0 0
        %3323 = vmatpush1.bf16.msra.mxu0 0
        %3324 = vmatprep.mubr.bf16.mxu0 0
        %3325 = vmatmul.mubr.bf16.gmra.mrb[0].mxu0 %v2793
        %v3326 = vpop.f32.mrb[0].mxu0
        %v3327 = vadd.f32 0.0, %v3326
        %v3328 = vpop.f32.mrb[0].mxu0
        %v3329 = vpop.f32.mrb[0].mxu0
        %v3330 = vadd.f32 0.0, %v3329
        %v3331 = vpop.f32.mrb[0].mxu0
        %3332 = vmatprep.mubr.bf16.mxu0 0
        %3333 = vmatmul.mubr.bf16.gmra.mrb[0].mxu0 %v2796
        %v3334 = vpop.f32.mrb[0].mxu0
        %v3335 = vadd.f32 0.0, %v3334
        %v3336 = vpop.f32.mrb[0].mxu0
        %v3337 = vpop.f32.mrb[0].mxu0
        %v3338 = vadd.f32 0.0, %v3337
        %v3339 = vpop.f32.mrb[0].mxu0
        %3340 = vmatprep.mubr.bf16.mxu0 0
        %3341 = vmatmul.mubr.bf16.gmra.mrb[0].mxu0 %v2799
        %v3342 = vpop.f32.mrb[0].mxu0
        %v3343 = vadd.f32 0.0, %v3342
        %v3344 = vpop.f32.mrb[0].mxu0
        %v3345 = vpop.f32.mrb[0].mxu0
        %v3346 = vadd.f32 0.0, %v3345
        %v3347 = vpop.f32.mrb[0].mxu0
        %3348 = vmatprep.mubr.bf16.mxu0 0
        %3349 = vmatmul.mubr.bf16.gmra.mrb[0].mxu0 %v2802
        %v3350 = vpop.f32.mrb[0].mxu0
        %v3351 = vadd.f32 0.0, %v3350
        %v3352 = vpop.f32.mrb[0].mxu0
        %v3353 = vpop.f32.mrb[0].mxu0
        %v3354 = vadd.f32 0.0, %v3353
        %v3355 = vpop.f32.mrb[0].mxu0
        %3356 = vmatprep.mubr.bf16.mxu0 0
        %3357 = vmatmul.mubr.bf16.gmra.mrb[0].mxu0 %v2805
        %v3358 = vpop.f32.mrb[0].mxu0
        %v3359 = vadd.f32 0.0, %v3358
        %v3360 = vpop.f32.mrb[0].mxu0
        %v3361 = vpop.f32.mrb[0].mxu0
        %v3362 = vadd.f32 0.0, %v3361
        %v3363 = vpop.f32.mrb[0].mxu0
        %3364 = vmatprep.mubr.bf16.mxu0 0
        %3365 = vmatmul.mubr.bf16.gmra.mrb[0].mxu0 %v2808
        %v3366 = vpop.f32.mrb[0].mxu0
        %v3367 = vadd.f32 0.0, %v3366
        %v3368 = vpop.f32.mrb[0].mxu0
        %v3369 = vpop.f32.mrb[0].mxu0
        %v3370 = vadd.f32 0.0, %v3369
        %v3371 = vpop.f32.mrb[0].mxu0
        %3372 = vmatprep.mubr.bf16.mxu0 0
        %3373 = vmatmul.mubr.bf16.gmra.mrb[0].mxu0 %v2811
        %v3374 = vpop.f32.mrb[0].mxu0
        %v3375 = vadd.f32 0.0, %v3374
        %v3376 = vpop.f32.mrb[0].mxu0
        %v3377 = vpop.f32.mrb[0].mxu0
        %v3378 = vadd.f32 0.0, %v3377
        %v3379 = vpop.f32.mrb[0].mxu0
        %3380 = vmatprep.mubr.bf16.mxu0 0
        %3381 = vmatmul.mubr.bf16.gmra.mrb[0].mxu0 %v2814
        %v3382 = vpop.f32.mrb[0].mxu0
        %v3383 = vadd.f32 0.0, %v3382
        %v3384 = vpop.f32.mrb[0].mxu0
        %v3385 = vpop.f32.mrb[0].mxu0
        %v3386 = vadd.f32 0.0, %v3385
        %v3387 = vpop.f32.mrb[0].mxu0
        %3388 = vmatprep.mubr.bf16.mxu0 0
        %3389 = vmatmul.mubr.bf16.gmra.mrb[0].mxu0 %v2817
        %v3390 = vpop.f32.mrb[0].mxu0
        %v3391 = vadd.f32 0.0, %v3390
        %v3392 = vpop.f32.mrb[0].mxu0
        %v3393 = vpop.f32.mrb[0].mxu0
        %v3394 = vadd.f32 0.0, %v3393
        %v3395 = vpop.f32.mrb[0].mxu0
        %3396 = vmatprep.mubr.bf16.mxu0 0
        %3397 = vmatmul.mubr.bf16.gmra.mrb[0].mxu0 %v2820
        %v3398 = vpop.f32.mrb[0].mxu0
        %v3399 = vadd.f32 0.0, %v3398
        %v3400 = vpop.f32.mrb[0].mxu0
        %v3401 = vpop.f32.mrb[0].mxu0
        %v3402 = vadd.f32 0.0, %v3401
        %v3403 = vpop.f32.mrb[0].mxu0
        %3404 = vmatprep.mubr.bf16.mxu0 0
        %3405 = vmatmul.mubr.bf16.gmra.mrb[0].mxu0 %v2823
        %v3406 = vpop.f32.mrb[0].mxu0
        %v3407 = vadd.f32 0.0, %v3406
        %v3408 = vpop.f32.mrb[0].mxu0
        %v3409 = vpop.f32.mrb[0].mxu0
        %v3410 = vadd.f32 0.0, %v3409
        %v3411 = vpop.f32.mrb[0].mxu0
        %3412 = vmatprep.mubr.bf16.mxu0 0
        %3413 = vmatmul.mubr.bf16.gmra.mrb[0].mxu0 %v2826
        %v3414 = vpop.f32.mrb[0].mxu0
        %v3415 = vadd.f32 0.0, %v3414
        %v3416 = vpop.f32.mrb[0].mxu0
        %v3417 = vpop.f32.mrb[0].mxu0
        %v3418 = vadd.f32 0.0, %v3417
        %v3419 = vpop.f32.mrb[0].mxu0
        %3420 = vmatprep.mubr.bf16.mxu0 0
        %3421 = vmatmul.mubr.bf16.gmra.mrb[0].mxu0 %v2829
        %v3422 = vpop.f32.mrb[0].mxu0
        %v3423 = vadd.f32 0.0, %v3422
        %v3424 = vpop.f32.mrb[0].mxu0
        %v3425 = vpop.f32.mrb[0].mxu0
        %v3426 = vadd.f32 0.0, %v3425
        %v3427 = vpop.f32.mrb[0].mxu0
        %3428 = vmatprep.mubr.bf16.mxu0 0
        %3429 = vmatmul.mubr.bf16.gmra.mrb[0].mxu0 %v2832
        %v3430 = vpop.f32.mrb[0].mxu0
        %v3431 = vadd.f32 0.0, %v3430
        %v3432 = vpop.f32.mrb[0].mxu0
        %v3433 = vpop.f32.mrb[0].mxu0
        %v3434 = vadd.f32 0.0, %v3433
        %v3435 = vpop.f32.mrb[0].mxu0
        %3436 = vmatprep.mubr.bf16.mxu0 0
        %3437 = vmatmul.mubr.bf16.gmra.mrb[0].mxu0 %v3061
        %v3438 = vpop.f32.mrb[0].mxu0
        %v3439 = vadd.f32 0.0, %v3438
        %v3440 = vpop.f32.mrb[0].mxu0
        %v3441 = vpop.f32.mrb[0].mxu0
        %v3442 = vadd.f32 0.0, %v3441
        %v3443 = vpop.f32.mrb[0].mxu0
        %3444 = vmatprep.mubr.bf16.mxu0 0
        %3445 = vmatmul.mubr.bf16.gmra.mrb[0].mxu0 %v3290
        %v3446 = vpop.f32.mrb[0].mxu0
        %v3447 = vadd.f32 0.0, %v3446
        %v3448 = vpop.f32.mrb[0].mxu0
        %v3449 = vpop.f32.mrb[0].mxu0
        %v3450 = vadd.f32 0.0, %v3449
        %v3451 = vpop.f32.mrb[0].mxu0
        %3452 = vdwg.mxu0
        %v3453 = vadd.f32 %v3224, %v3327
        %v3454 = vadd.f32 %v3225, %v3330
        %v3455 = vadd.f32 %v3226, %v3335
        %v3456 = vadd.f32 %v3227, %v3338
        %v3457 = vadd.f32 %v3228, %v3343
        %v3458 = vadd.f32 %v3229, %v3346
        %v3459 = vadd.f32 %v3230, %v3351
        %v3460 = vadd.f32 %v3231, %v3354
        %v3461 = vadd.f32 %v3232, %v3359
        %v3462 = vadd.f32 %v3233, %v3362
        %v3463 = vadd.f32 %v3234, %v3367
        %v3464 = vadd.f32 %v3235, %v3370
        %v3465 = vadd.f32 %v3236, %v3375
        %v3466 = vadd.f32 %v3237, %v3378
        %v3467 = vadd.f32 %v3238, %v3383
        %v3468 = vadd.f32 %v3239, %v3386
        %v3469 = vadd.f32 %v3240, %v3391
        %v3470 = vadd.f32 %v3241, %v3394
        %v3471 = vadd.f32 %v3242, %v3399
        %v3472 = vadd.f32 %v3243, %v3402
        %v3473 = vadd.f32 %v3244, %v3407
        %v3474 = vadd.f32 %v3245, %v3410
        %v3475 = vadd.f32 %v3246, %v3415
        %v3476 = vadd.f32 %v3247, %v3418
        %v3477 = vadd.f32 %v3248, %v3423
        %v3478 = vadd.f32 %v3249, %v3426
        %v3479 = vadd.f32 %v3250, %v3431
        %v3480 = vadd.f32 %v3251, %v3434
        %v3481 = vadd.f32 %v3252, %v3439
        %v3482 = vadd.f32 %v3253, %v3442
        %v3483 = vadd.f32 %v3254, %v3447
        %v3484 = vadd.f32 %v3255, %v3450
        %v3485 = vld [vmem:[%s8] sm:$0x1]
        %v3487 = vlaneseq
        %v3488 = vshrl.u32 %v3487, 7
        %v3489 = vsub.s32 0, %v3488
        %v3490 = vrot.slane %v3485, %v3489
        %v3492 = vadd.f32 %v3453, %v3490
        %v3493 = vadd.f32 %v3454, %v3490
        %v3494 = vadd.f32 %v3455, %v3490
        %v3495 = vadd.f32 %v3456, %v3490
        %v3496 = vadd.f32 %v3457, %v3490
        %v3497 = vadd.f32 %v3458, %v3490
        %v3498 = vadd.f32 %v3459, %v3490
        %v3499 = vadd.f32 %v3460, %v3490
        %v3500 = vadd.f32 %v3461, %v3490
        %v3501 = vadd.f32 %v3462, %v3490
        %v3502 = vadd.f32 %v3463, %v3490
        %v3503 = vadd.f32 %v3464, %v3490
        %v3504 = vadd.f32 %v3465, %v3490
        %v3505 = vadd.f32 %v3466, %v3490
        %v3506 = vadd.f32 %v3467, %v3490
        %v3507 = vadd.f32 %v3468, %v3490
        %v3508 = vadd.f32 %v3469, %v3490
        %v3509 = vadd.f32 %v3470, %v3490
        %v3510 = vadd.f32 %v3471, %v3490
        %v3511 = vadd.f32 %v3472, %v3490
        %v3512 = vadd.f32 %v3473, %v3490
        %v3513 = vadd.f32 %v3474, %v3490
        %v3514 = vadd.f32 %v3475, %v3490
        %v3515 = vadd.f32 %v3476, %v3490
        %v3516 = vadd.f32 %v3477, %v3490
        %v3517 = vadd.f32 %v3478, %v3490
        %v3518 = vadd.f32 %v3479, %v3490
        %v3519 = vadd.f32 %v3480, %v3490
        %v3520 = vadd.f32 %v3481, %v3490
        %v3521 = vadd.f32 %v3482, %v3490
        %v3522 = vadd.f32 %v3483, %v3490
        %v3523 = vadd.f32 %v3484, %v3490
        %v3524 = vld [vmem:[%s9] sm:$0x1]
        %v3526 = vlaneseq
        %v3527 = vshrl.u32 %v3526, 7
        %v3528 = vsub.s32 0, %v3527
        %v3529 = vrot.slane %v3524, %v3528
        %v3531 = vmul.f32 %v3492, %v3529
        %v3532 = vmul.f32 %v3493, %v3529
        %v3533 = vmul.f32 %v3494, %v3529
        %v3534 = vmul.f32 %v3495, %v3529
        %v3535 = vmul.f32 %v3496, %v3529
        %v3536 = vmul.f32 %v3497, %v3529
        %v3537 = vmul.f32 %v3498, %v3529
        %v3538 = vmul.f32 %v3499, %v3529
        %v3539 = vmul.f32 %v3500, %v3529
        %v3540 = vmul.f32 %v3501, %v3529
        %v3541 = vmul.f32 %v3502, %v3529
        %v3542 = vmul.f32 %v3503, %v3529
        %v3543 = vmul.f32 %v3504, %v3529
        %v3544 = vmul.f32 %v3505, %v3529
        %v3545 = vmul.f32 %v3506, %v3529
        %v3546 = vmul.f32 %v3507, %v3529
        %v3547 = vmul.f32 %v3508, %v3529
        %v3548 = vmul.f32 %v3509, %v3529
        %v3549 = vmul.f32 %v3510, %v3529
        %v3550 = vmul.f32 %v3511, %v3529
        %v3551 = vmul.f32 %v3512, %v3529
        %v3552 = vmul.f32 %v3513, %v3529
        %v3553 = vmul.f32 %v3514, %v3529
        %v3554 = vmul.f32 %v3515, %v3529
        %v3555 = vmul.f32 %v3516, %v3529
        %v3556 = vmul.f32 %v3517, %v3529
        %v3557 = vmul.f32 %v3518, %v3529
        %v3558 = vmul.f32 %v3519, %v3529
        %v3559 = vmul.f32 %v3520, %v3529
        %v3560 = vmul.f32 %v3521, %v3529
        %v3561 = vmul.f32 %v3522, %v3529
        %v3562 = vmul.f32 %v3523, %v3529
        %v3563 = vld [vmem:[%s10] sm:$0x1]
        %v3565 = vlaneseq
        %v3566 = vshrl.u32 %v3565, 7
        %v3567 = vsub.s32 0, %v3566
        %v3568 = vrot.slane %v3563, %v3567
        %v3570 = vadd.f32 %v3531, %v3568
        %v3571 = vadd.f32 %v3532, %v3568
        %v3572 = vadd.f32 %v3533, %v3568
        %v3573 = vadd.f32 %v3534, %v3568
        %v3574 = vadd.f32 %v3535, %v3568
        %v3575 = vadd.f32 %v3536, %v3568
        %v3576 = vadd.f32 %v3537, %v3568
        %v3577 = vadd.f32 %v3538, %v3568
        %v3578 = vadd.f32 %v3539, %v3568
        %v3579 = vadd.f32 %v3540, %v3568
        %v3580 = vadd.f32 %v3541, %v3568
        %v3581 = vadd.f32 %v3542, %v3568
        %v3582 = vadd.f32 %v3543, %v3568
        %v3583 = vadd.f32 %v3544, %v3568
        %v3584 = vadd.f32 %v3545, %v3568
        %v3585 = vadd.f32 %v3546, %v3568
        %v3586 = vadd.f32 %v3547, %v3568
        %v3587 = vadd.f32 %v3548, %v3568
        %v3588 = vadd.f32 %v3549, %v3568
        %v3589 = vadd.f32 %v3550, %v3568
        %v3590 = vadd.f32 %v3551, %v3568
        %v3591 = vadd.f32 %v3552, %v3568
        %v3592 = vadd.f32 %v3553, %v3568
        %v3593 = vadd.f32 %v3554, %v3568
        %v3594 = vadd.f32 %v3555, %v3568
        %v3595 = vadd.f32 %v3556, %v3568
        %v3596 = vadd.f32 %v3557, %v3568
        %v3597 = vadd.f32 %v3558, %v3568
        %v3598 = vadd.f32 %v3559, %v3568
        %v3599 = vadd.f32 %v3560, %v3568
        %v3600 = vadd.f32 %v3561, %v3568
        %v3601 = vadd.f32 %v3562, %v3568
        %v3602 = vmax.f32 %v3570, 0.0
        %v3603 = vmax.f32 %v3571, 0.0
        %v3604 = vmax.f32 %v3572, 0.0
        %v3605 = vmax.f32 %v3573, 0.0
        %v3606 = vmax.f32 %v3574, 0.0
        %v3607 = vmax.f32 %v3575, 0.0
        %v3608 = vmax.f32 %v3576, 0.0
        %v3609 = vmax.f32 %v3577, 0.0
        %v3610 = vmax.f32 %v3578, 0.0
        %v3611 = vmax.f32 %v3579, 0.0
        %v3612 = vmax.f32 %v3580, 0.0
        %v3613 = vmax.f32 %v3581, 0.0
        %v3614 = vmax.f32 %v3582, 0.0
        %v3615 = vmax.f32 %v3583, 0.0
        %v3616 = vmax.f32 %v3584, 0.0
        %v3617 = vmax.f32 %v3585, 0.0
        %v3618 = vmax.f32 %v3586, 0.0
        %v3619 = vmax.f32 %v3587, 0.0
        %v3620 = vmax.f32 %v3588, 0.0
        %v3621 = vmax.f32 %v3589, 0.0
        %v3622 = vmax.f32 %v3590, 0.0
        %v3623 = vmax.f32 %v3591, 0.0
        %v3624 = vmax.f32 %v3592, 0.0
        %v3625 = vmax.f32 %v3593, 0.0
        %v3626 = vmax.f32 %v3594, 0.0
        %v3627 = vmax.f32 %v3595, 0.0
        %v3628 = vmax.f32 %v3596, 0.0
        %v3629 = vmax.f32 %v3597, 0.0
        %v3630 = vmax.f32 %v3598, 0.0
        %v3631 = vmax.f32 %v3599, 0.0
        %v3632 = vmax.f32 %v3600, 0.0
        %v3633 = vmax.f32 %v3601, 0.0
        %v3634 = vpack.c.bf16 %v3603, %v3602
        %v3635 = vpack.c.bf16 %v3605, %v3604
        %v3636 = vpack.c.bf16 %v3607, %v3606
        %v3637 = vpack.c.bf16 %v3609, %v3608
        %v3638 = vpack.c.bf16 %v3611, %v3610
        %v3639 = vpack.c.bf16 %v3613, %v3612
        %v3640 = vpack.c.bf16 %v3615, %v3614
        %v3641 = vpack.c.bf16 %v3617, %v3616
        %v3642 = vpack.c.bf16 %v3619, %v3618
        %v3643 = vpack.c.bf16 %v3621, %v3620
        %v3644 = vpack.c.bf16 %v3623, %v3622
        %v3645 = vpack.c.bf16 %v3625, %v3624
        %v3646 = vpack.c.bf16 %v3627, %v3626
        %v3647 = vpack.c.bf16 %v3629, %v3628
        %v3648 = vpack.c.bf16 %v3631, %v3630
        %v3649 = vpack.c.bf16 %v3633, %v3632
        %v3650 = vld [vmem:[#allocation8] sm:$0xf]
        %v3651 = vld [vmem:[#allocation8 + $0x4] sm:$0xf]
        %v3652 = vld [vmem:[#allocation8 + $0x8] sm:$0xf]
        %v3653 = vld [vmem:[#allocation8 + $0xc] sm:$0xf]
        %v3654 = vld [vmem:[#allocation8 + $0x10] sm:$0xf]
        %v3655 = vld [vmem:[#allocation8 + $0x14] sm:$0xf]
        %v3656 = vld [vmem:[#allocation8 + $0x18] sm:$0xf]
        %v3657 = vld [vmem:[#allocation8 + $0x1c] sm:$0xf]
        %v3658 = vld [vmem:[%s12] sm:$0x1]
        %v3660 = vlaneseq
        %v3661 = vshrl.u32 %v3660, 7
        %v3662 = vsub.s32 0, %v3661
        %v3663 = vrot.slane %v3658, %v3662
        %v3673 = vunpack.c.l.b16 %v3650
        %v3674 = vunpack.c.l.b16 %v3651
        %v3675 = vunpack.c.l.b16 %v3652
        %v3676 = vunpack.c.l.b16 %v3653
        %v3677 = vunpack.c.l.b16 %v3654
        %v3678 = vunpack.c.l.b16 %v3655
        %v3679 = vunpack.c.l.b16 %v3656
        %v3680 = vunpack.c.l.b16 %v3657
        %v3681 = vpack.c.b16 %v3674, %v3673
        %v3682 = vpack.c.b16 %v3676, %v3675
        %v3683 = vpack.c.b16 %v3678, %v3677
        %v3684 = vpack.c.b16 %v3680, %v3679
        %v3690 = vsel %vm767, %v3634, 0
        %v3693 = vsel %vm767, %v3635, 0
        %v3696 = vsel %vm767, %v3636, 0
        %v3699 = vsel %vm767, %v3637, 0
        %v3702 = vsel %vm767, %v3638, 0
        %v3705 = vsel %vm767, %v3639, 0
        %v3708 = vsel %vm767, %v3640, 0
        %v3711 = vsel %vm767, %v3641, 0
        %v3714 = vsel %vm767, %v3642, 0
        %v3717 = vsel %vm767, %v3643, 0
        %v3720 = vsel %vm767, %v3644, 0
        %v3723 = vsel %vm767, %v3645, 0
        %v3726 = vsel %vm767, %v3646, 0
        %v3729 = vsel %vm767, %v3647, 0
        %v3732 = vsel %vm767, %v3648, 0
        %v3735 = vsel %vm767, %v3649, 0
        %3737 = vmatprep.subr.bf16.mxu0 0
        %3738 = vmatpush1.bf16.msra.mxu0 %v3681
        %3739 = vmatprep.subr.bf16.mxu0 0
        %3740 = vmatpush1.bf16.msra.mxu0 %v3682
        %3741 = vmatprep.subr.bf16.mxu0 0
        %3742 = vmatpush1.bf16.msra.mxu0 %v3683
        %3743 = vmatprep.subr.bf16.mxu0 0
        %3744 = vmatpush1.bf16.msra.mxu0 %v3684
        %3745 = vmatprep.subr.bf16.mxu0 0
        %3746 = vmatpush1.bf16.msra.mxu0 0
        %3747 = vmatprep.subr.bf16.mxu0 0
        %3748 = vmatpush1.bf16.msra.mxu0 0
        %3749 = vmatprep.subr.bf16.mxu0 0
        %3750 = vmatpush1.bf16.msra.mxu0 0
        %3751 = vmatprep.subr.bf16.mxu0 0
        %3752 = vmatpush1.bf16.msra.mxu0 0
        %3753 = vmatprep.subr.bf16.mxu0 0
        %3754 = vmatpush1.bf16.msra.mxu0 0
        %3755 = vmatprep.subr.bf16.mxu0 0
        %3756 = vmatpush1.bf16.msra.mxu0 0
        %3757 = vmatprep.subr.bf16.mxu0 0
        %3758 = vmatpush1.bf16.msra.mxu0 0
        %3759 = vmatprep.subr.bf16.mxu0 0
        %3760 = vmatpush1.bf16.msra.mxu0 0
        %3761 = vmatprep.subr.bf16.mxu0 0
        %3762 = vmatpush1.bf16.msra.mxu0 0
        %3763 = vmatprep.subr.bf16.mxu0 0
        %3764 = vmatpush1.bf16.msra.mxu0 0
        %3765 = vmatprep.subr.bf16.mxu0 0
        %3766 = vmatpush1.bf16.msra.mxu0 0
        %3767 = vmatprep.subr.bf16.mxu0 0
        %3768 = vmatpush1.bf16.msra.mxu0 0
        %3769 = vmatprep.mubr.bf16.mxu0 0
        %3770 = vmatmul.mubr.bf16.gmra.mrb[0].mxu0 %v3690
        %v3771 = vpop.f32.mrb[0].mxu0
        %v3772 = vadd.f32 %v3663, %v3771
        %v3773 = vpop.f32.mrb[0].mxu0
        %v3774 = vpop.f32.mrb[0].mxu0
        %v3775 = vadd.f32 %v3663, %v3774
        %v3776 = vpop.f32.mrb[0].mxu0
        %3777 = vmatprep.mubr.bf16.mxu0 0
        %3778 = vmatmul.mubr.bf16.gmra.mrb[0].mxu0 %v3693
        %v3779 = vpop.f32.mrb[0].mxu0
        %v3780 = vadd.f32 %v3663, %v3779
        %v3781 = vpop.f32.mrb[0].mxu0
        %v3782 = vpop.f32.mrb[0].mxu0
        %v3783 = vadd.f32 %v3663, %v3782
        %v3784 = vpop.f32.mrb[0].mxu0
        %3785 = vmatprep.mubr.bf16.mxu0 0
        %3786 = vmatmul.mubr.bf16.gmra.mrb[0].mxu0 %v3696
        %v3787 = vpop.f32.mrb[0].mxu0
        %v3788 = vadd.f32 %v3663, %v3787
        %v3789 = vpop.f32.mrb[0].mxu0
        %v3790 = vpop.f32.mrb[0].mxu0
        %v3791 = vadd.f32 %v3663, %v3790
        %v3792 = vpop.f32.mrb[0].mxu0
        %3793 = vmatprep.mubr.bf16.mxu0 0
        %3794 = vmatmul.mubr.bf16.gmra.mrb[0].mxu0 %v3699
        %v3795 = vpop.f32.mrb[0].mxu0
        %v3796 = vadd.f32 %v3663, %v3795
        %v3797 = vpop.f32.mrb[0].mxu0
        %v3798 = vpop.f32.mrb[0].mxu0
        %v3799 = vadd.f32 %v3663, %v3798
        %v3800 = vpop.f32.mrb[0].mxu0
        %3801 = vmatprep.mubr.bf16.mxu0 0
        %3802 = vmatmul.mubr.bf16.gmra.mrb[0].mxu0 %v3702
        %v3803 = vpop.f32.mrb[0].mxu0
        %v3804 = vadd.f32 %v3663, %v3803
        %v3805 = vpop.f32.mrb[0].mxu0
        %v3806 = vpop.f32.mrb[0].mxu0
        %v3807 = vadd.f32 %v3663, %v3806
        %v3808 = vpop.f32.mrb[0].mxu0
        %3809 = vmatprep.mubr.bf16.mxu0 0
        %3810 = vmatmul.mubr.bf16.gmra.mrb[0].mxu0 %v3705
        %v3811 = vpop.f32.mrb[0].mxu0
        %v3812 = vadd.f32 %v3663, %v3811
        %v3813 = vpop.f32.mrb[0].mxu0
        %v3814 = vpop.f32.mrb[0].mxu0
        %v3815 = vadd.f32 %v3663, %v3814
        %v3816 = vpop.f32.mrb[0].mxu0
        %3817 = vmatprep.mubr.bf16.mxu0 0
        %3818 = vmatmul.mubr.bf16.gmra.mrb[0].mxu0 %v3708
        %v3819 = vpop.f32.mrb[0].mxu0
        %v3820 = vadd.f32 %v3663, %v3819
        %v3821 = vpop.f32.mrb[0].mxu0
        %v3822 = vpop.f32.mrb[0].mxu0
        %v3823 = vadd.f32 %v3663, %v3822
        %v3824 = vpop.f32.mrb[0].mxu0
        %3825 = vmatprep.mubr.bf16.mxu0 0
        %3826 = vmatmul.mubr.bf16.gmra.mrb[0].mxu0 %v3711
        %v3827 = vpop.f32.mrb[0].mxu0
        %v3828 = vadd.f32 %v3663, %v3827
        %v3829 = vpop.f32.mrb[0].mxu0
        %v3830 = vpop.f32.mrb[0].mxu0
        %v3831 = vadd.f32 %v3663, %v3830
        %v3832 = vpop.f32.mrb[0].mxu0
        %3833 = vmatprep.mubr.bf16.mxu0 0
        %3834 = vmatmul.mubr.bf16.gmra.mrb[0].mxu0 %v3714
        %v3835 = vpop.f32.mrb[0].mxu0
        %v3836 = vadd.f32 %v3663, %v3835
        %v3837 = vpop.f32.mrb[0].mxu0
        %v3838 = vpop.f32.mrb[0].mxu0
        %v3839 = vadd.f32 %v3663, %v3838
        %v3840 = vpop.f32.mrb[0].mxu0
        %3841 = vmatprep.mubr.bf16.mxu0 0
        %3842 = vmatmul.mubr.bf16.gmra.mrb[0].mxu0 %v3717
        %v3843 = vpop.f32.mrb[0].mxu0
        %v3844 = vadd.f32 %v3663, %v3843
        %v3845 = vpop.f32.mrb[0].mxu0
        %v3846 = vpop.f32.mrb[0].mxu0
        %v3847 = vadd.f32 %v3663, %v3846
        %v3848 = vpop.f32.mrb[0].mxu0
        %3849 = vmatprep.mubr.bf16.mxu0 0
        %3850 = vmatmul.mubr.bf16.gmra.mrb[0].mxu0 %v3720
        %v3851 = vpop.f32.mrb[0].mxu0
        %v3852 = vadd.f32 %v3663, %v3851
        %v3853 = vpop.f32.mrb[0].mxu0
        %v3854 = vpop.f32.mrb[0].mxu0
        %v3855 = vadd.f32 %v3663, %v3854
        %v3856 = vpop.f32.mrb[0].mxu0
        %3857 = vmatprep.mubr.bf16.mxu0 0
        %3858 = vmatmul.mubr.bf16.gmra.mrb[0].mxu0 %v3723
        %v3859 = vpop.f32.mrb[0].mxu0
        %v3860 = vadd.f32 %v3663, %v3859
        %v3861 = vpop.f32.mrb[0].mxu0
        %v3862 = vpop.f32.mrb[0].mxu0
        %v3863 = vadd.f32 %v3663, %v3862
        %v3864 = vpop.f32.mrb[0].mxu0
        %3865 = vmatprep.mubr.bf16.mxu0 0
        %3866 = vmatmul.mubr.bf16.gmra.mrb[0].mxu0 %v3726
        %v3867 = vpop.f32.mrb[0].mxu0
        %v3868 = vadd.f32 %v3663, %v3867
        %v3869 = vpop.f32.mrb[0].mxu0
        %v3870 = vpop.f32.mrb[0].mxu0
        %v3871 = vadd.f32 %v3663, %v3870
        %v3872 = vpop.f32.mrb[0].mxu0
        %3873 = vmatprep.mubr.bf16.mxu0 0
        %3874 = vmatmul.mubr.bf16.gmra.mrb[0].mxu0 %v3729
        %v3875 = vpop.f32.mrb[0].mxu0
        %v3876 = vadd.f32 %v3663, %v3875
        %v3877 = vpop.f32.mrb[0].mxu0
        %v3878 = vpop.f32.mrb[0].mxu0
        %v3879 = vadd.f32 %v3663, %v3878
        %v3880 = vpop.f32.mrb[0].mxu0
        %3881 = vmatprep.mubr.bf16.mxu0 0
        %3882 = vmatmul.mubr.bf16.gmra.mrb[0].mxu0 %v3732
        %v3883 = vpop.f32.mrb[0].mxu0
        %v3884 = vadd.f32 %v3663, %v3883
        %v3885 = vpop.f32.mrb[0].mxu0
        %v3886 = vpop.f32.mrb[0].mxu0
        %v3887 = vadd.f32 %v3663, %v3886
        %v3888 = vpop.f32.mrb[0].mxu0
        %3889 = vmatprep.mubr.bf16.mxu0 0
        %3890 = vmatmul.mubr.bf16.gmra.mrb[0].mxu0 %v3735
        %v3891 = vpop.f32.mrb[0].mxu0
        %v3892 = vadd.f32 %v3663, %v3891
        %v3893 = vpop.f32.mrb[0].mxu0
        %v3894 = vpop.f32.mrb[0].mxu0
        %v3895 = vadd.f32 %v3663, %v3894
        %v3896 = vpop.f32.mrb[0].mxu0
        %3897 = vdwg.mxu0
        %v3898 = vpack.c.bf16 %v571, %v570
        %v3899 = vpack.c.bf16 %v573, %v572
        %v3900 = vpack.c.bf16 %v575, %v574
        %v3901 = vpack.c.bf16 %v577, %v576
        %v3902 = vpack.c.bf16 %v579, %v578
        %v3903 = vpack.c.bf16 %v581, %v580
        %v3904 = vpack.c.bf16 %v583, %v582
        %v3905 = vpack.c.bf16 %v585, %v584
        %v3906 = vpack.c.bf16 %v587, %v586
        %v3907 = vpack.c.bf16 %v589, %v588
        %v3908 = vpack.c.bf16 %v591, %v590
        %v3909 = vpack.c.bf16 %v593, %v592
        %v3910 = vpack.c.bf16 %v595, %v594
        %v3911 = vpack.c.bf16 %v597, %v596
        %v3912 = vpack.c.bf16 %v599, %v598
        %v3913 = vpack.c.bf16 %v601, %v600
        %v3914 = vld [vmem:[#allocation9] sm:$0xf]
        %v3915 = vld [vmem:[#allocation9 + $0x4] sm:$0xf]
        %v3916 = vld [vmem:[#allocation9 + $0x8] sm:$0xf]
        %v3917 = vld [vmem:[#allocation9 + $0xc] sm:$0xf]
        %v3918 = vld [vmem:[#allocation9 + $0x10] sm:$0xf]
        %v3919 = vld [vmem:[#allocation9 + $0x14] sm:$0xf]
        %v3920 = vld [vmem:[#allocation9 + $0x18] sm:$0xf]
        %v3921 = vld [vmem:[#allocation9 + $0x1c] sm:$0xf]
        %v3922 = vld [vmem:[#allocation11] sm:$0x1]
        %v3924 = vlaneseq
        %v3925 = vshrl.u32 %v3924, 7
        %v3926 = vsub.s32 0, %v3925
        %v3927 = vrot.slane %v3922, %v3926
        %v3937 = vunpack.c.l.b16 %v3914
        %v3938 = vunpack.c.l.b16 %v3915
        %v3939 = vunpack.c.l.b16 %v3916
        %v3940 = vunpack.c.l.b16 %v3917
        %v3941 = vunpack.c.l.b16 %v3918
        %v3942 = vunpack.c.l.b16 %v3919
        %v3943 = vunpack.c.l.b16 %v3920
        %v3944 = vunpack.c.l.b16 %v3921
        %v3945 = vpack.c.b16 %v3938, %v3937
        %v3946 = vpack.c.b16 %v3940, %v3939
        %v3947 = vpack.c.b16 %v3942, %v3941
        %v3948 = vpack.c.b16 %v3944, %v3943
        %v3954 = vsel %vm767, %v3898, 0
        %v3957 = vsel %vm767, %v3899, 0
        %v3960 = vsel %vm767, %v3900, 0
        %v3963 = vsel %vm767, %v3901, 0
        %v3966 = vsel %vm767, %v3902, 0
        %v3969 = vsel %vm767, %v3903, 0
        %v3972 = vsel %vm767, %v3904, 0
        %v3975 = vsel %vm767, %v3905, 0
        %v3978 = vsel %vm767, %v3906, 0
        %v3981 = vsel %vm767, %v3907, 0
        %v3984 = vsel %vm767, %v3908, 0
        %v3987 = vsel %vm767, %v3909, 0
        %v3990 = vsel %vm767, %v3910, 0
        %v3993 = vsel %vm767, %v3911, 0
        %v3996 = vsel %vm767, %v3912, 0
        %v3999 = vsel %vm767, %v3913, 0
        %4001 = vmatprep.subr.bf16.mxu0 0
        %4002 = vmatpush1.bf16.msra.mxu0 %v3945
        %4003 = vmatprep.subr.bf16.mxu0 0
        %4004 = vmatpush1.bf16.msra.mxu0 %v3946
        %4005 = vmatprep.subr.bf16.mxu0 0
        %4006 = vmatpush1.bf16.msra.mxu0 %v3947
        %4007 = vmatprep.subr.bf16.mxu0 0
        %4008 = vmatpush1.bf16.msra.mxu0 %v3948
        %4009 = vmatprep.subr.bf16.mxu0 0
        %4010 = vmatpush1.bf16.msra.mxu0 0
        %4011 = vmatprep.subr.bf16.mxu0 0
        %4012 = vmatpush1.bf16.msra.mxu0 0
        %4013 = vmatprep.subr.bf16.mxu0 0
        %4014 = vmatpush1.bf16.msra.mxu0 0
        %4015 = vmatprep.subr.bf16.mxu0 0
        %4016 = vmatpush1.bf16.msra.mxu0 0
        %4017 = vmatprep.subr.bf16.mxu0 0
        %4018 = vmatpush1.bf16.msra.mxu0 0
        %4019 = vmatprep.subr.bf16.mxu0 0
        %4020 = vmatpush1.bf16.msra.mxu0 0
        %4021 = vmatprep.subr.bf16.mxu0 0
        %4022 = vmatpush1.bf16.msra.mxu0 0
        %4023 = vmatprep.subr.bf16.mxu0 0
        %4024 = vmatpush1.bf16.msra.mxu0 0
        %4025 = vmatprep.subr.bf16.mxu0 0
        %4026 = vmatpush1.bf16.msra.mxu0 0
        %4027 = vmatprep.subr.bf16.mxu0 0
        %4028 = vmatpush1.bf16.msra.mxu0 0
        %4029 = vmatprep.subr.bf16.mxu0 0
        %4030 = vmatpush1.bf16.msra.mxu0 0
        %4031 = vmatprep.subr.bf16.mxu0 0
        %4032 = vmatpush1.bf16.msra.mxu0 0
        %4033 = vmatprep.mubr.bf16.mxu0 0
        %4034 = vmatmul.mubr.bf16.gmra.mrb[0].mxu0 %v3954
        %v4035 = vpop.f32.mrb[0].mxu0
        %v4036 = vadd.f32 %v3927, %v4035
        %v4037 = vpop.f32.mrb[0].mxu0
        %v4038 = vpop.f32.mrb[0].mxu0
        %v4039 = vadd.f32 %v3927, %v4038
        %v4040 = vpop.f32.mrb[0].mxu0
        %4041 = vmatprep.mubr.bf16.mxu0 0
        %4042 = vmatmul.mubr.bf16.gmra.mrb[0].mxu0 %v3957
        %v4043 = vpop.f32.mrb[0].mxu0
        %v4044 = vadd.f32 %v3927, %v4043
        %v4045 = vpop.f32.mrb[0].mxu0
        %v4046 = vpop.f32.mrb[0].mxu0
        %v4047 = vadd.f32 %v3927, %v4046
        %v4048 = vpop.f32.mrb[0].mxu0
        %4049 = vmatprep.mubr.bf16.mxu0 0
        %4050 = vmatmul.mubr.bf16.gmra.mrb[0].mxu0 %v3960
        %v4051 = vpop.f32.mrb[0].mxu0
        %v4052 = vadd.f32 %v3927, %v4051
        %v4053 = vpop.f32.mrb[0].mxu0
        %v4054 = vpop.f32.mrb[0].mxu0
        %v4055 = vadd.f32 %v3927, %v4054
        %v4056 = vpop.f32.mrb[0].mxu0
        %4057 = vmatprep.mubr.bf16.mxu0 0
        %4058 = vmatmul.mubr.bf16.gmra.mrb[0].mxu0 %v3963
        %v4059 = vpop.f32.mrb[0].mxu0
        %v4060 = vadd.f32 %v3927, %v4059
        %v4061 = vpop.f32.mrb[0].mxu0
        %v4062 = vpop.f32.mrb[0].mxu0
        %v4063 = vadd.f32 %v3927, %v4062
        %v4064 = vpop.f32.mrb[0].mxu0
        %4065 = vmatprep.mubr.bf16.mxu0 0
        %4066 = vmatmul.mubr.bf16.gmra.mrb[0].mxu0 %v3966
        %v4067 = vpop.f32.mrb[0].mxu0
        %v4068 = vadd.f32 %v3927, %v4067
        %v4069 = vpop.f32.mrb[0].mxu0
        %v4070 = vpop.f32.mrb[0].mxu0
        %v4071 = vadd.f32 %v3927, %v4070
        %v4072 = vpop.f32.mrb[0].mxu0
        %4073 = vmatprep.mubr.bf16.mxu0 0
        %4074 = vmatmul.mubr.bf16.gmra.mrb[0].mxu0 %v3969
        %v4075 = vpop.f32.mrb[0].mxu0
        %v4076 = vadd.f32 %v3927, %v4075
        %v4077 = vpop.f32.mrb[0].mxu0
        %v4078 = vpop.f32.mrb[0].mxu0
        %v4079 = vadd.f32 %v3927, %v4078
        %v4080 = vpop.f32.mrb[0].mxu0
        %4081 = vmatprep.mubr.bf16.mxu0 0
        %4082 = vmatmul.mubr.bf16.gmra.mrb[0].mxu0 %v3972
        %v4083 = vpop.f32.mrb[0].mxu0
        %v4084 = vadd.f32 %v3927, %v4083
        %v4085 = vpop.f32.mrb[0].mxu0
        %v4086 = vpop.f32.mrb[0].mxu0
        %v4087 = vadd.f32 %v3927, %v4086
        %v4088 = vpop.f32.mrb[0].mxu0
        %4089 = vmatprep.mubr.bf16.mxu0 0
        %4090 = vmatmul.mubr.bf16.gmra.mrb[0].mxu0 %v3975
        %v4091 = vpop.f32.mrb[0].mxu0
        %v4092 = vadd.f32 %v3927, %v4091
        %v4093 = vpop.f32.mrb[0].mxu0
        %v4094 = vpop.f32.mrb[0].mxu0
        %v4095 = vadd.f32 %v3927, %v4094
        %v4096 = vpop.f32.mrb[0].mxu0
        %4097 = vmatprep.mubr.bf16.mxu0 0
        %4098 = vmatmul.mubr.bf16.gmra.mrb[0].mxu0 %v3978
        %v4099 = vpop.f32.mrb[0].mxu0
        %v4100 = vadd.f32 %v3927, %v4099
        %v4101 = vpop.f32.mrb[0].mxu0
        %v4102 = vpop.f32.mrb[0].mxu0
        %v4103 = vadd.f32 %v3927, %v4102
        %v4104 = vpop.f32.mrb[0].mxu0
        %4105 = vmatprep.mubr.bf16.mxu0 0
        %4106 = vmatmul.mubr.bf16.gmra.mrb[0].mxu0 %v3981
        %v4107 = vpop.f32.mrb[0].mxu0
        %v4108 = vadd.f32 %v3927, %v4107
        %v4109 = vpop.f32.mrb[0].mxu0
        %v4110 = vpop.f32.mrb[0].mxu0
        %v4111 = vadd.f32 %v3927, %v4110
        %v4112 = vpop.f32.mrb[0].mxu0
        %4113 = vmatprep.mubr.bf16.mxu0 0
        %4114 = vmatmul.mubr.bf16.gmra.mrb[0].mxu0 %v3984
        %v4115 = vpop.f32.mrb[0].mxu0
        %v4116 = vadd.f32 %v3927, %v4115
        %v4117 = vpop.f32.mrb[0].mxu0
        %v4118 = vpop.f32.mrb[0].mxu0
        %v4119 = vadd.f32 %v3927, %v4118
        %v4120 = vpop.f32.mrb[0].mxu0
        %4121 = vmatprep.mubr.bf16.mxu0 0
        %4122 = vmatmul.mubr.bf16.gmra.mrb[0].mxu0 %v3987
        %v4123 = vpop.f32.mrb[0].mxu0
        %v4124 = vadd.f32 %v3927, %v4123
        %v4125 = vpop.f32.mrb[0].mxu0
        %v4126 = vpop.f32.mrb[0].mxu0
        %v4127 = vadd.f32 %v3927, %v4126
        %v4128 = vpop.f32.mrb[0].mxu0
        %4129 = vmatprep.mubr.bf16.mxu0 0
        %4130 = vmatmul.mubr.bf16.gmra.mrb[0].mxu0 %v3990
        %v4131 = vpop.f32.mrb[0].mxu0
        %v4132 = vadd.f32 %v3927, %v4131
        %v4133 = vpop.f32.mrb[0].mxu0
        %v4134 = vpop.f32.mrb[0].mxu0
        %v4135 = vadd.f32 %v3927, %v4134
        %v4136 = vpop.f32.mrb[0].mxu0
        %4137 = vmatprep.mubr.bf16.mxu0 0
        %4138 = vmatmul.mubr.bf16.gmra.mrb[0].mxu0 %v3993
        %v4139 = vpop.f32.mrb[0].mxu0
        %v4140 = vadd.f32 %v3927, %v4139
        %v4141 = vpop.f32.mrb[0].mxu0
        %v4142 = vpop.f32.mrb[0].mxu0
        %v4143 = vadd.f32 %v3927, %v4142
        %v4144 = vpop.f32.mrb[0].mxu0
        %4145 = vmatprep.mubr.bf16.mxu0 0
        %4146 = vmatmul.mubr.bf16.gmra.mrb[0].mxu0 %v3996
        %v4147 = vpop.f32.mrb[0].mxu0
        %v4148 = vadd.f32 %v3927, %v4147
        %v4149 = vpop.f32.mrb[0].mxu0
        %v4150 = vpop.f32.mrb[0].mxu0
        %v4151 = vadd.f32 %v3927, %v4150
        %v4152 = vpop.f32.mrb[0].mxu0
        %4153 = vmatprep.mubr.bf16.mxu0 0
        %4154 = vmatmul.mubr.bf16.gmra.mrb[0].mxu0 %v3999
        %v4155 = vpop.f32.mrb[0].mxu0
        %v4156 = vadd.f32 %v3927, %v4155
        %v4157 = vpop.f32.mrb[0].mxu0
        %v4158 = vpop.f32.mrb[0].mxu0
        %v4159 = vadd.f32 %v3927, %v4158
        %v4160 = vpop.f32.mrb[0].mxu0
        %4161 = vdwg.mxu0
        %v4162 = vadd.f32 %v3772, %v4036
        %v4163 = vadd.f32 %v3775, %v4039
        %v4164 = vadd.f32 %v3780, %v4044
        %v4165 = vadd.f32 %v3783, %v4047
        %v4166 = vadd.f32 %v3788, %v4052
        %v4167 = vadd.f32 %v3791, %v4055
        %v4168 = vadd.f32 %v3796, %v4060
        %v4169 = vadd.f32 %v3799, %v4063
        %v4170 = vadd.f32 %v3804, %v4068
        %v4171 = vadd.f32 %v3807, %v4071
        %v4172 = vadd.f32 %v3812, %v4076
        %v4173 = vadd.f32 %v3815, %v4079
        %v4174 = vadd.f32 %v3820, %v4084
        %v4175 = vadd.f32 %v3823, %v4087
        %v4176 = vadd.f32 %v3828, %v4092
        %v4177 = vadd.f32 %v3831, %v4095
        %v4178 = vadd.f32 %v3836, %v4100
        %v4179 = vadd.f32 %v3839, %v4103
        %v4180 = vadd.f32 %v3844, %v4108
        %v4181 = vadd.f32 %v3847, %v4111
        %v4182 = vadd.f32 %v3852, %v4116
        %v4183 = vadd.f32 %v3855, %v4119
        %v4184 = vadd.f32 %v3860, %v4124
        %v4185 = vadd.f32 %v3863, %v4127
        %v4186 = vadd.f32 %v3868, %v4132
        %v4187 = vadd.f32 %v3871, %v4135
        %v4188 = vadd.f32 %v3876, %v4140
        %v4189 = vadd.f32 %v3879, %v4143
        %v4190 = vadd.f32 %v3884, %v4148
        %v4191 = vadd.f32 %v3887, %v4151
        %v4192 = vadd.f32 %v3892, %v4156
        %v4193 = vadd.f32 %v3895, %v4159
        %4194 = vst [vmem:[%s568] sm:$0xff] %v4162
        %4195 = vst [vmem:[%s568 + $0x8] sm:$0xff] %v4163
        %4196 = vst [vmem:[%s568 + $0x10] sm:$0xff] %v4164
        %4197 = vst [vmem:[%s568 + $0x18] sm:$0xff] %v4165
        %4198 = vst [vmem:[%s568 + $0x20] sm:$0xff] %v4166
        %4199 = vst [vmem:[%s568 + $0x28] sm:$0xff] %v4167
        %4200 = vst [vmem:[%s568 + $0x30] sm:$0xff] %v4168
        %4201 = vst [vmem:[%s568 + $0x38] sm:$0xff] %v4169
        %4202 = vst [vmem:[%s568 + $0x40] sm:$0xff] %v4170
        %4203 = vst [vmem:[%s568 + $0x48] sm:$0xff] %v4171
        %4204 = vst [vmem:[%s568 + $0x50] sm:$0xff] %v4172
        %4205 = vst [vmem:[%s568 + $0x58] sm:$0xff] %v4173
        %4206 = vst [vmem:[%s568 + $0x60] sm:$0xff] %v4174
        %4207 = vst [vmem:[%s568 + $0x68] sm:$0xff] %v4175
        %4208 = vst [vmem:[%s568 + $0x70] sm:$0xff] %v4176
        %4209 = vst [vmem:[%s568 + $0x78] sm:$0xff] %v4177
        %4210 = vst [vmem:[%s568 + $0x80] sm:$0xff] %v4178
        %4211 = vst [vmem:[%s568 + $0x88] sm:$0xff] %v4179
        %4212 = vst [vmem:[%s568 + $0x90] sm:$0xff] %v4180
        %4213 = vst [vmem:[%s568 + $0x98] sm:$0xff] %v4181
        %4214 = vst [vmem:[%s568 + $0xa0] sm:$0xff] %v4182
        %4215 = vst [vmem:[%s568 + $0xa8] sm:$0xff] %v4183
        %4216 = vst [vmem:[%s568 + $0xb0] sm:$0xff] %v4184
        %4217 = vst [vmem:[%s568 + $0xb8] sm:$0xff] %v4185
        %4218 = vst [vmem:[%s568 + $0xc0] sm:$0xff] %v4186
        %4219 = vst [vmem:[%s568 + $0xc8] sm:$0xff] %v4187
        %4220 = vst [vmem:[%s568 + $0xd0] sm:$0xff] %v4188
        %4221 = vst [vmem:[%s568 + $0xd8] sm:$0xff] %v4189
        %4222 = vst [vmem:[%s568 + $0xe0] sm:$0xff] %v4190
        %4223 = vst [vmem:[%s568 + $0xe8] sm:$0xff] %v4191
        %4224 = vst [vmem:[%s568 + $0xf0] sm:$0xff] %v4192
        %4225 = vst [vmem:[%s568 + $0xf8] sm:$0xff] %v4193
        %s4226 = sand.u32 %s362, 1
        %s4227 = scalar_lea.sflag [#allocation5], %s4226
        %s4228 = sand.u32 %s362, 1
        %s4229 = smul.addr %s4228, 256
        %s4230 = scalar_lea.vmem [#allocation12], %s4229
        // Predicated region
        $region101: #{bottleneck_forward.1} parent=79 // pred_check
          %p4231 = pneg %p372
        $region102: #{bottleneck_forward.1} parent=79 // pred_check_branch
          %4233 = sbr.rel (%p4231) target = $region104
        $region103: #{bottleneck_forward.1} parent=79 // pred_region
          %s4235 = ssub.s32 4096, 4096
          %4236 = vsyncadd %s4227, %s4235
          %s4237 = smul.addr %s34, 32
          %s4238 = smul.addr %s4237, 128
          %s4239 = scalar_lea.hbm %s15, %s4238
          %s4240 = sshll.u32 %s4230, 4
          %s4241 = int_to_ptr.vmem [resolvable:$true] %s4240
          %4246 = dma.vmem_to_hbm [thread:$0]  %s4241, 4096, %s4239, %s4227, 128, 128, 8
        $region104: #{bottleneck_forward.1} parent=79 // pred_fallthru
          _
      $region80: #{bottleneck_forward.1} parent=5 // pred_fallthru
        _
      %p4247 = scmp.le.s32.totalorder 2, %s29
      // Predicated region
      $region105: #{bottleneck_forward.1} parent=5 // pred_check
        %p4248 = pneg %p4247
      $region106: #{bottleneck_forward.1} parent=5 // pred_check_branch
        %4250 = sbr.rel (%p4248) target = $region108
      $region107: #{bottleneck_forward.1} parent=5 // pred_region
        %s4251 = ssub.s32 %s29, 2
        // Predicated region
        $region109: #{bottleneck_forward.1} parent=107 // pred_check
          %p4252 = pneg %p378
        $region110: #{bottleneck_forward.1} parent=107 // pred_check_branch
          %4254 = sbr.rel (%p4252) target = $region112
        $region111: #{bottleneck_forward.1} parent=107 // pred_region
          %s4255 = sand.u32 %s363, 1
          %s4256 = scalar_lea.sflag [#allocation5], %s4255
          %s4257 = sand.u32 %s363, 1
          %s4258 = smul.addr %s4257, 256
          %s4259 = scalar_lea.vmem [#allocation12], %s4258
          %4260 = dma.done %s4256, 4096
        $region112: #{bottleneck_forward.1} parent=107 // pred_fallthru
          _
      $region108: #{bottleneck_forward.1} parent=5 // pred_fallthru
        _
    $region6: #{bottleneck_forward.1} parent=1 // loop_footer
      %s33 = sadd.s32 1, %s29
    $region7: #{bottleneck_forward.1} parent=1 // loop_footer_branch
      %28 = sbr.rel target = $region3
    $region8: #{bottleneck_forward.1} parent=1 // loop_exit
      _
    %4261 = vsyncpa [#allocation4], 1
    %s4262 = scalar_lea.sflag [#allocation4], 1
    %4263 = vsyncpa %s4262, 1
    %4264 = vsyncpa [#allocation7], 1
    %4265 = vsyncpa [#allocation10], 1
    %4266 = vsyncpa [#allocation5], 1
    %s4267 = scalar_lea.sflag [#allocation5], 1
    %4268 = vsyncpa %s4267, 1

</llo_original>
